<compile_context>
chip_gen: v6e
topology: v6e:2x2x1
jax: 0.10.0
libtpu: 0.0.40
codegen_flags: <defaults>
</compile_context>

<pallas_src>
import functools
import math

import jax
import jax.numpy as jnp
from jax.experimental import pallas as pl
from jax.experimental.pallas import tpu as pltpu

_EPS = 1e-7        # ADSREncoderV3.eps
_BN_EPS = 1e-5     # nn.BatchNorm1d default eps
_HALO = 16         # one-sided receptive field: conv0(1) + dilations 1+2+4+8


def _round_up(n, m):
    return ((n + m - 1) // m) * m


def _erf_f32(x):
    """Eigen/XLA float32 erf rational approximation (VPU + EUP reciprocal)."""
    alpha = (-2.72614225801306e-10, 2.77068142495902e-08, -2.10102402082508e-06,
             -5.69250639462346e-05, -7.34990630326855e-04, -2.95459980854025e-03,
             -1.60960333262415e-02)
    beta = (-1.45660718464996e-05, -2.13374055278905e-04, -1.68282697438203e-03,
            -7.37332916720468e-03, -1.42647390514189e-02)
    x = jnp.clip(x, -4.0, 4.0)
    x2 = x * x
    p = jnp.full_like(x, alpha[0])
    for c in alpha[1:]:
        p = p * x2 + c
    q = jnp.full_like(x, beta[0])
    for c in beta[1:]:
        q = q * x2 + c
    # q is bounded away from zero on [-4, 4]; EUP approx reciprocal is plenty.
    return (x * p) * pl.reciprocal(q, approx=True)


def _gelu_exact(x):
    return 0.5 * x * (1.0 + _erf_f32(x * (1.0 / math.sqrt(2.0))))


def _silu(x):
    # exp and the approximate reciprocal both land on the EUP slot.
    return x * pl.reciprocal(1.0 + jnp.exp(-x), approx=True)


def _backbone_kernel(x_ref, c0w_ref, c0b_ref,
                     wk1, sh1, wk2, sh2, wk3, sh3, wk4, sh4,
                     out_ref, *, t_frames, tile, dils):
    t = pl.program_id(1)
    wwin = tile + 2 * _HALO

    # Window (with receptive-field halo) of the resident log-RMS row.
    start = pl.multiple_of(t * tile, 128)
    xw = x_ref[0, :, pl.ds(start, wwin)]                       # (1, wwin) f32

    cw = c0w_ref[...]                                          # (32, 3)
    cb = c0b_ref[...]                                          # (32, 1)
    layer_ws = ((wk1[...], sh1[...], dils[0]),
                (wk2[...], sh2[...], dils[1]),
                (wk3[...], sh3[...], dils[2]),
                (wk4[...], sh4[...], dils[3]))
    n_layers = len(layer_ws)

    def pipeline(apply_mask):
        if apply_mask:
            # In-sequence mask: reproduces each conv layer's zero padding at
            # the true sequence boundaries (left of frame 0, right of Tf-1).
            g = (jax.lax.broadcasted_iota(jnp.int32, (1, wwin), 1)
                 + (t * tile - _HALO))
            seq_mask = ((g >= 0) & (g < t_frames)).astype(jnp.float32)

        # ---- Conv1d(1, 32, k=3, pad=1) + bias, exact GELU (shrink halo by 1)
        wcur = wwin - 2
        h = (cw[:, 0:1] * xw[:, 0:wcur]
             + cw[:, 1:2] * xw[:, 1:1 + wcur]
             + cw[:, 2:3] * xw[:, 2:2 + wcur]
             + cb)                                             # (32, wcur)
        off = 1
        h = _gelu_exact(h)
        if apply_mask:
            h = h * seq_mask[:, off:off + wcur]

        # ---- 4x DSConv1d folded onto the MXU: z = sum_k W_k @ h[:, k*d:...] -
        for li, (wk, sh, d) in enumerate(layer_ws):
            w_in = h.shape[1]
            w_out = w_in - 2 * d                               # shrink halo by d
            hb = h.astype(jnp.bfloat16)                        # dot RHS in bf16
            z = (jnp.dot(wk[0], hb[:, 0:w_out],
                         preferred_element_type=jnp.float32)
                 + jnp.dot(wk[1], hb[:, d:d + w_out],
                           preferred_element_type=jnp.float32)
                 + jnp.dot(wk[2], hb[:, 2 * d:2 * d + w_out],
                           preferred_element_type=jnp.float32))
            z = z + sh                                         # BN shift only
            h = _silu(z)
            off += d
            if apply_mask and li + 1 < n_layers:
                h = h * seq_mask[:, off:off + w_out]
        return h                                               # (64, tile)

    # Only the first tile and tiles whose halo crosses t_frames need masking.
    is_boundary = (t == 0) | ((t + 1) * tile + _HALO > t_frames)

    @pl.when(is_boundary)
    def _():
        out_ref[0] = pipeline(True)

    @pl.when(jnp.logical_not(is_boundary))
    def _():
        out_ref[0] = pipeline(False)


def adsr_encoder_v3(wav, params, hop=512, tile_t=2048):
    """wav: (B, 1, T_samples) float32 -> adsr_feat (B, 64, T_frames) float32."""
    assert tile_t % 128 == 0
    B, C, L = wav.shape
    assert C == 1
    Tf = math.ceil(L / hop)

    # ---- log-RMS envelope hoisted to plain XLA (single pass over the wav) ----
    wavp = jnp.pad(wav, ((0, 0), (0, 0), (0, Tf * hop - L)))
    frames = wavp.reshape(B, Tf, hop)
    msq = jnp.mean(frames * frames, axis=-1)                   # (B, Tf)
    x = jnp.log(jnp.sqrt(msq + _EPS) + _EPS)                   # (B, Tf)

    # ---- lane-dense, T-tiled layout for the backbone kernel ------------------
    tile = min(tile_t, _round_up(Tf, 128))
    n_t = -(-Tf // tile)
    xlen = n_t * tile + 2 * _HALO
    xp = jnp.pad(x, ((0, 0), (_HALO, xlen - _HALO - Tf)))[:, None, :]  # (B,1,xlen)

    c0w = params['c0w']                                        # (32, 3)
    c0b = params['c0b'].reshape(32, 1)                         # (32, 1)

    flat_inputs = [xp, c0w, c0b]
    in_specs = [
        pl.BlockSpec((1, 1, xlen), lambda b, t: (b, 0, 0)),    # resident per batch
        pl.BlockSpec((32, 3), lambda b, t: (0, 0)),
        pl.BlockSpec((32, 1), lambda b, t: (0, 0)),
    ]
    dils = []
    for lyr in params['layers']:
        ci = lyr['dw'].shape[0]
        co = lyr['pw'].shape[0]
        # Fold BN scale + depthwise taps into three per-tap pointwise matrices:
        # W_k[o, c] = scale[o] * pw[o, c] * dw[c, k]   -> (3, co, ci), bf16.
        wk = ((lyr['scale'][:, None] * lyr['pw'])[None, :, :]
              * jnp.transpose(lyr['dw'])[:, None, :]).astype(jnp.bfloat16)
        flat_inputs += [wk, lyr['shift'].reshape(co, 1)]
        in_specs += [pl.BlockSpec((3, co, ci), lambda b, t: (0, 0, 0)),
                     pl.BlockSpec((co, 1), lambda b, t: (0, 0))]
        dils.append(lyr['d'])
    assert len(dils) == 4 and _HALO == 1 + sum(dils)

    kernel = functools.partial(_backbone_kernel, t_frames=Tf, tile=tile,
                               dils=tuple(dils))
    # Output is (B, 64, Tf) directly: the ragged last tile is handled by
    # Pallas' out-of-bounds write masking -> no post-kernel slice copy.
    out = pl.pallas_call(
        kernel,
        out_shape=jax.ShapeDtypeStruct((B, 64, Tf), jnp.float32),
        grid_spec=pltpu.PrefetchScalarGridSpec(
            num_scalar_prefetch=0,
            grid=(B, n_t),
            in_specs=in_specs,
            out_specs=pl.BlockSpec((1, 64, tile), lambda b, t: (b, 0, t)),
        ),
        compiler_params=pltpu.CompilerParams(
            dimension_semantics=("parallel", "parallel")),
    )(*flat_inputs)
    return out


# ------------------------- parameter init (deterministic) --------------------
def init_params(key):
    ks = jax.random.split(key, 20)

    def rn(k, shape, scale=0.3):
        return scale * jax.random.normal(k, shape, jnp.float32)

    p = {'c0w': rn(ks[0], (32, 3)), 'c0b': rn(ks[1], (32,))}
    cfg = [(32, 64, 1), (64, 64, 2), (64, 64, 4), (64, 64, 8)]
    p['layers'] = []
    i = 2
    for ci, co, d in cfg:
        dw = rn(ks[i], (ci, 3)); i += 1
        pw = rn(ks[i], (co, ci), scale=0.2); i += 1
        gamma = 1.0 + 0.1 * jax.random.normal(ks[i], (co,), jnp.float32); i += 1
        beta = 0.1 * jax.random.normal(ks[i], (co,), jnp.float32); i += 1
        mean = 0.1 * jax.random.normal(jax.random.fold_in(ks[i - 1], 7), (co,),
                                       jnp.float32)
        var = 1.0 + 0.1 * jnp.abs(
            jax.random.normal(jax.random.fold_in(ks[i - 1], 9), (co,), jnp.float32))
        scale = gamma / jnp.sqrt(var + _BN_EPS)
        shift = beta - mean * scale
        p['layers'].append(dict(dw=dw, pw=pw, scale=scale, shift=shift, d=d))
    return p


# ------------------------- pure-JAX reference ---------------------------------
def reference_forward(wav, params, hop):
    from jax.scipy.special import erf
    B, _, L = wav.shape
    Tf = math.ceil(L / hop)
    wavp = jnp.pad(wav, ((0, 0), (0, 0), (0, Tf * hop - L)))
    fr = wavp.reshape(B, Tf, hop)
    rms = jnp.sqrt(jnp.mean(fr * fr, axis=-1) + _EPS)
    x = jnp.log(rms + _EPS)[:, None, :]                          # (B,1,Tf)

    w0, b0 = params['c0w'], params['c0b']
    xpad = jnp.pad(x, ((0, 0), (0, 0), (1, 1)))
    h = (w0[None, :, 0:1] * xpad[:, :, 0:Tf]
         + w0[None, :, 1:2] * xpad[:, :, 1:Tf + 1]
         + w0[None, :, 2:3] * xpad[:, :, 2:Tf + 2]
         + b0[None, :, None])
    h = 0.5 * h * (1.0 + erf(h / math.sqrt(2.0)))

    for lyr in params['layers']:
        d, dw, pw = lyr['d'], lyr['dw'], lyr['pw']
        hp = jnp.pad(h, ((0, 0), (0, 0), (d, d)))
        y = (dw[None, :, 0:1] * hp[:, :, 0:Tf]
             + dw[None, :, 1:2] * hp[:, :, d:d + Tf]
             + dw[None, :, 2:3] * hp[:, :, 2 * d:2 * d + Tf])
        z = jnp.einsum('oc,bct->bot', pw, y,
                       precision=jax.lax.Precision.HIGHEST)
        z = z * lyr['scale'][None, :, None] + lyr['shift'][None, :, None]
        h = z * (1.0 / (1.0 + jnp.exp(-z)))
    return h


if __name__ == "__main__":
    key = jax.random.PRNGKey(0)
    k_wav, k_par, k_wav2 = jax.random.split(key, 3)

    hop = 512
    params = init_params(k_par)

    # Tolerance covers the documented precision divergences: single-pass bf16
    # MXU matmuls (vs. reference HIGHEST) and EUP approximate reciprocals.
    TOL = 2e-2

    # Small test: B=2, 4000 samples -> 8 frames (single lane-dense 128-frame tile).
    B, T_samples = 2, 4000
    wav = jax.random.uniform(k_wav, (B, 1, T_samples), jnp.float32, -1.0, 1.0)
    out = jax.block_until_ready(adsr_encoder_v3(wav, params, hop=hop))
    ref = reference_forward(wav, params, hop)
    assert out.shape == (B, 64, math.ceil(T_samples / hop))
    err = float(jnp.max(jnp.abs(out - ref)))
    assert err < TOL, f"mismatch vs reference: {err}"

    # Multi-tile test: 300 frames with tile_t=128 -> 3 T-tiles; exercises the
    # receptive-field halo across tile seams, the unmasked interior-tile path
    # (t=1), the ragged last hop, and the masked right-edge boundary tile with
    # Pallas' OOB write masking on the ragged output block.
    wav2 = jax.random.uniform(k_wav2, (1, 1, 300 * hop - 57), jnp.float32, -1.0, 1.0)
    out2 = jax.block_until_ready(adsr_encoder_v3(wav2, params, hop=hop, tile_t=128))
    ref2 = reference_forward(wav2, params, hop)
    assert out2.shape == ref2.shape
    err2 = float(jnp.max(jnp.abs(out2 - ref2)))
    assert err2 < TOL, f"multi-tile mismatch vs reference: {err2}"

    print("KERNEL_OK")
</pallas_src>

<mosaic_0001>
module attributes {stable_mosaic.version = 11 : i64} {
  func.func @_backbone_kernel(%arg0: i32, %arg1: i32, %arg2: memref<1x1x160xf32, #tpu.memory_space<vmem>>, %arg3: memref<32x3xf32, #tpu.memory_space<vmem>>, %arg4: memref<32x1xf32, #tpu.memory_space<vmem>>, %arg5: memref<3x64x32xbf16, #tpu.memory_space<vmem>>, %arg6: memref<64x1xf32, #tpu.memory_space<vmem>>, %arg7: memref<3x64x64xbf16, #tpu.memory_space<vmem>>, %arg8: memref<64x1xf32, #tpu.memory_space<vmem>>, %arg9: memref<3x64x64xbf16, #tpu.memory_space<vmem>>, %arg10: memref<64x1xf32, #tpu.memory_space<vmem>>, %arg11: memref<3x64x64xbf16, #tpu.memory_space<vmem>>, %arg12: memref<64x1xf32, #tpu.memory_space<vmem>>, %arg13: memref<1x64x128xf32, #tpu.memory_space<vmem>>) attributes {dimension_semantics = [#tpu.dimension_semantics<parallel>, #tpu.dimension_semantics<parallel>], iteration_bounds = array<i64: 2, 1>, scalar_prefetch = 0 : i64, scratch_operands = 0 : i64, tpu.core_type = #tpu.core_type<tc>, window_params = [{transform_indices = @transform_0, window_bounds = array<i64: 1, 1, 160>}, {pipeline_mode = #tpu.pipeline_mode<synchronous>, transform_indices = @transform_1, window_bounds = array<i64: 32, 3>}, {pipeline_mode = #tpu.pipeline_mode<synchronous>, transform_indices = @transform_2, window_bounds = array<i64: 32, 1>}, {pipeline_mode = #tpu.pipeline_mode<synchronous>, transform_indices = @transform_3, window_bounds = array<i64: 3, 64, 32>}, {pipeline_mode = #tpu.pipeline_mode<synchronous>, transform_indices = @transform_4, window_bounds = array<i64: 64, 1>}, {pipeline_mode = #tpu.pipeline_mode<synchronous>, transform_indices = @transform_5, window_bounds = array<i64: 3, 64, 64>}, {pipeline_mode = #tpu.pipeline_mode<synchronous>, transform_indices = @transform_6, window_bounds = array<i64: 64, 1>}, {pipeline_mode = #tpu.pipeline_mode<synchronous>, transform_indices = @transform_7, window_bounds = array<i64: 3, 64, 64>}, {pipeline_mode = #tpu.pipeline_mode<synchronous>, transform_indices = @transform_8, window_bounds = array<i64: 64, 1>}, {pipeline_mode = #tpu.pipeline_mode<synchronous>, transform_indices = @transform_9, window_bounds = array<i64: 3, 64, 64>}, {pipeline_mode = #tpu.pipeline_mode<synchronous>, transform_indices = @transform_10, window_bounds = array<i64: 64, 1>}, {transform_indices = @transform_11, window_bounds = array<i64: 1, 64, 128>}]} {
    %c128_i32 = arith.constant 128 : i32
    %0 = arith.muli %arg1, %c128_i32 : i32
    %1 = tpu.assume_multiple %0, 128 : i32
    %c0 = arith.constant 0 : index
    %c0_0 = arith.constant 0 : index
    %2 = arith.index_cast %1 : i32 to index
    %3 = vector.load %arg2[%c0, %c0_0, %2] : memref<1x1x160xf32, #tpu.memory_space<vmem>>, vector<1x1x160xf32>
    %4 = vector.shape_cast %3 : vector<1x1x160xf32> to vector<1x160xf32>
    %c0_1 = arith.constant 0 : index
    %c0_2 = arith.constant 0 : index
    %5 = vector.load %arg3[%c0_1, %c0_2] : memref<32x3xf32, #tpu.memory_space<vmem>>, vector<32x3xf32>
    %c0_3 = arith.constant 0 : index
    %c0_4 = arith.constant 0 : index
    %6 = vector.load %arg4[%c0_3, %c0_4] : memref<32x1xf32, #tpu.memory_space<vmem>>, vector<32x1xf32>
    %c0_5 = arith.constant 0 : index
    %c0_6 = arith.constant 0 : index
    %c0_7 = arith.constant 0 : index
    %7 = vector.load %arg5[%c0_5, %c0_6, %c0_7] : memref<3x64x32xbf16, #tpu.memory_space<vmem>>, vector<3x64x32xbf16>
    %c0_8 = arith.constant 0 : index
    %c0_9 = arith.constant 0 : index
    %8 = vector.load %arg6[%c0_8, %c0_9] : memref<64x1xf32, #tpu.memory_space<vmem>>, vector<64x1xf32>
    %c0_10 = arith.constant 0 : index
    %c0_11 = arith.constant 0 : index
    %c0_12 = arith.constant 0 : index
    %9 = vector.load %arg7[%c0_10, %c0_11, %c0_12] : memref<3x64x64xbf16, #tpu.memory_space<vmem>>, vector<3x64x64xbf16>
    %c0_13 = arith.constant 0 : index
    %c0_14 = arith.constant 0 : index
    %10 = vector.load %arg8[%c0_13, %c0_14] : memref<64x1xf32, #tpu.memory_space<vmem>>, vector<64x1xf32>
    %c0_15 = arith.constant 0 : index
    %c0_16 = arith.constant 0 : index
    %c0_17 = arith.constant 0 : index
    %11 = vector.load %arg9[%c0_15, %c0_16, %c0_17] : memref<3x64x64xbf16, #tpu.memory_space<vmem>>, vector<3x64x64xbf16>
    %c0_18 = arith.constant 0 : index
    %c0_19 = arith.constant 0 : index
    %12 = vector.load %arg10[%c0_18, %c0_19] : memref<64x1xf32, #tpu.memory_space<vmem>>, vector<64x1xf32>
    %c0_20 = arith.constant 0 : index
    %c0_21 = arith.constant 0 : index
    %c0_22 = arith.constant 0 : index
    %13 = vector.load %arg11[%c0_20, %c0_21, %c0_22] : memref<3x64x64xbf16, #tpu.memory_space<vmem>>, vector<3x64x64xbf16>
    %c0_23 = arith.constant 0 : index
    %c0_24 = arith.constant 0 : index
    %14 = vector.load %arg12[%c0_23, %c0_24] : memref<64x1xf32, #tpu.memory_space<vmem>>, vector<64x1xf32>
    %c0_i32 = arith.constant 0 : i32
    %15 = arith.cmpi eq, %arg1, %c0_i32 : i32
    %c1_i32 = arith.constant 1 : i32
    %16 = arith.addi %arg1, %c1_i32 : i32
    %c128_i32_25 = arith.constant 128 : i32
    %17 = arith.muli %16, %c128_i32_25 : i32
    %c16_i32 = arith.constant 16 : i32
    %18 = arith.addi %17, %c16_i32 : i32
    %c8_i32 = arith.constant 8 : i32
    %19 = arith.cmpi sgt, %18, %c8_i32 : i32
    %20 = arith.ori %15, %19 : i1
    %21 = arith.extui %20 : i1 to i32
    %c0_i32_26 = arith.constant 0 : i32
    %22 = arith.cmpi ne, %21, %c0_i32_26 : i32
    scf.if %22 {
      %26 = tpu.iota {dimensions = array<i32: 1>} : vector<1x160xi32>
      %c128_i32_28 = arith.constant 128 : i32
      %27 = arith.muli %arg1, %c128_i32_28 : i32
      %c16_i32_29 = arith.constant 16 : i32
      %28 = arith.subi %27, %c16_i32_29 : i32
      %29 = vector.broadcast %28 : i32 to vector<1x160xi32>
      %30 = arith.addi %26, %29 : vector<1x160xi32>
      %c0_i32_30 = arith.constant 0 : i32
      %31 = vector.broadcast %c0_i32_30 : i32 to vector<1x160xi32>
      %32 = arith.cmpi sge, %30, %31 : vector<1x160xi32>
      %c8_i32_31 = arith.constant 8 : i32
      %33 = vector.broadcast %c8_i32_31 : i32 to vector<1x160xi32>
      %34 = arith.cmpi slt, %30, %33 : vector<1x160xi32>
      %35 = arith.andi %32, %34 : vector<1x160xi1>
      %36 = arith.extui %35 : vector<1x160xi1> to vector<1x160xi32>
      %37 = arith.sitofp %36 : vector<1x160xi32> to vector<1x160xf32>
      %38 = vector.extract_strided_slice %5 {offsets = [0, 0], sizes = [32, 1], strides = [1, 1]} : vector<32x3xf32> to vector<32x1xf32>
      %39 = vector.extract_strided_slice %4 {offsets = [0, 0], sizes = [1, 158], strides = [1, 1]} : vector<1x160xf32> to vector<1x158xf32>
      %40 = vector.broadcast %38 : vector<32x1xf32> to vector<32x158xf32>
      %41 = vector.broadcast %39 : vector<1x158xf32> to vector<32x158xf32>
      %42 = arith.mulf %40, %41 : vector<32x158xf32>
      %43 = vector.extract_strided_slice %5 {offsets = [0, 1], sizes = [32, 1], strides = [1, 1]} : vector<32x3xf32> to vector<32x1xf32>
      %44 = vector.extract_strided_slice %4 {offsets = [0, 1], sizes = [1, 158], strides = [1, 1]} : vector<1x160xf32> to vector<1x158xf32>
      %45 = vector.broadcast %43 : vector<32x1xf32> to vector<32x158xf32>
      %46 = vector.broadcast %44 : vector<1x158xf32> to vector<32x158xf32>
      %47 = arith.mulf %45, %46 : vector<32x158xf32>
      %48 = arith.addf %42, %47 : vector<32x158xf32>
      %49 = vector.extract_strided_slice %5 {offsets = [0, 2], sizes = [32, 1], strides = [1, 1]} : vector<32x3xf32> to vector<32x1xf32>
      %50 = vector.extract_strided_slice %4 {offsets = [0, 2], sizes = [1, 158], strides = [1, 1]} : vector<1x160xf32> to vector<1x158xf32>
      %51 = vector.broadcast %49 : vector<32x1xf32> to vector<32x158xf32>
      %52 = vector.broadcast %50 : vector<1x158xf32> to vector<32x158xf32>
      %53 = arith.mulf %51, %52 : vector<32x158xf32>
      %54 = arith.addf %48, %53 : vector<32x158xf32>
      %55 = vector.broadcast %6 : vector<32x1xf32> to vector<32x158xf32>
      %56 = arith.addf %54, %55 : vector<32x158xf32>
      %cst = arith.constant 5.000000e-01 : f32
      %57 = vector.broadcast %cst : f32 to vector<32x158xf32>
      %58 = arith.mulf %57, %56 : vector<32x158xf32>
      %cst_32 = arith.constant 0.707106769 : f32
      %59 = vector.broadcast %cst_32 : f32 to vector<32x158xf32>
      %60 = arith.mulf %56, %59 : vector<32x158xf32>
      %cst_33 = arith.constant -4.000000e+00 : f32
      %cst_34 = arith.constant 4.000000e+00 : f32
      %61 = vector.broadcast %cst_33 : f32 to vector<32x158xf32>
      %62 = arith.maximumf %61, %60 : vector<32x158xf32>
      %63 = vector.broadcast %cst_34 : f32 to vector<32x158xf32>
      %64 = arith.minimumf %63, %62 : vector<32x158xf32>
      %65 = arith.mulf %64, %64 : vector<32x158xf32>
      %cst_35 = arith.constant -2.72614237E-10 : f32
      %66 = vector.broadcast %cst_35 : f32 to vector<32x158xf32>
      %67 = arith.mulf %66, %65 : vector<32x158xf32>
      %cst_36 = arith.constant 2.77068146E-8 : f32
      %68 = vector.broadcast %cst_36 : f32 to vector<32x158xf32>
      %69 = arith.addf %67, %68 : vector<32x158xf32>
      %70 = arith.mulf %69, %65 : vector<32x158xf32>
      %cst_37 = arith.constant -2.10102394E-6 : f32
      %71 = vector.broadcast %cst_37 : f32 to vector<32x158xf32>
      %72 = arith.addf %70, %71 : vector<32x158xf32>
      %73 = arith.mulf %72, %65 : vector<32x158xf32>
      %cst_38 = arith.constant -5.69250624E-5 : f32
      %74 = vector.broadcast %cst_38 : f32 to vector<32x158xf32>
      %75 = arith.addf %73, %74 : vector<32x158xf32>
      %76 = arith.mulf %75, %65 : vector<32x158xf32>
      %cst_39 = arith.constant -7.34990637E-4 : f32
      %77 = vector.broadcast %cst_39 : f32 to vector<32x158xf32>
      %78 = arith.addf %76, %77 : vector<32x158xf32>
      %79 = arith.mulf %78, %65 : vector<32x158xf32>
      %cst_40 = arith.constant -2.954600e-03 : f32
      %80 = vector.broadcast %cst_40 : f32 to vector<32x158xf32>
      %81 = arith.addf %79, %80 : vector<32x158xf32>
      %82 = arith.mulf %81, %65 : vector<32x158xf32>
      %cst_41 = arith.constant -0.0160960332 : f32
      %83 = vector.broadcast %cst_41 : f32 to vector<32x158xf32>
      %84 = arith.addf %82, %83 : vector<32x158xf32>
      %cst_42 = arith.constant -1.45660715E-5 : f32
      %85 = vector.broadcast %cst_42 : f32 to vector<32x158xf32>
      %86 = arith.mulf %85, %65 : vector<32x158xf32>
      %cst_43 = arith.constant -2.13374049E-4 : f32
      %87 = vector.broadcast %cst_43 : f32 to vector<32x158xf32>
      %88 = arith.addf %86, %87 : vector<32x158xf32>
      %89 = arith.mulf %88, %65 : vector<32x158xf32>
      %cst_44 = arith.constant -0.00168282702 : f32
      %90 = vector.broadcast %cst_44 : f32 to vector<32x158xf32>
      %91 = arith.addf %89, %90 : vector<32x158xf32>
      %92 = arith.mulf %91, %65 : vector<32x158xf32>
      %cst_45 = arith.constant -0.00737332925 : f32
      %93 = vector.broadcast %cst_45 : f32 to vector<32x158xf32>
      %94 = arith.addf %92, %93 : vector<32x158xf32>
      %95 = arith.mulf %94, %65 : vector<32x158xf32>
      %cst_46 = arith.constant -0.0142647391 : f32
      %96 = vector.broadcast %cst_46 : f32 to vector<32x158xf32>
      %97 = arith.addf %95, %96 : vector<32x158xf32>
      %98 = arith.mulf %64, %84 : vector<32x158xf32>
      %99 = tpu.reciprocal %97 {approx = true} : vector<32x158xf32> -> vector<32x158xf32>
      %100 = arith.mulf %98, %99 : vector<32x158xf32>
      %cst_47 = arith.constant 1.000000e+00 : f32
      %101 = vector.broadcast %cst_47 : f32 to vector<32x158xf32>
      %102 = arith.addf %101, %100 : vector<32x158xf32>
      %103 = arith.mulf %58, %102 : vector<32x158xf32>
      %104 = vector.extract_strided_slice %37 {offsets = [0, 1], sizes = [1, 158], strides = [1, 1]} : vector<1x160xf32> to vector<1x158xf32>
      %105 = vector.broadcast %104 : vector<1x158xf32> to vector<32x158xf32>
      %106 = arith.mulf %103, %105 : vector<32x158xf32>
      %107 = arith.truncf %106 : vector<32x158xf32> to vector<32x158xbf16>
      %108 = vector.extract_strided_slice %7 {offsets = [0, 0, 0], sizes = [1, 64, 32], strides = [1, 1, 1]} : vector<3x64x32xbf16> to vector<1x64x32xbf16>
      %109 = vector.shape_cast %108 : vector<1x64x32xbf16> to vector<64x32xbf16>
      %110 = vector.extract_strided_slice %107 {offsets = [0, 0], sizes = [32, 156], strides = [1, 1]} : vector<32x158xbf16> to vector<32x156xbf16>
      %cst_48 = arith.constant dense<0.000000e+00> : vector<64x156xf32>
      %111 = tpu.matmul %109, %110, %cst_48 {dimension_numbers = #tpu.dot_dimension_numbers<[1], [0], [0], [1], [0, 0, 1, 1], [], []>} : vector<64x32xbf16>, vector<32x156xbf16>, vector<64x156xf32> -> vector<64x156xf32>
      %112 = vector.extract_strided_slice %7 {offsets = [1, 0, 0], sizes = [1, 64, 32], strides = [1, 1, 1]} : vector<3x64x32xbf16> to vector<1x64x32xbf16>
      %113 = vector.shape_cast %112 : vector<1x64x32xbf16> to vector<64x32xbf16>
      %114 = vector.extract_strided_slice %107 {offsets = [0, 1], sizes = [32, 156], strides = [1, 1]} : vector<32x158xbf16> to vector<32x156xbf16>
      %cst_49 = arith.constant dense<0.000000e+00> : vector<64x156xf32>
      %115 = tpu.matmul %113, %114, %cst_49 {dimension_numbers = #tpu.dot_dimension_numbers<[1], [0], [0], [1], [0, 0, 1, 1], [], []>} : vector<64x32xbf16>, vector<32x156xbf16>, vector<64x156xf32> -> vector<64x156xf32>
      %116 = arith.addf %111, %115 : vector<64x156xf32>
      %117 = vector.extract_strided_slice %7 {offsets = [2, 0, 0], sizes = [1, 64, 32], strides = [1, 1, 1]} : vector<3x64x32xbf16> to vector<1x64x32xbf16>
      %118 = vector.shape_cast %117 : vector<1x64x32xbf16> to vector<64x32xbf16>
      %119 = vector.extract_strided_slice %107 {offsets = [0, 2], sizes = [32, 156], strides = [1, 1]} : vector<32x158xbf16> to vector<32x156xbf16>
      %cst_50 = arith.constant dense<0.000000e+00> : vector<64x156xf32>
      %120 = tpu.matmul %118, %119, %cst_50 {dimension_numbers = #tpu.dot_dimension_numbers<[1], [0], [0], [1], [0, 0, 1, 1], [], []>} : vector<64x32xbf16>, vector<32x156xbf16>, vector<64x156xf32> -> vector<64x156xf32>
      %121 = arith.addf %116, %120 : vector<64x156xf32>
      %122 = vector.broadcast %8 : vector<64x1xf32> to vector<64x156xf32>
      %123 = arith.addf %121, %122 : vector<64x156xf32>
      %cst_51 = arith.constant 0.000000e+00 : f32
      %124 = vector.broadcast %cst_51 : f32 to vector<64x156xf32>
      %125 = arith.subf %124, %123 : vector<64x156xf32>
      %126 = math.exp %125 : vector<64x156xf32>
      %cst_52 = arith.constant 1.000000e+00 : f32
      %127 = vector.broadcast %cst_52 : f32 to vector<64x156xf32>
      %128 = arith.addf %127, %126 : vector<64x156xf32>
      %129 = tpu.reciprocal %128 {approx = true} : vector<64x156xf32> -> vector<64x156xf32>
      %130 = arith.mulf %123, %129 : vector<64x156xf32>
      %131 = vector.extract_strided_slice %37 {offsets = [0, 2], sizes = [1, 156], strides = [1, 1]} : vector<1x160xf32> to vector<1x156xf32>
      %132 = vector.broadcast %131 : vector<1x156xf32> to vector<64x156xf32>
      %133 = arith.mulf %130, %132 : vector<64x156xf32>
      %134 = arith.truncf %133 : vector<64x156xf32> to vector<64x156xbf16>
      %135 = vector.extract_strided_slice %9 {offsets = [0, 0, 0], sizes = [1, 64, 64], strides = [1, 1, 1]} : vector<3x64x64xbf16> to vector<1x64x64xbf16>
      %136 = vector.shape_cast %135 : vector<1x64x64xbf16> to vector<64x64xbf16>
      %137 = vector.extract_strided_slice %134 {offsets = [0, 0], sizes = [64, 152], strides = [1, 1]} : vector<64x156xbf16> to vector<64x152xbf16>
      %cst_53 = arith.constant dense<0.000000e+00> : vector<64x152xf32>
      %138 = tpu.matmul %136, %137, %cst_53 {dimension_numbers = #tpu.dot_dimension_numbers<[1], [0], [0], [1], [0, 0, 1, 1], [], []>} : vector<64x64xbf16>, vector<64x152xbf16>, vector<64x152xf32> -> vector<64x152xf32>
      %139 = vector.extract_strided_slice %9 {offsets = [1, 0, 0], sizes = [1, 64, 64], strides = [1, 1, 1]} : vector<3x64x64xbf16> to vector<1x64x64xbf16>
      %140 = vector.shape_cast %139 : vector<1x64x64xbf16> to vector<64x64xbf16>
      %141 = vector.extract_strided_slice %134 {offsets = [0, 2], sizes = [64, 152], strides = [1, 1]} : vector<64x156xbf16> to vector<64x152xbf16>
      %cst_54 = arith.constant dense<0.000000e+00> : vector<64x152xf32>
      %142 = tpu.matmul %140, %141, %cst_54 {dimension_numbers = #tpu.dot_dimension_numbers<[1], [0], [0], [1], [0, 0, 1, 1], [], []>} : vector<64x64xbf16>, vector<64x152xbf16>, vector<64x152xf32> -> vector<64x152xf32>
      %143 = arith.addf %138, %142 : vector<64x152xf32>
      %144 = vector.extract_strided_slice %9 {offsets = [2, 0, 0], sizes = [1, 64, 64], strides = [1, 1, 1]} : vector<3x64x64xbf16> to vector<1x64x64xbf16>
      %145 = vector.shape_cast %144 : vector<1x64x64xbf16> to vector<64x64xbf16>
      %146 = vector.extract_strided_slice %134 {offsets = [0, 4], sizes = [64, 152], strides = [1, 1]} : vector<64x156xbf16> to vector<64x152xbf16>
      %cst_55 = arith.constant dense<0.000000e+00> : vector<64x152xf32>
      %147 = tpu.matmul %145, %146, %cst_55 {dimension_numbers = #tpu.dot_dimension_numbers<[1], [0], [0], [1], [0, 0, 1, 1], [], []>} : vector<64x64xbf16>, vector<64x152xbf16>, vector<64x152xf32> -> vector<64x152xf32>
      %148 = arith.addf %143, %147 : vector<64x152xf32>
      %149 = vector.broadcast %10 : vector<64x1xf32> to vector<64x152xf32>
      %150 = arith.addf %148, %149 : vector<64x152xf32>
      %cst_56 = arith.constant 0.000000e+00 : f32
      %151 = vector.broadcast %cst_56 : f32 to vector<64x152xf32>
      %152 = arith.subf %151, %150 : vector<64x152xf32>
      %153 = math.exp %152 : vector<64x152xf32>
      %cst_57 = arith.constant 1.000000e+00 : f32
      %154 = vector.broadcast %cst_57 : f32 to vector<64x152xf32>
      %155 = arith.addf %154, %153 : vector<64x152xf32>
      %156 = tpu.reciprocal %155 {approx = true} : vector<64x152xf32> -> vector<64x152xf32>
      %157 = arith.mulf %150, %156 : vector<64x152xf32>
      %158 = vector.extract_strided_slice %37 {offsets = [0, 4], sizes = [1, 152], strides = [1, 1]} : vector<1x160xf32> to vector<1x152xf32>
      %159 = vector.broadcast %158 : vector<1x152xf32> to vector<64x152xf32>
      %160 = arith.mulf %157, %159 : vector<64x152xf32>
      %161 = arith.truncf %160 : vector<64x152xf32> to vector<64x152xbf16>
      %162 = vector.extract_strided_slice %11 {offsets = [0, 0, 0], sizes = [1, 64, 64], strides = [1, 1, 1]} : vector<3x64x64xbf16> to vector<1x64x64xbf16>
      %163 = vector.shape_cast %162 : vector<1x64x64xbf16> to vector<64x64xbf16>
      %164 = vector.extract_strided_slice %161 {offsets = [0, 0], sizes = [64, 144], strides = [1, 1]} : vector<64x152xbf16> to vector<64x144xbf16>
      %cst_58 = arith.constant dense<0.000000e+00> : vector<64x144xf32>
      %165 = tpu.matmul %163, %164, %cst_58 {dimension_numbers = #tpu.dot_dimension_numbers<[1], [0], [0], [1], [0, 0, 1, 1], [], []>} : vector<64x64xbf16>, vector<64x144xbf16>, vector<64x144xf32> -> vector<64x144xf32>
      %166 = vector.extract_strided_slice %11 {offsets = [1, 0, 0], sizes = [1, 64, 64], strides = [1, 1, 1]} : vector<3x64x64xbf16> to vector<1x64x64xbf16>
      %167 = vector.shape_cast %166 : vector<1x64x64xbf16> to vector<64x64xbf16>
      %168 = vector.extract_strided_slice %161 {offsets = [0, 4], sizes = [64, 144], strides = [1, 1]} : vector<64x152xbf16> to vector<64x144xbf16>
      %cst_59 = arith.constant dense<0.000000e+00> : vector<64x144xf32>
      %169 = tpu.matmul %167, %168, %cst_59 {dimension_numbers = #tpu.dot_dimension_numbers<[1], [0], [0], [1], [0, 0, 1, 1], [], []>} : vector<64x64xbf16>, vector<64x144xbf16>, vector<64x144xf32> -> vector<64x144xf32>
      %170 = arith.addf %165, %169 : vector<64x144xf32>
      %171 = vector.extract_strided_slice %11 {offsets = [2, 0, 0], sizes = [1, 64, 64], strides = [1, 1, 1]} : vector<3x64x64xbf16> to vector<1x64x64xbf16>
      %172 = vector.shape_cast %171 : vector<1x64x64xbf16> to vector<64x64xbf16>
      %173 = vector.extract_strided_slice %161 {offsets = [0, 8], sizes = [64, 144], strides = [1, 1]} : vector<64x152xbf16> to vector<64x144xbf16>
      %cst_60 = arith.constant dense<0.000000e+00> : vector<64x144xf32>
      %174 = tpu.matmul %172, %173, %cst_60 {dimension_numbers = #tpu.dot_dimension_numbers<[1], [0], [0], [1], [0, 0, 1, 1], [], []>} : vector<64x64xbf16>, vector<64x144xbf16>, vector<64x144xf32> -> vector<64x144xf32>
      %175 = arith.addf %170, %174 : vector<64x144xf32>
      %176 = vector.broadcast %12 : vector<64x1xf32> to vector<64x144xf32>
      %177 = arith.addf %175, %176 : vector<64x144xf32>
      %cst_61 = arith.constant 0.000000e+00 : f32
      %178 = vector.broadcast %cst_61 : f32 to vector<64x144xf32>
      %179 = arith.subf %178, %177 : vector<64x144xf32>
      %180 = math.exp %179 : vector<64x144xf32>
      %cst_62 = arith.constant 1.000000e+00 : f32
      %181 = vector.broadcast %cst_62 : f32 to vector<64x144xf32>
      %182 = arith.addf %181, %180 : vector<64x144xf32>
      %183 = tpu.reciprocal %182 {approx = true} : vector<64x144xf32> -> vector<64x144xf32>
      %184 = arith.mulf %177, %183 : vector<64x144xf32>
      %185 = vector.extract_strided_slice %37 {offsets = [0, 8], sizes = [1, 144], strides = [1, 1]} : vector<1x160xf32> to vector<1x144xf32>
      %186 = vector.broadcast %185 : vector<1x144xf32> to vector<64x144xf32>
      %187 = arith.mulf %184, %186 : vector<64x144xf32>
      %188 = arith.truncf %187 : vector<64x144xf32> to vector<64x144xbf16>
      %189 = vector.extract_strided_slice %13 {offsets = [0, 0, 0], sizes = [1, 64, 64], strides = [1, 1, 1]} : vector<3x64x64xbf16> to vector<1x64x64xbf16>
      %190 = vector.shape_cast %189 : vector<1x64x64xbf16> to vector<64x64xbf16>
      %191 = vector.extract_strided_slice %188 {offsets = [0, 0], sizes = [64, 128], strides = [1, 1]} : vector<64x144xbf16> to vector<64x128xbf16>
      %cst_63 = arith.constant dense<0.000000e+00> : vector<64x128xf32>
      %192 = tpu.matmul %190, %191, %cst_63 {dimension_numbers = #tpu.dot_dimension_numbers<[1], [0], [0], [1], [0, 0, 1, 1], [], []>} : vector<64x64xbf16>, vector<64x128xbf16>, vector<64x128xf32> -> vector<64x128xf32>
      %193 = vector.extract_strided_slice %13 {offsets = [1, 0, 0], sizes = [1, 64, 64], strides = [1, 1, 1]} : vector<3x64x64xbf16> to vector<1x64x64xbf16>
      %194 = vector.shape_cast %193 : vector<1x64x64xbf16> to vector<64x64xbf16>
      %195 = vector.extract_strided_slice %188 {offsets = [0, 8], sizes = [64, 128], strides = [1, 1]} : vector<64x144xbf16> to vector<64x128xbf16>
      %cst_64 = arith.constant dense<0.000000e+00> : vector<64x128xf32>
      %196 = tpu.matmul %194, %195, %cst_64 {dimension_numbers = #tpu.dot_dimension_numbers<[1], [0], [0], [1], [0, 0, 1, 1], [], []>} : vector<64x64xbf16>, vector<64x128xbf16>, vector<64x128xf32> -> vector<64x128xf32>
      %197 = arith.addf %192, %196 : vector<64x128xf32>
      %198 = vector.extract_strided_slice %13 {offsets = [2, 0, 0], sizes = [1, 64, 64], strides = [1, 1, 1]} : vector<3x64x64xbf16> to vector<1x64x64xbf16>
      %199 = vector.shape_cast %198 : vector<1x64x64xbf16> to vector<64x64xbf16>
      %200 = vector.extract_strided_slice %188 {offsets = [0, 16], sizes = [64, 128], strides = [1, 1]} : vector<64x144xbf16> to vector<64x128xbf16>
      %cst_65 = arith.constant dense<0.000000e+00> : vector<64x128xf32>
      %201 = tpu.matmul %199, %200, %cst_65 {dimension_numbers = #tpu.dot_dimension_numbers<[1], [0], [0], [1], [0, 0, 1, 1], [], []>} : vector<64x64xbf16>, vector<64x128xbf16>, vector<64x128xf32> -> vector<64x128xf32>
      %202 = arith.addf %197, %201 : vector<64x128xf32>
      %203 = vector.broadcast %14 : vector<64x1xf32> to vector<64x128xf32>
      %204 = arith.addf %202, %203 : vector<64x128xf32>
      %cst_66 = arith.constant 0.000000e+00 : f32
      %205 = vector.broadcast %cst_66 : f32 to vector<64x128xf32>
      %206 = arith.subf %205, %204 : vector<64x128xf32>
      %207 = math.exp %206 : vector<64x128xf32>
      %cst_67 = arith.constant 1.000000e+00 : f32
      %208 = vector.broadcast %cst_67 : f32 to vector<64x128xf32>
      %209 = arith.addf %208, %207 : vector<64x128xf32>
      %210 = tpu.reciprocal %209 {approx = true} : vector<64x128xf32> -> vector<64x128xf32>
      %211 = arith.mulf %204, %210 : vector<64x128xf32>
      %c0_68 = arith.constant 0 : index
      %c0_69 = arith.constant 0 : index
      %c0_70 = arith.constant 0 : index
      %212 = vector.load %arg13[%c0_68, %c0_69, %c0_70] : memref<1x64x128xf32, #tpu.memory_space<vmem>>, vector<1x64x128xf32>
      %213 = vector.shape_cast %212 : vector<1x64x128xf32> to vector<64x128xf32>
      %214 = vector.shape_cast %211 : vector<64x128xf32> to vector<1x64x128xf32>
      tpu.vector_store %arg13[%c0_68, %c0_69, %c0_70], %214 {strides = array<i32>} : memref<1x64x128xf32, #tpu.memory_space<vmem>>, vector<1x64x128xf32>,
    } else {
    }
    %true = arith.constant true
    %23 = arith.xori %20, %true : i1
    %24 = arith.extui %23 : i1 to i32
    %c0_i32_27 = arith.constant 0 : i32
    %25 = arith.cmpi ne, %24, %c0_i32_27 : i32
    scf.if %25 {
      %26 = vector.extract_strided_slice %5 {offsets = [0, 0], sizes = [32, 1], strides = [1, 1]} : vector<32x3xf32> to vector<32x1xf32>
      %27 = vector.extract_strided_slice %4 {offsets = [0, 0], sizes = [1, 158], strides = [1, 1]} : vector<1x160xf32> to vector<1x158xf32>
      %28 = vector.broadcast %26 : vector<32x1xf32> to vector<32x158xf32>
      %29 = vector.broadcast %27 : vector<1x158xf32> to vector<32x158xf32>
      %30 = arith.mulf %28, %29 : vector<32x158xf32>
      %31 = vector.extract_strided_slice %5 {offsets = [0, 1], sizes = [32, 1], strides = [1, 1]} : vector<32x3xf32> to vector<32x1xf32>
      %32 = vector.extract_strided_slice %4 {offsets = [0, 1], sizes = [1, 158], strides = [1, 1]} : vector<1x160xf32> to vector<1x158xf32>
      %33 = vector.broadcast %31 : vector<32x1xf32> to vector<32x158xf32>
      %34 = vector.broadcast %32 : vector<1x158xf32> to vector<32x158xf32>
      %35 = arith.mulf %33, %34 : vector<32x158xf32>
      %36 = arith.addf %30, %35 : vector<32x158xf32>
      %37 = vector.extract_strided_slice %5 {offsets = [0, 2], sizes = [32, 1], strides = [1, 1]} : vector<32x3xf32> to vector<32x1xf32>
      %38 = vector.extract_strided_slice %4 {offsets = [0, 2], sizes = [1, 158], strides = [1, 1]} : vector<1x160xf32> to vector<1x158xf32>
      %39 = vector.broadcast %37 : vector<32x1xf32> to vector<32x158xf32>
      %40 = vector.broadcast %38 : vector<1x158xf32> to vector<32x158xf32>
      %41 = arith.mulf %39, %40 : vector<32x158xf32>
      %42 = arith.addf %36, %41 : vector<32x158xf32>
      %43 = vector.broadcast %6 : vector<32x1xf32> to vector<32x158xf32>
      %44 = arith.addf %42, %43 : vector<32x158xf32>
      %cst = arith.constant 5.000000e-01 : f32
      %45 = vector.broadcast %cst : f32 to vector<32x158xf32>
      %46 = arith.mulf %45, %44 : vector<32x158xf32>
      %cst_28 = arith.constant 0.707106769 : f32
      %47 = vector.broadcast %cst_28 : f32 to vector<32x158xf32>
      %48 = arith.mulf %44, %47 : vector<32x158xf32>
      %cst_29 = arith.constant -4.000000e+00 : f32
      %cst_30 = arith.constant 4.000000e+00 : f32
      %49 = vector.broadcast %cst_29 : f32 to vector<32x158xf32>
      %50 = arith.maximumf %49, %48 : vector<32x158xf32>
      %51 = vector.broadcast %cst_30 : f32 to vector<32x158xf32>
      %52 = arith.minimumf %51, %50 : vector<32x158xf32>
      %53 = arith.mulf %52, %52 : vector<32x158xf32>
      %cst_31 = arith.constant -2.72614237E-10 : f32
      %54 = vector.broadcast %cst_31 : f32 to vector<32x158xf32>
      %55 = arith.mulf %54, %53 : vector<32x158xf32>
      %cst_32 = arith.constant 2.77068146E-8 : f32
      %56 = vector.broadcast %cst_32 : f32 to vector<32x158xf32>
      %57 = arith.addf %55, %56 : vector<32x158xf32>
      %58 = arith.mulf %57, %53 : vector<32x158xf32>
      %cst_33 = arith.constant -2.10102394E-6 : f32
      %59 = vector.broadcast %cst_33 : f32 to vector<32x158xf32>
      %60 = arith.addf %58, %59 : vector<32x158xf32>
      %61 = arith.mulf %60, %53 : vector<32x158xf32>
      %cst_34 = arith.constant -5.69250624E-5 : f32
      %62 = vector.broadcast %cst_34 : f32 to vector<32x158xf32>
      %63 = arith.addf %61, %62 : vector<32x158xf32>
      %64 = arith.mulf %63, %53 : vector<32x158xf32>
      %cst_35 = arith.constant -7.34990637E-4 : f32
      %65 = vector.broadcast %cst_35 : f32 to vector<32x158xf32>
      %66 = arith.addf %64, %65 : vector<32x158xf32>
      %67 = arith.mulf %66, %53 : vector<32x158xf32>
      %cst_36 = arith.constant -2.954600e-03 : f32
      %68 = vector.broadcast %cst_36 : f32 to vector<32x158xf32>
      %69 = arith.addf %67, %68 : vector<32x158xf32>
      %70 = arith.mulf %69, %53 : vector<32x158xf32>
      %cst_37 = arith.constant -0.0160960332 : f32
      %71 = vector.broadcast %cst_37 : f32 to vector<32x158xf32>
      %72 = arith.addf %70, %71 : vector<32x158xf32>
      %cst_38 = arith.constant -1.45660715E-5 : f32
      %73 = vector.broadcast %cst_38 : f32 to vector<32x158xf32>
      %74 = arith.mulf %73, %53 : vector<32x158xf32>
      %cst_39 = arith.constant -2.13374049E-4 : f32
      %75 = vector.broadcast %cst_39 : f32 to vector<32x158xf32>
      %76 = arith.addf %74, %75 : vector<32x158xf32>
      %77 = arith.mulf %76, %53 : vector<32x158xf32>
      %cst_40 = arith.constant -0.00168282702 : f32
      %78 = vector.broadcast %cst_40 : f32 to vector<32x158xf32>
      %79 = arith.addf %77, %78 : vector<32x158xf32>
      %80 = arith.mulf %79, %53 : vector<32x158xf32>
      %cst_41 = arith.constant -0.00737332925 : f32
      %81 = vector.broadcast %cst_41 : f32 to vector<32x158xf32>
      %82 = arith.addf %80, %81 : vector<32x158xf32>
      %83 = arith.mulf %82, %53 : vector<32x158xf32>
      %cst_42 = arith.constant -0.0142647391 : f32
      %84 = vector.broadcast %cst_42 : f32 to vector<32x158xf32>
      %85 = arith.addf %83, %84 : vector<32x158xf32>
      %86 = arith.mulf %52, %72 : vector<32x158xf32>
      %87 = tpu.reciprocal %85 {approx = true} : vector<32x158xf32> -> vector<32x158xf32>
      %88 = arith.mulf %86, %87 : vector<32x158xf32>
      %cst_43 = arith.constant 1.000000e+00 : f32
      %89 = vector.broadcast %cst_43 : f32 to vector<32x158xf32>
      %90 = arith.addf %89, %88 : vector<32x158xf32>
      %91 = arith.mulf %46, %90 : vector<32x158xf32>
      %92 = arith.truncf %91 : vector<32x158xf32> to vector<32x158xbf16>
      %93 = vector.extract_strided_slice %7 {offsets = [0, 0, 0], sizes = [1, 64, 32], strides = [1, 1, 1]} : vector<3x64x32xbf16> to vector<1x64x32xbf16>
      %94 = vector.shape_cast %93 : vector<1x64x32xbf16> to vector<64x32xbf16>
      %95 = vector.extract_strided_slice %92 {offsets = [0, 0], sizes = [32, 156], strides = [1, 1]} : vector<32x158xbf16> to vector<32x156xbf16>
      %cst_44 = arith.constant dense<0.000000e+00> : vector<64x156xf32>
      %96 = tpu.matmul %94, %95, %cst_44 {dimension_numbers = #tpu.dot_dimension_numbers<[1], [0], [0], [1], [0, 0, 1, 1], [], []>} : vector<64x32xbf16>, vector<32x156xbf16>, vector<64x156xf32> -> vector<64x156xf32>
      %97 = vector.extract_strided_slice %7 {offsets = [1, 0, 0], sizes = [1, 64, 32], strides = [1, 1, 1]} : vector<3x64x32xbf16> to vector<1x64x32xbf16>
      %98 = vector.shape_cast %97 : vector<1x64x32xbf16> to vector<64x32xbf16>
      %99 = vector.extract_strided_slice %92 {offsets = [0, 1], sizes = [32, 156], strides = [1, 1]} : vector<32x158xbf16> to vector<32x156xbf16>
      %cst_45 = arith.constant dense<0.000000e+00> : vector<64x156xf32>
      %100 = tpu.matmul %98, %99, %cst_45 {dimension_numbers = #tpu.dot_dimension_numbers<[1], [0], [0], [1], [0, 0, 1, 1], [], []>} : vector<64x32xbf16>, vector<32x156xbf16>, vector<64x156xf32> -> vector<64x156xf32>
      %101 = arith.addf %96, %100 : vector<64x156xf32>
      %102 = vector.extract_strided_slice %7 {offsets = [2, 0, 0], sizes = [1, 64, 32], strides = [1, 1, 1]} : vector<3x64x32xbf16> to vector<1x64x32xbf16>
      %103 = vector.shape_cast %102 : vector<1x64x32xbf16> to vector<64x32xbf16>
      %104 = vector.extract_strided_slice %92 {offsets = [0, 2], sizes = [32, 156], strides = [1, 1]} : vector<32x158xbf16> to vector<32x156xbf16>
      %cst_46 = arith.constant dense<0.000000e+00> : vector<64x156xf32>
      %105 = tpu.matmul %103, %104, %cst_46 {dimension_numbers = #tpu.dot_dimension_numbers<[1], [0], [0], [1], [0, 0, 1, 1], [], []>} : vector<64x32xbf16>, vector<32x156xbf16>, vector<64x156xf32> -> vector<64x156xf32>
      %106 = arith.addf %101, %105 : vector<64x156xf32>
      %107 = vector.broadcast %8 : vector<64x1xf32> to vector<64x156xf32>
      %108 = arith.addf %106, %107 : vector<64x156xf32>
      %cst_47 = arith.constant 0.000000e+00 : f32
      %109 = vector.broadcast %cst_47 : f32 to vector<64x156xf32>
      %110 = arith.subf %109, %108 : vector<64x156xf32>
      %111 = math.exp %110 : vector<64x156xf32>
      %cst_48 = arith.constant 1.000000e+00 : f32
      %112 = vector.broadcast %cst_48 : f32 to vector<64x156xf32>
      %113 = arith.addf %112, %111 : vector<64x156xf32>
      %114 = tpu.reciprocal %113 {approx = true} : vector<64x156xf32> -> vector<64x156xf32>
      %115 = arith.mulf %108, %114 : vector<64x156xf32>
      %116 = arith.truncf %115 : vector<64x156xf32> to vector<64x156xbf16>
      %117 = vector.extract_strided_slice %9 {offsets = [0, 0, 0], sizes = [1, 64, 64], strides = [1, 1, 1]} : vector<3x64x64xbf16> to vector<1x64x64xbf16>
      %118 = vector.shape_cast %117 : vector<1x64x64xbf16> to vector<64x64xbf16>
      %119 = vector.extract_strided_slice %116 {offsets = [0, 0], sizes = [64, 152], strides = [1, 1]} : vector<64x156xbf16> to vector<64x152xbf16>
      %cst_49 = arith.constant dense<0.000000e+00> : vector<64x152xf32>
      %120 = tpu.matmul %118, %119, %cst_49 {dimension_numbers = #tpu.dot_dimension_numbers<[1], [0], [0], [1], [0, 0, 1, 1], [], []>} : vector<64x64xbf16>, vector<64x152xbf16>, vector<64x152xf32> -> vector<64x152xf32>
      %121 = vector.extract_strided_slice %9 {offsets = [1, 0, 0], sizes = [1, 64, 64], strides = [1, 1, 1]} : vector<3x64x64xbf16> to vector<1x64x64xbf16>
      %122 = vector.shape_cast %121 : vector<1x64x64xbf16> to vector<64x64xbf16>
      %123 = vector.extract_strided_slice %116 {offsets = [0, 2], sizes = [64, 152], strides = [1, 1]} : vector<64x156xbf16> to vector<64x152xbf16>
      %cst_50 = arith.constant dense<0.000000e+00> : vector<64x152xf32>
      %124 = tpu.matmul %122, %123, %cst_50 {dimension_numbers = #tpu.dot_dimension_numbers<[1], [0], [0], [1], [0, 0, 1, 1], [], []>} : vector<64x64xbf16>, vector<64x152xbf16>, vector<64x152xf32> -> vector<64x152xf32>
      %125 = arith.addf %120, %124 : vector<64x152xf32>
      %126 = vector.extract_strided_slice %9 {offsets = [2, 0, 0], sizes = [1, 64, 64], strides = [1, 1, 1]} : vector<3x64x64xbf16> to vector<1x64x64xbf16>
      %127 = vector.shape_cast %126 : vector<1x64x64xbf16> to vector<64x64xbf16>
      %128 = vector.extract_strided_slice %116 {offsets = [0, 4], sizes = [64, 152], strides = [1, 1]} : vector<64x156xbf16> to vector<64x152xbf16>
      %cst_51 = arith.constant dense<0.000000e+00> : vector<64x152xf32>
      %129 = tpu.matmul %127, %128, %cst_51 {dimension_numbers = #tpu.dot_dimension_numbers<[1], [0], [0], [1], [0, 0, 1, 1], [], []>} : vector<64x64xbf16>, vector<64x152xbf16>, vector<64x152xf32> -> vector<64x152xf32>
      %130 = arith.addf %125, %129 : vector<64x152xf32>
      %131 = vector.broadcast %10 : vector<64x1xf32> to vector<64x152xf32>
      %132 = arith.addf %130, %131 : vector<64x152xf32>
      %cst_52 = arith.constant 0.000000e+00 : f32
      %133 = vector.broadcast %cst_52 : f32 to vector<64x152xf32>
      %134 = arith.subf %133, %132 : vector<64x152xf32>
      %135 = math.exp %134 : vector<64x152xf32>
      %cst_53 = arith.constant 1.000000e+00 : f32
      %136 = vector.broadcast %cst_53 : f32 to vector<64x152xf32>
      %137 = arith.addf %136, %135 : vector<64x152xf32>
      %138 = tpu.reciprocal %137 {approx = true} : vector<64x152xf32> -> vector<64x152xf32>
      %139 = arith.mulf %132, %138 : vector<64x152xf32>
      %140 = arith.truncf %139 : vector<64x152xf32> to vector<64x152xbf16>
      %141 = vector.extract_strided_slice %11 {offsets = [0, 0, 0], sizes = [1, 64, 64], strides = [1, 1, 1]} : vector<3x64x64xbf16> to vector<1x64x64xbf16>
      %142 = vector.shape_cast %141 : vector<1x64x64xbf16> to vector<64x64xbf16>
      %143 = vector.extract_strided_slice %140 {offsets = [0, 0], sizes = [64, 144], strides = [1, 1]} : vector<64x152xbf16> to vector<64x144xbf16>
      %cst_54 = arith.constant dense<0.000000e+00> : vector<64x144xf32>
      %144 = tpu.matmul %142, %143, %cst_54 {dimension_numbers = #tpu.dot_dimension_numbers<[1], [0], [0], [1], [0, 0, 1, 1], [], []>} : vector<64x64xbf16>, vector<64x144xbf16>, vector<64x144xf32> -> vector<64x144xf32>
      %145 = vector.extract_strided_slice %11 {offsets = [1, 0, 0], sizes = [1, 64, 64], strides = [1, 1, 1]} : vector<3x64x64xbf16> to vector<1x64x64xbf16>
      %146 = vector.shape_cast %145 : vector<1x64x64xbf16> to vector<64x64xbf16>
      %147 = vector.extract_strided_slice %140 {offsets = [0, 4], sizes = [64, 144], strides = [1, 1]} : vector<64x152xbf16> to vector<64x144xbf16>
      %cst_55 = arith.constant dense<0.000000e+00> : vector<64x144xf32>
      %148 = tpu.matmul %146, %147, %cst_55 {dimension_numbers = #tpu.dot_dimension_numbers<[1], [0], [0], [1], [0, 0, 1, 1], [], []>} : vector<64x64xbf16>, vector<64x144xbf16>, vector<64x144xf32> -> vector<64x144xf32>
      %149 = arith.addf %144, %148 : vector<64x144xf32>
      %150 = vector.extract_strided_slice %11 {offsets = [2, 0, 0], sizes = [1, 64, 64], strides = [1, 1, 1]} : vector<3x64x64xbf16> to vector<1x64x64xbf16>
      %151 = vector.shape_cast %150 : vector<1x64x64xbf16> to vector<64x64xbf16>
      %152 = vector.extract_strided_slice %140 {offsets = [0, 8], sizes = [64, 144], strides = [1, 1]} : vector<64x152xbf16> to vector<64x144xbf16>
      %cst_56 = arith.constant dense<0.000000e+00> : vector<64x144xf32>
      %153 = tpu.matmul %151, %152, %cst_56 {dimension_numbers = #tpu.dot_dimension_numbers<[1], [0], [0], [1], [0, 0, 1, 1], [], []>} : vector<64x64xbf16>, vector<64x144xbf16>, vector<64x144xf32> -> vector<64x144xf32>
      %154 = arith.addf %149, %153 : vector<64x144xf32>
      %155 = vector.broadcast %12 : vector<64x1xf32> to vector<64x144xf32>
      %156 = arith.addf %154, %155 : vector<64x144xf32>
      %cst_57 = arith.constant 0.000000e+00 : f32
      %157 = vector.broadcast %cst_57 : f32 to vector<64x144xf32>
      %158 = arith.subf %157, %156 : vector<64x144xf32>
      %159 = math.exp %158 : vector<64x144xf32>
      %cst_58 = arith.constant 1.000000e+00 : f32
      %160 = vector.broadcast %cst_58 : f32 to vector<64x144xf32>
      %161 = arith.addf %160, %159 : vector<64x144xf32>
      %162 = tpu.reciprocal %161 {approx = true} : vector<64x144xf32> -> vector<64x144xf32>
      %163 = arith.mulf %156, %162 : vector<64x144xf32>
      %164 = arith.truncf %163 : vector<64x144xf32> to vector<64x144xbf16>
      %165 = vector.extract_strided_slice %13 {offsets = [0, 0, 0], sizes = [1, 64, 64], strides = [1, 1, 1]} : vector<3x64x64xbf16> to vector<1x64x64xbf16>
      %166 = vector.shape_cast %165 : vector<1x64x64xbf16> to vector<64x64xbf16>
      %167 = vector.extract_strided_slice %164 {offsets = [0, 0], sizes = [64, 128], strides = [1, 1]} : vector<64x144xbf16> to vector<64x128xbf16>
      %cst_59 = arith.constant dense<0.000000e+00> : vector<64x128xf32>
      %168 = tpu.matmul %166, %167, %cst_59 {dimension_numbers = #tpu.dot_dimension_numbers<[1], [0], [0], [1], [0, 0, 1, 1], [], []>} : vector<64x64xbf16>, vector<64x128xbf16>, vector<64x128xf32> -> vector<64x128xf32>
      %169 = vector.extract_strided_slice %13 {offsets = [1, 0, 0], sizes = [1, 64, 64], strides = [1, 1, 1]} : vector<3x64x64xbf16> to vector<1x64x64xbf16>
      %170 = vector.shape_cast %169 : vector<1x64x64xbf16> to vector<64x64xbf16>
      %171 = vector.extract_strided_slice %164 {offsets = [0, 8], sizes = [64, 128], strides = [1, 1]} : vector<64x144xbf16> to vector<64x128xbf16>
      %cst_60 = arith.constant dense<0.000000e+00> : vector<64x128xf32>
      %172 = tpu.matmul %170, %171, %cst_60 {dimension_numbers = #tpu.dot_dimension_numbers<[1], [0], [0], [1], [0, 0, 1, 1], [], []>} : vector<64x64xbf16>, vector<64x128xbf16>, vector<64x128xf32> -> vector<64x128xf32>
      %173 = arith.addf %168, %172 : vector<64x128xf32>
      %174 = vector.extract_strided_slice %13 {offsets = [2, 0, 0], sizes = [1, 64, 64], strides = [1, 1, 1]} : vector<3x64x64xbf16> to vector<1x64x64xbf16>
      %175 = vector.shape_cast %174 : vector<1x64x64xbf16> to vector<64x64xbf16>
      %176 = vector.extract_strided_slice %164 {offsets = [0, 16], sizes = [64, 128], strides = [1, 1]} : vector<64x144xbf16> to vector<64x128xbf16>
      %cst_61 = arith.constant dense<0.000000e+00> : vector<64x128xf32>
      %177 = tpu.matmul %175, %176, %cst_61 {dimension_numbers = #tpu.dot_dimension_numbers<[1], [0], [0], [1], [0, 0, 1, 1], [], []>} : vector<64x64xbf16>, vector<64x128xbf16>, vector<64x128xf32> -> vector<64x128xf32>
      %178 = arith.addf %173, %177 : vector<64x128xf32>
      %179 = vector.broadcast %14 : vector<64x1xf32> to vector<64x128xf32>
      %180 = arith.addf %178, %179 : vector<64x128xf32>
      %cst_62 = arith.constant 0.000000e+00 : f32
      %181 = vector.broadcast %cst_62 : f32 to vector<64x128xf32>
      %182 = arith.subf %181, %180 : vector<64x128xf32>
      %183 = math.exp %182 : vector<64x128xf32>
      %cst_63 = arith.constant 1.000000e+00 : f32
      %184 = vector.broadcast %cst_63 : f32 to vector<64x128xf32>
      %185 = arith.addf %184, %183 : vector<64x128xf32>
      %186 = tpu.reciprocal %185 {approx = true} : vector<64x128xf32> -> vector<64x128xf32>
      %187 = arith.mulf %180, %186 : vector<64x128xf32>
      %c0_64 = arith.constant 0 : index
      %c0_65 = arith.constant 0 : index
      %c0_66 = arith.constant 0 : index
      %188 = vector.load %arg13[%c0_64, %c0_65, %c0_66] : memref<1x64x128xf32, #tpu.memory_space<vmem>>, vector<1x64x128xf32>
      %189 = vector.shape_cast %188 : vector<1x64x128xf32> to vector<64x128xf32>
      %190 = vector.shape_cast %187 : vector<64x128xf32> to vector<1x64x128xf32>
      tpu.vector_store %arg13[%c0_64, %c0_65, %c0_66], %190 {strides = array<i32>} : memref<1x64x128xf32, #tpu.memory_space<vmem>>, vector<1x64x128xf32>,
    } else {
    }
    return
  }
  func.func @transform_0(%arg0: i32, %arg1: i32) -> (i32, i32, i32) {
    %c0_i32 = arith.constant 0 : i32
    %c0_i32_0 = arith.constant 0 : i32
    %c0_i32_1 = arith.constant 0 : i32
    return %arg0, %c0_i32, %c0_i32_0 : i32, i32, i32
  }
  func.func @transform_1(%arg0: i32, %arg1: i32) -> (i32, i32) {
    %c0_i32 = arith.constant 0 : i32
    %c0_i32_0 = arith.constant 0 : i32
    %c0_i32_1 = arith.constant 0 : i32
    return %c0_i32, %c0_i32_0 : i32, i32
  }
  func.func @transform_2(%arg0: i32, %arg1: i32) -> (i32, i32) {
    %c0_i32 = arith.constant 0 : i32
    %c0_i32_0 = arith.constant 0 : i32
    %c0_i32_1 = arith.constant 0 : i32
    return %c0_i32, %c0_i32_0 : i32, i32
  }
  func.func @transform_3(%arg0: i32, %arg1: i32) -> (i32, i32, i32) {
    %c0_i32 = arith.constant 0 : i32
    %c0_i32_0 = arith.constant 0 : i32
    %c0_i32_1 = arith.constant 0 : i32
    %c0_i32_2 = arith.constant 0 : i32
    return %c0_i32, %c0_i32_0, %c0_i32_1 : i32, i32, i32
  }
  func.func @transform_4(%arg0: i32, %arg1: i32) -> (i32, i32) {
    %c0_i32 = arith.constant 0 : i32
    %c0_i32_0 = arith.constant 0 : i32
    %c0_i32_1 = arith.constant 0 : i32
    return %c0_i32, %c0_i32_0 : i32, i32
  }
  func.func @transform_5(%arg0: i32, %arg1: i32) -> (i32, i32, i32) {
    %c0_i32 = arith.constant 0 : i32
    %c0_i32_0 = arith.constant 0 : i32
    %c0_i32_1 = arith.constant 0 : i32
    %c0_i32_2 = arith.constant 0 : i32
    return %c0_i32, %c0_i32_0, %c0_i32_1 : i32, i32, i32
  }
  func.func @transform_6(%arg0: i32, %arg1: i32) -> (i32, i32) {
    %c0_i32 = arith.constant 0 : i32
    %c0_i32_0 = arith.constant 0 : i32
    %c0_i32_1 = arith.constant 0 : i32
    return %c0_i32, %c0_i32_0 : i32, i32
  }
  func.func @transform_7(%arg0: i32, %arg1: i32) -> (i32, i32, i32) {
    %c0_i32 = arith.constant 0 : i32
    %c0_i32_0 = arith.constant 0 : i32
    %c0_i32_1 = arith.constant 0 : i32
    %c0_i32_2 = arith.constant 0 : i32
    return %c0_i32, %c0_i32_0, %c0_i32_1 : i32, i32, i32
  }
  func.func @transform_8(%arg0: i32, %arg1: i32) -> (i32, i32) {
    %c0_i32 = arith.constant 0 : i32
    %c0_i32_0 = arith.constant 0 : i32
    %c0_i32_1 = arith.constant 0 : i32
    return %c0_i32, %c0_i32_0 : i32, i32
  }
  func.func @transform_9(%arg0: i32, %arg1: i32) -> (i32, i32, i32) {
    %c0_i32 = arith.constant 0 : i32
    %c0_i32_0 = arith.constant 0 : i32
    %c0_i32_1 = arith.constant 0 : i32
    %c0_i32_2 = arith.constant 0 : i32
    return %c0_i32, %c0_i32_0, %c0_i32_1 : i32, i32, i32
  }
  func.func @transform_10(%arg0: i32, %arg1: i32) -> (i32, i32) {
    %c0_i32 = arith.constant 0 : i32
    %c0_i32_0 = arith.constant 0 : i32
    %c0_i32_1 = arith.constant 0 : i32
    return %c0_i32, %c0_i32_0 : i32, i32
  }
  func.func @transform_11(%arg0: i32, %arg1: i32) -> (i32, i32, i32) {
    %c0_i32 = arith.constant 0 : i32
    %c0_i32_0 = arith.constant 0 : i32
    return %arg0, %c0_i32, %arg1 : i32, i32, i32
  }
}

</mosaic_0001>

<llo_original>
// kernel: tpu_custom_call.1
$region0: #{tpu_custom_call.1}
  #allocation0 [shape = 'u32[]', space=smem, size = 0x4, offset = 0x4, fixed_abs, tag = 'smem constant byte address 0x4 - core index']
  #allocation1 [shape = 'u32[144,128]{1,0:T(1,128)}', space=vmem, size = 0x12000, scoped, tag = 'internal scratch']
  %s0 = inlined_call_operand.vmem [shape: f32[2,1,160], index: 0, kind: input, shape index: {}]
  %s1 = inlined_call_operand.vmem [shape: f32[32,3], index: 1, kind: input, shape index: {}]
  %s2 = inlined_call_operand.vmem [shape: f32[32,1], index: 2, kind: input, shape index: {}]
  %s3 = inlined_call_operand.vmem [shape: bf16[3,64,32], index: 3, kind: input, shape index: {}]
  %s4 = inlined_call_operand.vmem [shape: f32[64,1], index: 4, kind: input, shape index: {}]
  %s5 = inlined_call_operand.vmem [shape: bf16[3,64,64], index: 5, kind: input, shape index: {}]
  %s6 = inlined_call_operand.vmem [shape: f32[64,1], index: 6, kind: input, shape index: {}]
  %s7 = inlined_call_operand.vmem [shape: bf16[3,64,64], index: 7, kind: input, shape index: {}]
  %s8 = inlined_call_operand.vmem [shape: f32[64,1], index: 8, kind: input, shape index: {}]
  %s9 = inlined_call_operand.vmem [shape: bf16[3,64,64], index: 9, kind: input, shape index: {}]
  %s10 = inlined_call_operand.vmem [shape: f32[64,1], index: 10, kind: input, shape index: {}]
  %s11 = inlined_call_operand.vmem [shape: f32[2,64,8], index: 11, kind: output, shape index: {}]
  %s12 = sld [smem:[#allocation0]]
  $region85: #{tpu_custom_call.1} parent=0
    _
  %s14 = ssub.s32 1, %s12
  %s15 = scalar_select 0, %s14, %s12
  loop: start=0, step=1, limit=4
  $region2: #{tpu_custom_call.1} parent=0 // loop_pre_header
    _
  $region3: #{tpu_custom_call.1} parent=0 // loop_header
    %s17 = sphi 0, %s21
    %p18 = scmp.ge.s32.totalorder %s17, 4
    %s24 = sphi 0, %s36
    %s25 = sphi 0, %s32
    %s26 = sphi 0, %s24
    %s27 = sphi 0, %s25
    %s28 = sphi 0, %s26
    %s29 = sphi 0, %s27
    %s39 = sphi 0, %s41
    %s42 = sphi 0, %s39
    %s43 = sphi 0, %s42
    %s59 = sphi 0, %s43
    %s63 = sphi 0, %s63
    %s65 = sphi 0, %s63
    %s66 = sphi 0, %s65
    %s80 = sphi 0, %s66
    %s84 = sphi 0, %s84
    %s86 = sphi 0, %s84
    %s87 = sphi 0, %s86
    %s101 = sphi 0, %s87
    %s105 = sphi 0, %s105
    %s107 = sphi 0, %s105
    %s108 = sphi 0, %s107
    %s122 = sphi 0, %s108
    %s126 = sphi 0, %s126
    %s128 = sphi 0, %s126
    %s129 = sphi 0, %s128
    %s143 = sphi 0, %s129
    %s147 = sphi 0, %s147
    %s149 = sphi 0, %s147
    %s150 = sphi 0, %s149
    %s164 = sphi 0, %s150
    %s168 = sphi 0, %s168
    %s170 = sphi 0, %s168
    %s171 = sphi 0, %s170
    %s185 = sphi 0, %s171
    %s189 = sphi 0, %s189
    %s191 = sphi 0, %s189
    %s192 = sphi 0, %s191
    %s206 = sphi 0, %s192
    %s210 = sphi 0, %s210
    %s212 = sphi 0, %s210
    %s213 = sphi 0, %s212
    %s227 = sphi 0, %s213
    %s231 = sphi 0, %s231
    %s233 = sphi 0, %s231
    %s234 = sphi 0, %s233
    %s248 = sphi 0, %s234
    %s252 = sphi 0, %s252
    %s254 = sphi 0, %s252
    %s255 = sphi 0, %s254
    %s269 = sphi 0, %s255
    %s277 = sphi 0, %s279
    %s280 = sphi 0, %s277
    %s281 = sphi 0, %s280
    %s297 = sphi 0, %s281
  $region4: #{tpu_custom_call.1} parent=0 // loop_header_branch
    %20 = sbr.rel (%p18) target = $region8
  $region5: #{tpu_custom_call.1} parent=0 // loop_body
    %s22 = ssub.s32 %s17, 1
    %s23 = ssub.s32 %s17, 2
    %s30 = sadd.s32 1, %s25
    %p31 = scmp.ge.s32.totalorder %s30, 1
    %s32 = scalar_select %p31, 0, %s30
    %s33 = sadd.s32 1, %s24
    %s34 = scalar_select %p31, %s33, %s24
    %p35 = scmp.ge.s32.totalorder %s34, 2
    %s36 = scalar_select %p35, 0, %s34
    %s37 = ssub.s32 %s24, %s36
    %p38 = scmp.eq.s32.totalorder %s37, 0
    %s40 = sadd.s32 %s39, 1
    %s41 = scalar_select %p38, %s39, %s40
    %p44 = pneg %p38
    %p45 = scmp.eq.s32.totalorder %s17, 1
    %p46 = por %p44, %p45
    %p47 = scmp.ne.s32.totalorder %s39, %s42
    %p48 = scmp.eq.s32.totalorder %s17, 0
    %p49 = por %p47, %p48
    %p50 = scmp.ne.s32.totalorder %s39, %s42
    %p51 = scmp.eq.s32.totalorder %s22, 1
    %p52 = por %p50, %p51
    %p53 = scmp.ne.s32.totalorder %s42, %s43
    %p54 = scmp.eq.s32.totalorder %s22, 0
    %p55 = por %p53, %p54
    %p56 = scmp.ne.s32.totalorder %s42, %s43
    %p57 = scmp.eq.s32.totalorder %s23, 1
    %p58 = por %p56, %p57
    %p60 = scmp.ne.s32.totalorder %s43, %s59
    %p61 = scmp.eq.s32.totalorder %s23, 0
    %p62 = por %p60, %p61
    %s64 = sadd.s32 %s63, 1
    %p67 = scmp.eq.s32.totalorder %s17, 1
    %p68 = scmp.ne.s32.totalorder %s63, %s65
    %p69 = scmp.eq.s32.totalorder %s17, 0
    %p70 = por %p68, %p69
    %p71 = scmp.ne.s32.totalorder %s63, %s65
    %p72 = scmp.eq.s32.totalorder %s22, 1
    %p73 = por %p71, %p72
    %p74 = scmp.ne.s32.totalorder %s65, %s66
    %p75 = scmp.eq.s32.totalorder %s22, 0
    %p76 = por %p74, %p75
    %p77 = scmp.ne.s32.totalorder %s65, %s66
    %p78 = scmp.eq.s32.totalorder %s23, 1
    %p79 = por %p77, %p78
    %p81 = scmp.ne.s32.totalorder %s66, %s80
    %p82 = scmp.eq.s32.totalorder %s23, 0
    %p83 = por %p81, %p82
    %s85 = sadd.s32 %s84, 1
    %p88 = scmp.eq.s32.totalorder %s17, 1
    %p89 = scmp.ne.s32.totalorder %s84, %s86
    %p90 = scmp.eq.s32.totalorder %s17, 0
    %p91 = por %p89, %p90
    %p92 = scmp.ne.s32.totalorder %s84, %s86
    %p93 = scmp.eq.s32.totalorder %s22, 1
    %p94 = por %p92, %p93
    %p95 = scmp.ne.s32.totalorder %s86, %s87
    %p96 = scmp.eq.s32.totalorder %s22, 0
    %p97 = por %p95, %p96
    %p98 = scmp.ne.s32.totalorder %s86, %s87
    %p99 = scmp.eq.s32.totalorder %s23, 1
    %p100 = por %p98, %p99
    %p102 = scmp.ne.s32.totalorder %s87, %s101
    %p103 = scmp.eq.s32.totalorder %s23, 0
    %p104 = por %p102, %p103
    %s106 = sadd.s32 %s105, 1
    %p109 = scmp.eq.s32.totalorder %s17, 1
    %p110 = scmp.ne.s32.totalorder %s105, %s107
    %p111 = scmp.eq.s32.totalorder %s17, 0
    %p112 = por %p110, %p111
    %p113 = scmp.ne.s32.totalorder %s105, %s107
    %p114 = scmp.eq.s32.totalorder %s22, 1
    %p115 = por %p113, %p114
    %p116 = scmp.ne.s32.totalorder %s107, %s108
    %p117 = scmp.eq.s32.totalorder %s22, 0
    %p118 = por %p116, %p117
    %p119 = scmp.ne.s32.totalorder %s107, %s108
    %p120 = scmp.eq.s32.totalorder %s23, 1
    %p121 = por %p119, %p120
    %p123 = scmp.ne.s32.totalorder %s108, %s122
    %p124 = scmp.eq.s32.totalorder %s23, 0
    %p125 = por %p123, %p124
    %s127 = sadd.s32 %s126, 1
    %p130 = scmp.eq.s32.totalorder %s17, 1
    %p131 = scmp.ne.s32.totalorder %s126, %s128
    %p132 = scmp.eq.s32.totalorder %s17, 0
    %p133 = por %p131, %p132
    %p134 = scmp.ne.s32.totalorder %s126, %s128
    %p135 = scmp.eq.s32.totalorder %s22, 1
    %p136 = por %p134, %p135
    %p137 = scmp.ne.s32.totalorder %s128, %s129
    %p138 = scmp.eq.s32.totalorder %s22, 0
    %p139 = por %p137, %p138
    %p140 = scmp.ne.s32.totalorder %s128, %s129
    %p141 = scmp.eq.s32.totalorder %s23, 1
    %p142 = por %p140, %p141
    %p144 = scmp.ne.s32.totalorder %s129, %s143
    %p145 = scmp.eq.s32.totalorder %s23, 0
    %p146 = por %p144, %p145
    %s148 = sadd.s32 %s147, 1
    %p151 = scmp.eq.s32.totalorder %s17, 1
    %p152 = scmp.ne.s32.totalorder %s147, %s149
    %p153 = scmp.eq.s32.totalorder %s17, 0
    %p154 = por %p152, %p153
    %p155 = scmp.ne.s32.totalorder %s147, %s149
    %p156 = scmp.eq.s32.totalorder %s22, 1
    %p157 = por %p155, %p156
    %p158 = scmp.ne.s32.totalorder %s149, %s150
    %p159 = scmp.eq.s32.totalorder %s22, 0
    %p160 = por %p158, %p159
    %p161 = scmp.ne.s32.totalorder %s149, %s150
    %p162 = scmp.eq.s32.totalorder %s23, 1
    %p163 = por %p161, %p162
    %p165 = scmp.ne.s32.totalorder %s150, %s164
    %p166 = scmp.eq.s32.totalorder %s23, 0
    %p167 = por %p165, %p166
    %s169 = sadd.s32 %s168, 1
    %p172 = scmp.eq.s32.totalorder %s17, 1
    %p173 = scmp.ne.s32.totalorder %s168, %s170
    %p174 = scmp.eq.s32.totalorder %s17, 0
    %p175 = por %p173, %p174
    %p176 = scmp.ne.s32.totalorder %s168, %s170
    %p177 = scmp.eq.s32.totalorder %s22, 1
    %p178 = por %p176, %p177
    %p179 = scmp.ne.s32.totalorder %s170, %s171
    %p180 = scmp.eq.s32.totalorder %s22, 0
    %p181 = por %p179, %p180
    %p182 = scmp.ne.s32.totalorder %s170, %s171
    %p183 = scmp.eq.s32.totalorder %s23, 1
    %p184 = por %p182, %p183
    %p186 = scmp.ne.s32.totalorder %s171, %s185
    %p187 = scmp.eq.s32.totalorder %s23, 0
    %p188 = por %p186, %p187
    %s190 = sadd.s32 %s189, 1
    %p193 = scmp.eq.s32.totalorder %s17, 1
    %p194 = scmp.ne.s32.totalorder %s189, %s191
    %p195 = scmp.eq.s32.totalorder %s17, 0
    %p196 = por %p194, %p195
    %p197 = scmp.ne.s32.totalorder %s189, %s191
    %p198 = scmp.eq.s32.totalorder %s22, 1
    %p199 = por %p197, %p198
    %p200 = scmp.ne.s32.totalorder %s191, %s192
    %p201 = scmp.eq.s32.totalorder %s22, 0
    %p202 = por %p200, %p201
    %p203 = scmp.ne.s32.totalorder %s191, %s192
    %p204 = scmp.eq.s32.totalorder %s23, 1
    %p205 = por %p203, %p204
    %p207 = scmp.ne.s32.totalorder %s192, %s206
    %p208 = scmp.eq.s32.totalorder %s23, 0
    %p209 = por %p207, %p208
    %s211 = sadd.s32 %s210, 1
    %p214 = scmp.eq.s32.totalorder %s17, 1
    %p215 = scmp.ne.s32.totalorder %s210, %s212
    %p216 = scmp.eq.s32.totalorder %s17, 0
    %p217 = por %p215, %p216
    %p218 = scmp.ne.s32.totalorder %s210, %s212
    %p219 = scmp.eq.s32.totalorder %s22, 1
    %p220 = por %p218, %p219
    %p221 = scmp.ne.s32.totalorder %s212, %s213
    %p222 = scmp.eq.s32.totalorder %s22, 0
    %p223 = por %p221, %p222
    %p224 = scmp.ne.s32.totalorder %s212, %s213
    %p225 = scmp.eq.s32.totalorder %s23, 1
    %p226 = por %p224, %p225
    %p228 = scmp.ne.s32.totalorder %s213, %s227
    %p229 = scmp.eq.s32.totalorder %s23, 0
    %p230 = por %p228, %p229
    %s232 = sadd.s32 %s231, 1
    %p235 = scmp.eq.s32.totalorder %s17, 1
    %p236 = scmp.ne.s32.totalorder %s231, %s233
    %p237 = scmp.eq.s32.totalorder %s17, 0
    %p238 = por %p236, %p237
    %p239 = scmp.ne.s32.totalorder %s231, %s233
    %p240 = scmp.eq.s32.totalorder %s22, 1
    %p241 = por %p239, %p240
    %p242 = scmp.ne.s32.totalorder %s233, %s234
    %p243 = scmp.eq.s32.totalorder %s22, 0
    %p244 = por %p242, %p243
    %p245 = scmp.ne.s32.totalorder %s233, %s234
    %p246 = scmp.eq.s32.totalorder %s23, 1
    %p247 = por %p245, %p246
    %p249 = scmp.ne.s32.totalorder %s234, %s248
    %p250 = scmp.eq.s32.totalorder %s23, 0
    %p251 = por %p249, %p250
    %s253 = sadd.s32 %s252, 1
    %p256 = scmp.eq.s32.totalorder %s17, 1
    %p257 = scmp.ne.s32.totalorder %s252, %s254
    %p258 = scmp.eq.s32.totalorder %s17, 0
    %p259 = por %p257, %p258
    %p260 = scmp.ne.s32.totalorder %s252, %s254
    %p261 = scmp.eq.s32.totalorder %s22, 1
    %p262 = por %p260, %p261
    %p263 = scmp.ne.s32.totalorder %s254, %s255
    %p264 = scmp.eq.s32.totalorder %s22, 0
    %p265 = por %p263, %p264
    %p266 = scmp.ne.s32.totalorder %s254, %s255
    %p267 = scmp.eq.s32.totalorder %s23, 1
    %p268 = por %p266, %p267
    %p270 = scmp.ne.s32.totalorder %s255, %s269
    %p271 = scmp.eq.s32.totalorder %s23, 0
    %p272 = por %p270, %p271
    %s273 = ssub.s32 %s24, %s36
    %s274 = ssub.s32 %s25, %s32
    %s275 = sor.u32 %s273, %s274
    %p276 = scmp.eq.s32.totalorder %s275, 0
    %s278 = sadd.s32 %s277, 1
    %s279 = scalar_select %p276, %s277, %s278
    %p282 = pneg %p276
    %p283 = scmp.eq.s32.totalorder %s17, 1
    %p284 = por %p282, %p283
    %p285 = scmp.ne.s32.totalorder %s277, %s280
    %p286 = scmp.eq.s32.totalorder %s17, 0
    %p287 = por %p285, %p286
    %p288 = scmp.ne.s32.totalorder %s277, %s280
    %p289 = scmp.eq.s32.totalorder %s22, 1
    %p290 = por %p288, %p289
    %p291 = scmp.ne.s32.totalorder %s280, %s281
    %p292 = scmp.eq.s32.totalorder %s22, 0
    %p293 = por %p291, %p292
    %p294 = scmp.ne.s32.totalorder %s280, %s281
    %p295 = scmp.eq.s32.totalorder %s23, 1
    %p296 = por %p294, %p295
    %p298 = scmp.ne.s32.totalorder %s281, %s297
    %p299 = scmp.eq.s32.totalorder %s23, 0
    %p300 = por %p298, %p299
    %p301 = scmp.le.s32.totalorder 1, %s17
    %p302 = scmp.lt.s32.totalorder %s17, 3
    %p303 = pnand %p301, %p302
    %p304 = pneg %p303
    // Predicated region
    $region9: #{tpu_custom_call.1} parent=5 // pred_check
      _
    $region10: #{tpu_custom_call.1} parent=5 // pred_check_branch
      %306 = sbr.rel (%p303) target = $region12
    $region11: #{tpu_custom_call.1} parent=5 // pred_region
      %s307 = ssub.s32 %s17, 1
      // Predicated region
      $region13: #{tpu_custom_call.1} parent=11 // pred_check
        %p308 = pneg %p76
      $region14: #{tpu_custom_call.1} parent=11 // pred_check_branch
        %310 = sbr.rel (%p308) target = $region16
      $region15: #{tpu_custom_call.1} parent=11 // pred_region
        _
      $region16: #{tpu_custom_call.1} parent=11 // pred_fallthru
        _
      // Predicated region
      $region17: #{tpu_custom_call.1} parent=11 // pred_check
        %p311 = pneg %p97
      $region18: #{tpu_custom_call.1} parent=11 // pred_check_branch
        %313 = sbr.rel (%p311) target = $region20
      $region19: #{tpu_custom_call.1} parent=11 // pred_region
        _
      $region20: #{tpu_custom_call.1} parent=11 // pred_fallthru
        _
      // Predicated region
      $region21: #{tpu_custom_call.1} parent=11 // pred_check
        %p314 = pneg %p118
      $region22: #{tpu_custom_call.1} parent=11 // pred_check_branch
        %316 = sbr.rel (%p314) target = $region24
      $region23: #{tpu_custom_call.1} parent=11 // pred_region
        _
      $region24: #{tpu_custom_call.1} parent=11 // pred_fallthru
        _
      // Predicated region
      $region25: #{tpu_custom_call.1} parent=11 // pred_check
        %p317 = pneg %p139
      $region26: #{tpu_custom_call.1} parent=11 // pred_check_branch
        %319 = sbr.rel (%p317) target = $region28
      $region27: #{tpu_custom_call.1} parent=11 // pred_region
        _
      $region28: #{tpu_custom_call.1} parent=11 // pred_fallthru
        _
      // Predicated region
      $region29: #{tpu_custom_call.1} parent=11 // pred_check
        %p320 = pneg %p160
      $region30: #{tpu_custom_call.1} parent=11 // pred_check_branch
        %322 = sbr.rel (%p320) target = $region32
      $region31: #{tpu_custom_call.1} parent=11 // pred_region
        _
      $region32: #{tpu_custom_call.1} parent=11 // pred_fallthru
        _
      // Predicated region
      $region33: #{tpu_custom_call.1} parent=11 // pred_check
        %p323 = pneg %p181
      $region34: #{tpu_custom_call.1} parent=11 // pred_check_branch
        %325 = sbr.rel (%p323) target = $region36
      $region35: #{tpu_custom_call.1} parent=11 // pred_region
        _
      $region36: #{tpu_custom_call.1} parent=11 // pred_fallthru
        _
      // Predicated region
      $region37: #{tpu_custom_call.1} parent=11 // pred_check
        %p326 = pneg %p202
      $region38: #{tpu_custom_call.1} parent=11 // pred_check_branch
        %328 = sbr.rel (%p326) target = $region40
      $region39: #{tpu_custom_call.1} parent=11 // pred_region
        _
      $region40: #{tpu_custom_call.1} parent=11 // pred_fallthru
        _
      // Predicated region
      $region41: #{tpu_custom_call.1} parent=11 // pred_check
        %p329 = pneg %p223
      $region42: #{tpu_custom_call.1} parent=11 // pred_check_branch
        %331 = sbr.rel (%p329) target = $region44
      $region43: #{tpu_custom_call.1} parent=11 // pred_region
        _
      $region44: #{tpu_custom_call.1} parent=11 // pred_fallthru
        _
      // Predicated region
      $region45: #{tpu_custom_call.1} parent=11 // pred_check
        %p332 = pneg %p244
      $region46: #{tpu_custom_call.1} parent=11 // pred_check_branch
        %334 = sbr.rel (%p332) target = $region48
      $region47: #{tpu_custom_call.1} parent=11 // pred_region
        _
      $region48: #{tpu_custom_call.1} parent=11 // pred_fallthru
        _
      // Predicated region
      $region49: #{tpu_custom_call.1} parent=11 // pred_check
        %p335 = pneg %p265
      $region50: #{tpu_custom_call.1} parent=11 // pred_check_branch
        %337 = sbr.rel (%p335) target = $region52
      $region51: #{tpu_custom_call.1} parent=11 // pred_region
        _
      $region52: #{tpu_custom_call.1} parent=11 // pred_fallthru
        _
    $region12: #{tpu_custom_call.1} parent=5 // pred_fallthru
      _
    %p338 = scmp.lt.s32.totalorder %s17, 2
    // Predicated region
    $region53: #{tpu_custom_call.1} parent=5 // pred_check
      %p339 = pneg %p338
    $region54: #{tpu_custom_call.1} parent=5 // pred_check_branch
      %341 = sbr.rel (%p339) target = $region56
    $region55: #{tpu_custom_call.1} parent=5 // pred_region
      // Predicated region
      $region57: #{tpu_custom_call.1} parent=55 // pred_check
        %p342 = pneg %p49
      $region58: #{tpu_custom_call.1} parent=55 // pred_check_branch
        %344 = sbr.rel (%p342) target = $region60
      $region59: #{tpu_custom_call.1} parent=55 // pred_region
        %p345 = scmp.lt.s32.totalorder %s24, 1
        %s346 = scalar_select %p345, %s24, 1
        %s347 = smul.addr %s346, 2
        %s348 = scalar_lea.vmem %s0, %s347
      $region60: #{tpu_custom_call.1} parent=55 // pred_fallthru
        _
    $region56: #{tpu_custom_call.1} parent=5 // pred_fallthru
      _
    %p349 = scmp.le.s32.totalorder 1, %s17
    %p350 = scmp.lt.s32.totalorder %s17, 3
    %p351 = pnand %p349, %p350
    %p352 = pneg %p351
    // Predicated region
    $region61: #{tpu_custom_call.1} parent=5 // pred_check
      _
    $region62: #{tpu_custom_call.1} parent=5 // pred_check_branch
      %354 = sbr.rel (%p351) target = $region64
    $region63: #{tpu_custom_call.1} parent=5 // pred_region
      %s355 = ssub.s32 %s17, 1
      %p356 = scmp.lt.s32.totalorder %s26, 1
      %s357 = scalar_select %p356, %s26, 1
      %s358 = smul.addr %s357, 2
      %s359 = scalar_lea.vmem %s0, %s358
      %p360 = pneg %p55
      %p361 = pneg %p52
      %p362 = pneg %p76
      %p363 = pneg %p73
      %p364 = pneg %p97
      %p365 = pneg %p94
      %p366 = pneg %p118
      %p367 = pneg %p115
      %p368 = pneg %p139
      %p369 = pneg %p136
      %p370 = pneg %p160
      %p371 = pneg %p157
      %p372 = pneg %p181
      %p373 = pneg %p178
      %p374 = pneg %p202
      %p375 = pneg %p199
      %p376 = pneg %p223
      %p377 = pneg %p220
      %p378 = pneg %p244
      %p379 = pneg %p241
      %p380 = pneg %p265
      %p381 = pneg %p262
      %p382 = pneg %p293
      %p383 = pneg %p290
      %p384 = scmp.lt.s32.totalorder %s26, 1
      %s385 = scalar_select %p384, %s26, 1
      %p386 = scmp.lt.s32.totalorder %s27, 0
      %s387 = scalar_select %p386, %s27, 0
      %s388 = smul.addr %s385, 8
      %s389 = sadd.s32 %s387, %s388
      %s390 = smul.addr %s389, 8
      %s391 = scalar_lea.vmem %s11, %s390
      %p392 = scmp.lt.s32.totalorder %s26, 1
      %s393 = scalar_select %p392, %s26, 1
      %s394 = smul.addr %s393, 2
      %s395 = scalar_lea.vmem %s0, %s394
      %p396 = scmp.lt.s32.totalorder %s26, 1
      %s397 = scalar_select %p396, %s26, 1
      %p398 = scmp.lt.s32.totalorder %s27, 0
      %s399 = scalar_select %p398, %s27, 0
      %s400 = smul.addr %s397, 8
      %s401 = sadd.s32 %s399, %s400
      %s402 = smul.addr %s401, 8
      %s403 = scalar_lea.vmem %s11, %s402
      %s405 = smul.u32 %s27, 128
      %s406 = sshra.s32 %s405, 7
      %s407 = sand.u32 %s405, 127
      %s408 = scalar_lea.vmem %s395, %s406
      %v409 = vld [vmem:[%s408] sm:$0x3]
      %v410 = vld [vmem:[%s1] sm:$0xff]
      %v411 = vld [vmem:[%s1 + $0x8] sm:$0xff]
      %v412 = vld [vmem:[%s1 + $0x10] sm:$0xff]
      %v413 = vld [vmem:[%s1 + $0x18] sm:$0xff]
      %v414 = vld [vmem:[%s2] sm:$0xff]
      %v415 = vld [vmem:[%s2 + $0x8] sm:$0xff]
      %v416 = vld [vmem:[%s2 + $0x10] sm:$0xff]
      %v417 = vld [vmem:[%s2 + $0x18] sm:$0xff]
      %v418 = vld [vmem:[%s3] sm:$0xf]
      %v419 = vld [vmem:[%s3 + $0x4] sm:$0xf]
      %v420 = vld [vmem:[%s3 + $0x8] sm:$0xf]
      %v421 = vld [vmem:[%s3 + $0xc] sm:$0xf]
      %v422 = vld [vmem:[%s3 + $0x10] sm:$0xf]
      %v423 = vld [vmem:[%s3 + $0x14] sm:$0xf]
      %v424 = vld [vmem:[%s3 + $0x18] sm:$0xf]
      %v425 = vld [vmem:[%s3 + $0x1c] sm:$0xf]
      %v426 = vld [vmem:[%s3 + $0x20] sm:$0xf]
      %v427 = vld [vmem:[%s3 + $0x24] sm:$0xf]
      %v428 = vld [vmem:[%s3 + $0x28] sm:$0xf]
      %v429 = vld [vmem:[%s3 + $0x2c] sm:$0xf]
      %v430 = vld [vmem:[%s3 + $0x30] sm:$0xf]
      %v431 = vld [vmem:[%s3 + $0x34] sm:$0xf]
      %v432 = vld [vmem:[%s3 + $0x38] sm:$0xf]
      %v433 = vld [vmem:[%s3 + $0x3c] sm:$0xf]
      %v434 = vld [vmem:[%s3 + $0x40] sm:$0xf]
      %v435 = vld [vmem:[%s3 + $0x44] sm:$0xf]
      %v436 = vld [vmem:[%s3 + $0x48] sm:$0xf]
      %v437 = vld [vmem:[%s3 + $0x4c] sm:$0xf]
      %v438 = vld [vmem:[%s3 + $0x50] sm:$0xf]
      %v439 = vld [vmem:[%s3 + $0x54] sm:$0xf]
      %v440 = vld [vmem:[%s3 + $0x58] sm:$0xf]
      %v441 = vld [vmem:[%s3 + $0x5c] sm:$0xf]
      %v442 = vld [vmem:[%s4] sm:$0xff]
      %v443 = vld [vmem:[%s4 + $0x8] sm:$0xff]
      %v444 = vld [vmem:[%s4 + $0x10] sm:$0xff]
      %v445 = vld [vmem:[%s4 + $0x18] sm:$0xff]
      %v446 = vld [vmem:[%s4 + $0x20] sm:$0xff]
      %v447 = vld [vmem:[%s4 + $0x28] sm:$0xff]
      %v448 = vld [vmem:[%s4 + $0x30] sm:$0xff]
      %v449 = vld [vmem:[%s4 + $0x38] sm:$0xff]
      %v450 = vld [vmem:[%s5] sm:$0xf]
      %v451 = vld [vmem:[%s5 + $0x4] sm:$0xf]
      %v452 = vld [vmem:[%s5 + $0x8] sm:$0xf]
      %v453 = vld [vmem:[%s5 + $0xc] sm:$0xf]
      %v454 = vld [vmem:[%s5 + $0x10] sm:$0xf]
      %v455 = vld [vmem:[%s5 + $0x14] sm:$0xf]
      %v456 = vld [vmem:[%s5 + $0x18] sm:$0xf]
      %v457 = vld [vmem:[%s5 + $0x1c] sm:$0xf]
      %v458 = vld [vmem:[%s5 + $0x20] sm:$0xf]
      %v459 = vld [vmem:[%s5 + $0x24] sm:$0xf]
      %v460 = vld [vmem:[%s5 + $0x28] sm:$0xf]
      %v461 = vld [vmem:[%s5 + $0x2c] sm:$0xf]
      %v462 = vld [vmem:[%s5 + $0x30] sm:$0xf]
      %v463 = vld [vmem:[%s5 + $0x34] sm:$0xf]
      %v464 = vld [vmem:[%s5 + $0x38] sm:$0xf]
      %v465 = vld [vmem:[%s5 + $0x3c] sm:$0xf]
      %v466 = vld [vmem:[%s5 + $0x40] sm:$0xf]
      %v467 = vld [vmem:[%s5 + $0x44] sm:$0xf]
      %v468 = vld [vmem:[%s5 + $0x48] sm:$0xf]
      %v469 = vld [vmem:[%s5 + $0x4c] sm:$0xf]
      %v470 = vld [vmem:[%s5 + $0x50] sm:$0xf]
      %v471 = vld [vmem:[%s5 + $0x54] sm:$0xf]
      %v472 = vld [vmem:[%s5 + $0x58] sm:$0xf]
      %v473 = vld [vmem:[%s5 + $0x5c] sm:$0xf]
      %v474 = vld [vmem:[%s6] sm:$0xff]
      %v475 = vld [vmem:[%s6 + $0x8] sm:$0xff]
      %v476 = vld [vmem:[%s6 + $0x10] sm:$0xff]
      %v477 = vld [vmem:[%s6 + $0x18] sm:$0xff]
      %v478 = vld [vmem:[%s6 + $0x20] sm:$0xff]
      %v479 = vld [vmem:[%s6 + $0x28] sm:$0xff]
      %v480 = vld [vmem:[%s6 + $0x30] sm:$0xff]
      %v481 = vld [vmem:[%s6 + $0x38] sm:$0xff]
      %v482 = vld [vmem:[%s7] sm:$0xf]
      %v483 = vld [vmem:[%s7 + $0x4] sm:$0xf]
      %v484 = vld [vmem:[%s7 + $0x8] sm:$0xf]
      %v485 = vld [vmem:[%s7 + $0xc] sm:$0xf]
      %v486 = vld [vmem:[%s7 + $0x10] sm:$0xf]
      %v487 = vld [vmem:[%s7 + $0x14] sm:$0xf]
      %v488 = vld [vmem:[%s7 + $0x18] sm:$0xf]
      %v489 = vld [vmem:[%s7 + $0x1c] sm:$0xf]
      %v490 = vld [vmem:[%s7 + $0x20] sm:$0xf]
      %v491 = vld [vmem:[%s7 + $0x24] sm:$0xf]
      %v492 = vld [vmem:[%s7 + $0x28] sm:$0xf]
      %v493 = vld [vmem:[%s7 + $0x2c] sm:$0xf]
      %v494 = vld [vmem:[%s7 + $0x30] sm:$0xf]
      %v495 = vld [vmem:[%s7 + $0x34] sm:$0xf]
      %v496 = vld [vmem:[%s7 + $0x38] sm:$0xf]
      %v497 = vld [vmem:[%s7 + $0x3c] sm:$0xf]
      %v498 = vld [vmem:[%s7 + $0x40] sm:$0xf]
      %v499 = vld [vmem:[%s7 + $0x44] sm:$0xf]
      %v500 = vld [vmem:[%s7 + $0x48] sm:$0xf]
      %v501 = vld [vmem:[%s7 + $0x4c] sm:$0xf]
      %v502 = vld [vmem:[%s7 + $0x50] sm:$0xf]
      %v503 = vld [vmem:[%s7 + $0x54] sm:$0xf]
      %v504 = vld [vmem:[%s7 + $0x58] sm:$0xf]
      %v505 = vld [vmem:[%s7 + $0x5c] sm:$0xf]
      %v506 = vld [vmem:[%s8] sm:$0xff]
      %v507 = vld [vmem:[%s8 + $0x8] sm:$0xff]
      %v508 = vld [vmem:[%s8 + $0x10] sm:$0xff]
      %v509 = vld [vmem:[%s8 + $0x18] sm:$0xff]
      %v510 = vld [vmem:[%s8 + $0x20] sm:$0xff]
      %v511 = vld [vmem:[%s8 + $0x28] sm:$0xff]
      %v512 = vld [vmem:[%s8 + $0x30] sm:$0xff]
      %v513 = vld [vmem:[%s8 + $0x38] sm:$0xff]
      %v514 = vld [vmem:[%s9] sm:$0xf]
      %v515 = vld [vmem:[%s9 + $0x4] sm:$0xf]
      %v516 = vld [vmem:[%s9 + $0x8] sm:$0xf]
      %v517 = vld [vmem:[%s9 + $0xc] sm:$0xf]
      %v518 = vld [vmem:[%s9 + $0x10] sm:$0xf]
      %v519 = vld [vmem:[%s9 + $0x14] sm:$0xf]
      %v520 = vld [vmem:[%s9 + $0x18] sm:$0xf]
      %v521 = vld [vmem:[%s9 + $0x1c] sm:$0xf]
      %v522 = vld [vmem:[%s9 + $0x20] sm:$0xf]
      %v523 = vld [vmem:[%s9 + $0x24] sm:$0xf]
      %v524 = vld [vmem:[%s9 + $0x28] sm:$0xf]
      %v525 = vld [vmem:[%s9 + $0x2c] sm:$0xf]
      %v526 = vld [vmem:[%s9 + $0x30] sm:$0xf]
      %v527 = vld [vmem:[%s9 + $0x34] sm:$0xf]
      %v528 = vld [vmem:[%s9 + $0x38] sm:$0xf]
      %v529 = vld [vmem:[%s9 + $0x3c] sm:$0xf]
      %v530 = vld [vmem:[%s9 + $0x40] sm:$0xf]
      %v531 = vld [vmem:[%s9 + $0x44] sm:$0xf]
      %v532 = vld [vmem:[%s9 + $0x48] sm:$0xf]
      %v533 = vld [vmem:[%s9 + $0x4c] sm:$0xf]
      %v534 = vld [vmem:[%s9 + $0x50] sm:$0xf]
      %v535 = vld [vmem:[%s9 + $0x54] sm:$0xf]
      %v536 = vld [vmem:[%s9 + $0x58] sm:$0xf]
      %v537 = vld [vmem:[%s9 + $0x5c] sm:$0xf]
      %v538 = vld [vmem:[%s10] sm:$0xff]
      %v539 = vld [vmem:[%s10 + $0x8] sm:$0xff]
      %v540 = vld [vmem:[%s10 + $0x10] sm:$0xff]
      %v541 = vld [vmem:[%s10 + $0x18] sm:$0xff]
      %v542 = vld [vmem:[%s10 + $0x20] sm:$0xff]
      %v543 = vld [vmem:[%s10 + $0x28] sm:$0xff]
      %v544 = vld [vmem:[%s10 + $0x30] sm:$0xff]
      %v545 = vld [vmem:[%s10 + $0x38] sm:$0xff]
      %p546 = scmp.eq.s32.totalorder %s27, 0
      %s547 = sadd.s32 %s27, 1
      %s548 = smul.u32 %s547, 128
      %s549 = sadd.s32 %s548, 16
      %p550 = scmp.gt.s32.totalorder %s549, 8
      %p551 = por %p546, %p550
      // Predicated region
      $region65: #{tpu_custom_call.1} parent=63 // pred_check
        %p552 = pneg %p551
      $region66: #{tpu_custom_call.1} parent=63 // pred_check_branch
        %554 = sbr.rel (%p552) target = $region68
      $region67: #{tpu_custom_call.1} parent=63 // pred_region
        %v555 = vlaneseq
        %v556 = vand.u32 %v555, 127
        %v557 = vadd.s32 %v556, 128
        %s558 = ssub.s32 %s405, 16
        %v559 = vstv %s558
        %v560 = vadd.s32 %v556, %v559
        %v561 = vadd.s32 %v557, %v559
        %vm562 = vcmp.ge.s32.totalorder %v560, 0
        %vm563 = vcmp.ge.s32.totalorder %v561, 0
        %vm564 = vcmp.lt.s32.totalorder %v560, 8
        %vm565 = vcmp.lt.s32.totalorder %v561, 8
        %vm566 = vmand %vm562, %vm564
        %vm567 = vmand %vm563, %vm565
        %v568 = vsel %vm566, 1, 0
        %v569 = vsel %vm567, 1, 0
        %v570 = vcvt.s32.f32 %v568
        %v571 = vcvt.s32.f32 %v569
        %573 = vset.pattern.permute.xlu0 0
        %574 = vperm.xlu0 %573, %v410
        %v575 = vpop.permute.xlu0 %574
        %578 = vset.pattern.permute.xlu0 0
        %579 = vperm.xlu0 %578, %v411
        %v580 = vpop.permute.xlu0 %579
        %583 = vset.pattern.permute.xlu0 0
        %584 = vperm.xlu0 %583, %v412
        %v585 = vpop.permute.xlu0 %584
        %588 = vset.pattern.permute.xlu0 0
        %589 = vperm.xlu0 %588, %v413
        %v590 = vpop.permute.xlu0 %589
        %v593 = vlaneseq
        %v594 = vshrl.u32 %v593, 7
        %v595 = vsub.s32 0, %v594
        %v596 = vrot.slane %v409, %v595
        %v597 = vlaneseq
        %v598 = vshrl.u32 %v597, 7
        %v599 = vsub.s32 1, %v598
        %v600 = vrot.slane %v409, %v599
        %v603 = vmul.f32 %v575, %v596
        %v604 = vmul.f32 %v575, %v600
        %v605 = vmul.f32 %v580, %v596
        %v606 = vmul.f32 %v580, %v600
        %v607 = vmul.f32 %v585, %v596
        %v608 = vmul.f32 %v585, %v600
        %v609 = vmul.f32 %v590, %v596
        %v610 = vmul.f32 %v590, %v600
        %611 = vset.pattern.permute.xlu0 1
        %612 = vperm.xlu0 %611, %v410
        %v613 = vpop.permute.xlu0 %612
        %615 = vset.pattern.permute.xlu0 1
        %616 = vperm.xlu0 %615, %v411
        %v617 = vpop.permute.xlu0 %616
        %619 = vset.pattern.permute.xlu0 1
        %620 = vperm.xlu0 %619, %v412
        %v621 = vpop.permute.xlu0 %620
        %623 = vset.pattern.permute.xlu0 1
        %624 = vperm.xlu0 %623, %v413
        %v625 = vpop.permute.xlu0 %624
        %v627 = vmul.f32 %v613, %v596
        %v628 = vmul.f32 %v613, %v600
        %v629 = vmul.f32 %v617, %v596
        %v630 = vmul.f32 %v617, %v600
        %v631 = vmul.f32 %v621, %v596
        %v632 = vmul.f32 %v621, %v600
        %v633 = vmul.f32 %v625, %v596
        %v634 = vmul.f32 %v625, %v600
        %643 = vrot.lane.b32.xlu0 %v627, 127
        %v644 = vpop.permute.xlu0 %643
        %645 = vrot.lane.b32.xlu0 %v628, 127
        %v646 = vpop.permute.xlu0 %645
        %647 = vrot.lane.b32.xlu0 %v629, 127
        %v648 = vpop.permute.xlu0 %647
        %649 = vrot.lane.b32.xlu0 %v630, 127
        %v650 = vpop.permute.xlu0 %649
        %651 = vrot.lane.b32.xlu0 %v631, 127
        %v652 = vpop.permute.xlu0 %651
        %653 = vrot.lane.b32.xlu0 %v632, 127
        %v654 = vpop.permute.xlu0 %653
        %655 = vrot.lane.b32.xlu0 %v633, 127
        %v656 = vpop.permute.xlu0 %655
        %657 = vrot.lane.b32.xlu0 %v634, 127
        %v658 = vpop.permute.xlu0 %657
        %vm659 = vcmask 1039360
        %v660 = vsel %vm659, %v644, %v646
        %v661 = vsel %vm659, %v648, %v650
        %v662 = vsel %vm659, %v652, %v654
        %v663 = vsel %vm659, %v656, %v658
        %v672 = vadd.f32 %v603, %v660
        %v673 = vadd.f32 %v604, %v646
        %v674 = vadd.f32 %v605, %v661
        %v675 = vadd.f32 %v606, %v650
        %v676 = vadd.f32 %v607, %v662
        %v677 = vadd.f32 %v608, %v654
        %v678 = vadd.f32 %v609, %v663
        %v679 = vadd.f32 %v610, %v658
        %680 = vset.pattern.permute.xlu0 2
        %681 = vperm.xlu0 %680, %v410
        %v682 = vpop.permute.xlu0 %681
        %684 = vset.pattern.permute.xlu0 2
        %685 = vperm.xlu0 %684, %v411
        %v686 = vpop.permute.xlu0 %685
        %688 = vset.pattern.permute.xlu0 2
        %689 = vperm.xlu0 %688, %v412
        %v690 = vpop.permute.xlu0 %689
        %692 = vset.pattern.permute.xlu0 2
        %693 = vperm.xlu0 %692, %v413
        %v694 = vpop.permute.xlu0 %693
        %v696 = vmul.f32 %v682, %v596
        %v697 = vmul.f32 %v682, %v600
        %v698 = vmul.f32 %v686, %v596
        %v699 = vmul.f32 %v686, %v600
        %v700 = vmul.f32 %v690, %v596
        %v701 = vmul.f32 %v690, %v600
        %v702 = vmul.f32 %v694, %v596
        %v703 = vmul.f32 %v694, %v600
        %712 = vrot.lane.b32.xlu0 %v696, 126
        %v713 = vpop.permute.xlu0 %712
        %714 = vrot.lane.b32.xlu0 %v697, 126
        %v715 = vpop.permute.xlu0 %714
        %716 = vrot.lane.b32.xlu0 %v698, 126
        %v717 = vpop.permute.xlu0 %716
        %718 = vrot.lane.b32.xlu0 %v699, 126
        %v719 = vpop.permute.xlu0 %718
        %720 = vrot.lane.b32.xlu0 %v700, 126
        %v721 = vpop.permute.xlu0 %720
        %722 = vrot.lane.b32.xlu0 %v701, 126
        %v723 = vpop.permute.xlu0 %722
        %724 = vrot.lane.b32.xlu0 %v702, 126
        %v725 = vpop.permute.xlu0 %724
        %726 = vrot.lane.b32.xlu0 %v703, 126
        %v727 = vpop.permute.xlu0 %726
        %vm728 = vcmask 1031168
        %v729 = vsel %vm728, %v713, %v715
        %v730 = vsel %vm728, %v717, %v719
        %v731 = vsel %vm728, %v721, %v723
        %v732 = vsel %vm728, %v725, %v727
        %v741 = vadd.f32 %v672, %v729
        %v742 = vadd.f32 %v673, %v715
        %v743 = vadd.f32 %v674, %v730
        %v744 = vadd.f32 %v675, %v719
        %v745 = vadd.f32 %v676, %v731
        %v746 = vadd.f32 %v677, %v723
        %v747 = vadd.f32 %v678, %v732
        %v748 = vadd.f32 %v679, %v727
        %750 = vset.pattern.permute.xlu0 0
        %751 = vperm.xlu0 %750, %v414
        %v752 = vpop.permute.xlu0 %751
        %755 = vset.pattern.permute.xlu0 0
        %756 = vperm.xlu0 %755, %v415
        %v757 = vpop.permute.xlu0 %756
        %760 = vset.pattern.permute.xlu0 0
        %761 = vperm.xlu0 %760, %v416
        %v762 = vpop.permute.xlu0 %761
        %765 = vset.pattern.permute.xlu0 0
        %766 = vperm.xlu0 %765, %v417
        %v767 = vpop.permute.xlu0 %766
        %v769 = vadd.f32 %v741, %v752
        %v770 = vadd.f32 %v742, %v752
        %v771 = vadd.f32 %v743, %v757
        %v772 = vadd.f32 %v744, %v757
        %v773 = vadd.f32 %v745, %v762
        %v774 = vadd.f32 %v746, %v762
        %v775 = vadd.f32 %v747, %v767
        %v776 = vadd.f32 %v748, %v767
        %v777 = vmul.f32 %v769, 0.5
        %v778 = vmul.f32 %v770, 0.5
        %v779 = vmul.f32 %v771, 0.5
        %v780 = vmul.f32 %v772, 0.5
        %v781 = vmul.f32 %v773, 0.5
        %v782 = vmul.f32 %v774, 0.5
        %v783 = vmul.f32 %v775, 0.5
        %v784 = vmul.f32 %v776, 0.5
        %v785 = vmul.f32 %v769, 0.70710677
        %v786 = vmul.f32 %v770, 0.70710677
        %v787 = vmul.f32 %v771, 0.70710677
        %v788 = vmul.f32 %v772, 0.70710677
        %v789 = vmul.f32 %v773, 0.70710677
        %v790 = vmul.f32 %v774, 0.70710677
        %v791 = vmul.f32 %v775, 0.70710677
        %v792 = vmul.f32 %v776, 0.70710677
        %v793 = vmax.f32 %v785, -4.0
        %v794 = vmax.f32 %v786, -4.0
        %v795 = vmax.f32 %v787, -4.0
        %v796 = vmax.f32 %v788, -4.0
        %v797 = vmax.f32 %v789, -4.0
        %v798 = vmax.f32 %v790, -4.0
        %v799 = vmax.f32 %v791, -4.0
        %v800 = vmax.f32 %v792, -4.0
        %v801 = vmin.f32 %v793, 4.0
        %v802 = vmin.f32 %v794, 4.0
        %v803 = vmin.f32 %v795, 4.0
        %v804 = vmin.f32 %v796, 4.0
        %v805 = vmin.f32 %v797, 4.0
        %v806 = vmin.f32 %v798, 4.0
        %v807 = vmin.f32 %v799, 4.0
        %v808 = vmin.f32 %v800, 4.0
        %v809 = vmul.f32 %v801, %v801
        %v810 = vmul.f32 %v802, %v802
        %v811 = vmul.f32 %v803, %v803
        %v812 = vmul.f32 %v804, %v804
        %v813 = vmul.f32 %v805, %v805
        %v814 = vmul.f32 %v806, %v806
        %v815 = vmul.f32 %v807, %v807
        %v816 = vmul.f32 %v808, %v808
        %v817 = vmul.f32 %v809, -2.7261424e-10
        %v818 = vmul.f32 %v810, -2.7261424e-10
        %v819 = vmul.f32 %v811, -2.7261424e-10
        %v820 = vmul.f32 %v812, -2.7261424e-10
        %v821 = vmul.f32 %v813, -2.7261424e-10
        %v822 = vmul.f32 %v814, -2.7261424e-10
        %v823 = vmul.f32 %v815, -2.7261424e-10
        %v824 = vmul.f32 %v816, -2.7261424e-10
        %v825 = vadd.f32 %v817, 2.7706815e-08
        %v826 = vadd.f32 %v818, 2.7706815e-08
        %v827 = vadd.f32 %v819, 2.7706815e-08
        %v828 = vadd.f32 %v820, 2.7706815e-08
        %v829 = vadd.f32 %v821, 2.7706815e-08
        %v830 = vadd.f32 %v822, 2.7706815e-08
        %v831 = vadd.f32 %v823, 2.7706815e-08
        %v832 = vadd.f32 %v824, 2.7706815e-08
        %v833 = vmul.f32 %v825, %v809
        %v834 = vmul.f32 %v826, %v810
        %v835 = vmul.f32 %v827, %v811
        %v836 = vmul.f32 %v828, %v812
        %v837 = vmul.f32 %v829, %v813
        %v838 = vmul.f32 %v830, %v814
        %v839 = vmul.f32 %v831, %v815
        %v840 = vmul.f32 %v832, %v816
        %v841 = vadd.f32 %v833, -2.101024e-06
        %v842 = vadd.f32 %v834, -2.101024e-06
        %v843 = vadd.f32 %v835, -2.101024e-06
        %v844 = vadd.f32 %v836, -2.101024e-06
        %v845 = vadd.f32 %v837, -2.101024e-06
        %v846 = vadd.f32 %v838, -2.101024e-06
        %v847 = vadd.f32 %v839, -2.101024e-06
        %v848 = vadd.f32 %v840, -2.101024e-06
        %v849 = vmul.f32 %v841, %v809
        %v850 = vmul.f32 %v842, %v810
        %v851 = vmul.f32 %v843, %v811
        %v852 = vmul.f32 %v844, %v812
        %v853 = vmul.f32 %v845, %v813
        %v854 = vmul.f32 %v846, %v814
        %v855 = vmul.f32 %v847, %v815
        %v856 = vmul.f32 %v848, %v816
        %v857 = vadd.f32 %v849, -5.6925062e-05
        %v858 = vadd.f32 %v850, -5.6925062e-05
        %v859 = vadd.f32 %v851, -5.6925062e-05
        %v860 = vadd.f32 %v852, -5.6925062e-05
        %v861 = vadd.f32 %v853, -5.6925062e-05
        %v862 = vadd.f32 %v854, -5.6925062e-05
        %v863 = vadd.f32 %v855, -5.6925062e-05
        %v864 = vadd.f32 %v856, -5.6925062e-05
        %v865 = vmul.f32 %v857, %v809
        %v866 = vmul.f32 %v858, %v810
        %v867 = vmul.f32 %v859, %v811
        %v868 = vmul.f32 %v860, %v812
        %v869 = vmul.f32 %v861, %v813
        %v870 = vmul.f32 %v862, %v814
        %v871 = vmul.f32 %v863, %v815
        %v872 = vmul.f32 %v864, %v816
        %v873 = vadd.f32 %v865, -0.00073499064
        %v874 = vadd.f32 %v866, -0.00073499064
        %v875 = vadd.f32 %v867, -0.00073499064
        %v876 = vadd.f32 %v868, -0.00073499064
        %v877 = vadd.f32 %v869, -0.00073499064
        %v878 = vadd.f32 %v870, -0.00073499064
        %v879 = vadd.f32 %v871, -0.00073499064
        %v880 = vadd.f32 %v872, -0.00073499064
        %v881 = vmul.f32 %v873, %v809
        %v882 = vmul.f32 %v874, %v810
        %v883 = vmul.f32 %v875, %v811
        %v884 = vmul.f32 %v876, %v812
        %v885 = vmul.f32 %v877, %v813
        %v886 = vmul.f32 %v878, %v814
        %v887 = vmul.f32 %v879, %v815
        %v888 = vmul.f32 %v880, %v816
        %v889 = vadd.f32 %v881, -0.0029546
        %v890 = vadd.f32 %v882, -0.0029546
        %v891 = vadd.f32 %v883, -0.0029546
        %v892 = vadd.f32 %v884, -0.0029546
        %v893 = vadd.f32 %v885, -0.0029546
        %v894 = vadd.f32 %v886, -0.0029546
        %v895 = vadd.f32 %v887, -0.0029546
        %v896 = vadd.f32 %v888, -0.0029546
        %v897 = vmul.f32 %v889, %v809
        %v898 = vmul.f32 %v890, %v810
        %v899 = vmul.f32 %v891, %v811
        %v900 = vmul.f32 %v892, %v812
        %v901 = vmul.f32 %v893, %v813
        %v902 = vmul.f32 %v894, %v814
        %v903 = vmul.f32 %v895, %v815
        %v904 = vmul.f32 %v896, %v816
        %v905 = vadd.f32 %v897, -0.016096033
        %v906 = vadd.f32 %v898, -0.016096033
        %v907 = vadd.f32 %v899, -0.016096033
        %v908 = vadd.f32 %v900, -0.016096033
        %v909 = vadd.f32 %v901, -0.016096033
        %v910 = vadd.f32 %v902, -0.016096033
        %v911 = vadd.f32 %v903, -0.016096033
        %v912 = vadd.f32 %v904, -0.016096033
        %v913 = vmul.f32 %v809, -1.45660715e-05
        %v914 = vmul.f32 %v810, -1.45660715e-05
        %v915 = vmul.f32 %v811, -1.45660715e-05
        %v916 = vmul.f32 %v812, -1.45660715e-05
        %v917 = vmul.f32 %v813, -1.45660715e-05
        %v918 = vmul.f32 %v814, -1.45660715e-05
        %v919 = vmul.f32 %v815, -1.45660715e-05
        %v920 = vmul.f32 %v816, -1.45660715e-05
        %v921 = vadd.f32 %v913, -0.00021337405
        %v922 = vadd.f32 %v914, -0.00021337405
        %v923 = vadd.f32 %v915, -0.00021337405
        %v924 = vadd.f32 %v916, -0.00021337405
        %v925 = vadd.f32 %v917, -0.00021337405
        %v926 = vadd.f32 %v918, -0.00021337405
        %v927 = vadd.f32 %v919, -0.00021337405
        %v928 = vadd.f32 %v920, -0.00021337405
        %v929 = vmul.f32 %v921, %v809
        %v930 = vmul.f32 %v922, %v810
        %v931 = vmul.f32 %v923, %v811
        %v932 = vmul.f32 %v924, %v812
        %v933 = vmul.f32 %v925, %v813
        %v934 = vmul.f32 %v926, %v814
        %v935 = vmul.f32 %v927, %v815
        %v936 = vmul.f32 %v928, %v816
        %v937 = vadd.f32 %v929, -0.001682827
        %v938 = vadd.f32 %v930, -0.001682827
        %v939 = vadd.f32 %v931, -0.001682827
        %v940 = vadd.f32 %v932, -0.001682827
        %v941 = vadd.f32 %v933, -0.001682827
        %v942 = vadd.f32 %v934, -0.001682827
        %v943 = vadd.f32 %v935, -0.001682827
        %v944 = vadd.f32 %v936, -0.001682827
        %v945 = vmul.f32 %v937, %v809
        %v946 = vmul.f32 %v938, %v810
        %v947 = vmul.f32 %v939, %v811
        %v948 = vmul.f32 %v940, %v812
        %v949 = vmul.f32 %v941, %v813
        %v950 = vmul.f32 %v942, %v814
        %v951 = vmul.f32 %v943, %v815
        %v952 = vmul.f32 %v944, %v816
        %v953 = vadd.f32 %v945, -0.0073733293
        %v954 = vadd.f32 %v946, -0.0073733293
        %v955 = vadd.f32 %v947, -0.0073733293
        %v956 = vadd.f32 %v948, -0.0073733293
        %v957 = vadd.f32 %v949, -0.0073733293
        %v958 = vadd.f32 %v950, -0.0073733293
        %v959 = vadd.f32 %v951, -0.0073733293
        %v960 = vadd.f32 %v952, -0.0073733293
        %v961 = vmul.f32 %v953, %v809
        %v962 = vmul.f32 %v954, %v810
        %v963 = vmul.f32 %v955, %v811
        %v964 = vmul.f32 %v956, %v812
        %v965 = vmul.f32 %v957, %v813
        %v966 = vmul.f32 %v958, %v814
        %v967 = vmul.f32 %v959, %v815
        %v968 = vmul.f32 %v960, %v816
        %v969 = vadd.f32 %v961, -0.014264739
        %v970 = vadd.f32 %v962, -0.014264739
        %v971 = vadd.f32 %v963, -0.014264739
        %v972 = vadd.f32 %v964, -0.014264739
        %v973 = vadd.f32 %v965, -0.014264739
        %v974 = vadd.f32 %v966, -0.014264739
        %v975 = vadd.f32 %v967, -0.014264739
        %v976 = vadd.f32 %v968, -0.014264739
        %v977 = vmul.f32 %v801, %v905
        %v978 = vmul.f32 %v802, %v906
        %v979 = vmul.f32 %v803, %v907
        %v980 = vmul.f32 %v804, %v908
        %v981 = vmul.f32 %v805, %v909
        %v982 = vmul.f32 %v806, %v910
        %v983 = vmul.f32 %v807, %v911
        %v984 = vmul.f32 %v808, %v912
        %v985 = vrcp.pop %v969
        %v986 = vrcp.pop %v970
        %v987 = vrcp.pop %v971
        %v988 = vrcp.pop %v972
        %v989 = vrcp.pop %v973
        %v990 = vrcp.pop %v974
        %v991 = vrcp.pop %v975
        %v992 = vrcp.pop %v976
        %v993 = vmul.f32 %v977, %v985
        %v994 = vmul.f32 %v978, %v986
        %v995 = vmul.f32 %v979, %v987
        %v996 = vmul.f32 %v980, %v988
        %v997 = vmul.f32 %v981, %v989
        %v998 = vmul.f32 %v982, %v990
        %v999 = vmul.f32 %v983, %v991
        %v1000 = vmul.f32 %v984, %v992
        %v1001 = vadd.f32 %v993, 1.0
        %v1002 = vadd.f32 %v994, 1.0
        %v1003 = vadd.f32 %v995, 1.0
        %v1004 = vadd.f32 %v996, 1.0
        %v1005 = vadd.f32 %v997, 1.0
        %v1006 = vadd.f32 %v998, 1.0
        %v1007 = vadd.f32 %v999, 1.0
        %v1008 = vadd.f32 %v1000, 1.0
        %v1009 = vmul.f32 %v777, %v1001
        %v1010 = vmul.f32 %v778, %v1002
        %v1011 = vmul.f32 %v779, %v1003
        %v1012 = vmul.f32 %v780, %v1004
        %v1013 = vmul.f32 %v781, %v1005
        %v1014 = vmul.f32 %v782, %v1006
        %v1015 = vmul.f32 %v783, %v1007
        %v1016 = vmul.f32 %v784, %v1008
        %1019 = vrot.lane.b32.xlu0 %v570, 127
        %v1020 = vpop.permute.xlu0 %1019
        %1021 = vrot.lane.b32.xlu0 %v571, 127
        %v1022 = vpop.permute.xlu0 %1021
        %v1023 = vsel %vm659, %v1020, %v1022
        %v1026 = vmul.f32 %v1009, %v1023
        %v1027 = vmul.f32 %v1010, %v1022
        %v1028 = vmul.f32 %v1011, %v1023
        %v1029 = vmul.f32 %v1012, %v1022
        %v1030 = vmul.f32 %v1013, %v1023
        %v1031 = vmul.f32 %v1014, %v1022
        %v1032 = vmul.f32 %v1015, %v1023
        %v1033 = vmul.f32 %v1016, %v1022
        %v1034 = vpack.c.bf16 %v1028, %v1026
        %v1035 = vpack.c.bf16 %v1029, %v1027
        %v1036 = vpack.c.bf16 %v1032, %v1030
        %v1037 = vpack.c.bf16 %v1033, %v1031
        %v1046 = vunpack.c.l.b16 %v426
        %v1047 = vunpack.c.l.b16 %v427
        %v1048 = vunpack.c.l.b16 %v428
        %v1049 = vunpack.c.l.b16 %v429
        %v1050 = vunpack.c.l.b16 %v430
        %v1051 = vunpack.c.l.b16 %v431
        %v1052 = vunpack.c.l.b16 %v432
        %v1053 = vunpack.c.l.b16 %v433
        %v1054 = vpack.c.b16 %v1047, %v1046
        %v1055 = vpack.c.b16 %v1049, %v1048
        %v1056 = vpack.c.b16 %v1051, %v1050
        %v1057 = vpack.c.b16 %v1053, %v1052
        %1062 = vrot.lane.b32.xlu0 %v1034, 127
        %v1063 = vpop.permute.xlu0 %1062
        %1064 = vrot.lane.b32.xlu0 %v1035, 127
        %v1065 = vpop.permute.xlu0 %1064
        %1066 = vrot.lane.b32.xlu0 %v1036, 127
        %v1067 = vpop.permute.xlu0 %1066
        %1068 = vrot.lane.b32.xlu0 %v1037, 127
        %v1069 = vpop.permute.xlu0 %1068
        %vm1070 = vcmask 1039360
        %v1071 = vsel %vm1070, %v1063, %v1065
        %v1072 = vsel %vm1070, %v1067, %v1069
        %vm1077 = vcmask 261120
        %v1079 = vsel %vm1077, %v1054, 0
        %v1082 = vsel %vm1077, %v1055, 0
        %v1085 = vsel %vm1077, %v1056, 0
        %v1088 = vsel %vm1077, %v1057, 0
        %1090 = vmatprep.subr.bf16.mxu0 0
        %1091 = vmatpush1.bf16.msra.mxu0 0
        %1092 = vmatprep.subr.bf16.mxu0 0
        %1093 = vmatpush1.bf16.msra.mxu0 0
        %1094 = vmatprep.subr.bf16.mxu0 0
        %1095 = vmatpush1.bf16.msra.mxu0 0
        %1096 = vmatprep.subr.bf16.mxu0 0
        %1097 = vmatpush1.bf16.msra.mxu0 0
        %1098 = vmatprep.subr.bf16.mxu0 0
        %1099 = vmatpush1.bf16.msra.mxu0 0
        %1100 = vmatprep.subr.bf16.mxu0 0
        %1101 = vmatpush1.bf16.msra.mxu0 0
        %1102 = vmatprep.subr.bf16.mxu0 %v1069
        %1103 = vmatpush1.bf16.msra.mxu0 %v1072
        %1104 = vmatprep.subr.bf16.mxu0 %v1065
        %1105 = vmatpush1.bf16.msra.mxu0 %v1071
        %1106 = vmatprep.subr.bf16.mxu0 0
        %1107 = vmatpush2.bf16.msra.mxu0 0
        %1108 = vmatprep.subr.bf16.mxu0 0
        %1109 = vmatpush2.bf16.msra.mxu0 0
        %1110 = vmatprep.subr.bf16.mxu0 0
        %1111 = vmatpush2.bf16.msra.mxu0 0
        %1112 = vmatprep.subr.bf16.mxu0 0
        %1113 = vmatpush2.bf16.msra.mxu0 0
        %1114 = vmatprep.subr.bf16.mxu0 0
        %1115 = vmatpush2.bf16.msra.mxu0 0
        %1116 = vmatprep.subr.bf16.mxu0 0
        %1117 = vmatpush2.bf16.msra.mxu0 0
        %1118 = vmatprep.subr.bf16.mxu0 0
        %1119 = vmatpush2.bf16.msra.mxu0 0
        %1120 = vmatprep.subr.bf16.mxu0 0
        %1121 = vmatpush2.bf16.msra.mxu0 0
        %1122 = vmatprep.mubr.bf16.mxu0 0
        %1123 = vmatmul.mubr.bf16.gmra.mxu0 %v1079
        %v1124 = vpop.f32.mrf.mxu0
        %v1125 = vadd.f32 0.0, %v1124
        %v1126 = vpop.f32.mrf.mxu0
        %v1127 = vadd.f32 0.0, %v1126
        %v1128 = vpop.f32.mrf.mxu0
        %v1129 = vadd.f32 0.0, %v1128
        %v1130 = vpop.f32.mrf.mxu0
        %v1131 = vadd.f32 0.0, %v1130
        %1132 = vmatprep.mubr.bf16.mxu0 0
        %1133 = vmatmul.mubr.bf16.gmra.mxu0 %v1082
        %v1134 = vpop.f32.mrf.mxu0
        %v1135 = vadd.f32 0.0, %v1134
        %v1136 = vpop.f32.mrf.mxu0
        %v1137 = vadd.f32 0.0, %v1136
        %v1138 = vpop.f32.mrf.mxu0
        %v1139 = vadd.f32 0.0, %v1138
        %v1140 = vpop.f32.mrf.mxu0
        %v1141 = vadd.f32 0.0, %v1140
        %1142 = vmatprep.mubr.bf16.mxu0 0
        %1143 = vmatmul.mubr.bf16.gmra.mxu0 %v1085
        %v1144 = vpop.f32.mrf.mxu0
        %v1145 = vadd.f32 0.0, %v1144
        %v1146 = vpop.f32.mrf.mxu0
        %v1147 = vadd.f32 0.0, %v1146
        %v1148 = vpop.f32.mrf.mxu0
        %v1149 = vadd.f32 0.0, %v1148
        %v1150 = vpop.f32.mrf.mxu0
        %v1151 = vadd.f32 0.0, %v1150
        %1152 = vmatprep.mubr.bf16.mxu0 0
        %1153 = vmatmul.mubr.bf16.gmra.mxu0 %v1088
        %v1154 = vpop.f32.mrf.mxu0
        %v1155 = vadd.f32 0.0, %v1154
        %v1156 = vpop.f32.mrf.mxu0
        %v1157 = vadd.f32 0.0, %v1156
        %v1158 = vpop.f32.mrf.mxu0
        %v1159 = vadd.f32 0.0, %v1158
        %v1160 = vpop.f32.mrf.mxu0
        %v1161 = vadd.f32 0.0, %v1160
        %1162 = vdwg.mxu0
        %v1171 = vunpack.c.l.b16 %v418
        %v1172 = vunpack.c.l.b16 %v419
        %v1173 = vunpack.c.l.b16 %v420
        %v1174 = vunpack.c.l.b16 %v421
        %v1175 = vunpack.c.l.b16 %v422
        %v1176 = vunpack.c.l.b16 %v423
        %v1177 = vunpack.c.l.b16 %v424
        %v1178 = vunpack.c.l.b16 %v425
        %v1179 = vpack.c.b16 %v1172, %v1171
        %v1180 = vpack.c.b16 %v1174, %v1173
        %v1181 = vpack.c.b16 %v1176, %v1175
        %v1182 = vpack.c.b16 %v1178, %v1177
        %v1184 = vsel %vm1077, %v1179, 0
        %v1187 = vsel %vm1077, %v1180, 0
        %v1190 = vsel %vm1077, %v1181, 0
        %v1193 = vsel %vm1077, %v1182, 0
        %1195 = vmatprep.subr.bf16.mxu0 0
        %1196 = vmatpush1.bf16.msra.mxu0 0
        %1197 = vmatprep.subr.bf16.mxu0 0
        %1198 = vmatpush1.bf16.msra.mxu0 0
        %1199 = vmatprep.subr.bf16.mxu0 0
        %1200 = vmatpush1.bf16.msra.mxu0 0
        %1201 = vmatprep.subr.bf16.mxu0 0
        %1202 = vmatpush1.bf16.msra.mxu0 0
        %1203 = vmatprep.subr.bf16.mxu0 0
        %1204 = vmatpush1.bf16.msra.mxu0 0
        %1205 = vmatprep.subr.bf16.mxu0 0
        %1206 = vmatpush1.bf16.msra.mxu0 0
        %1207 = vmatprep.subr.bf16.mxu0 %v1037
        %1208 = vmatpush1.bf16.msra.mxu0 %v1036
        %1209 = vmatprep.subr.bf16.mxu0 %v1035
        %1210 = vmatpush1.bf16.msra.mxu0 %v1034
        %1211 = vmatprep.subr.bf16.mxu0 0
        %1212 = vmatpush2.bf16.msra.mxu0 0
        %1213 = vmatprep.subr.bf16.mxu0 0
        %1214 = vmatpush2.bf16.msra.mxu0 0
        %1215 = vmatprep.subr.bf16.mxu0 0
        %1216 = vmatpush2.bf16.msra.mxu0 0
        %1217 = vmatprep.subr.bf16.mxu0 0
        %1218 = vmatpush2.bf16.msra.mxu0 0
        %1219 = vmatprep.subr.bf16.mxu0 0
        %1220 = vmatpush2.bf16.msra.mxu0 0
        %1221 = vmatprep.subr.bf16.mxu0 0
        %1222 = vmatpush2.bf16.msra.mxu0 0
        %1223 = vmatprep.subr.bf16.mxu0 0
        %1224 = vmatpush2.bf16.msra.mxu0 0
        %1225 = vmatprep.subr.bf16.mxu0 0
        %1226 = vmatpush2.bf16.msra.mxu0 0
        %1227 = vmatprep.mubr.bf16.mxu0 0
        %1228 = vmatmul.mubr.bf16.gmra.mxu0 %v1184
        %v1229 = vpop.f32.mrf.mxu0
        %v1230 = vadd.f32 %v1125, %v1229
        %v1231 = vpop.f32.mrf.mxu0
        %v1232 = vadd.f32 %v1127, %v1231
        %v1233 = vpop.f32.mrf.mxu0
        %v1234 = vadd.f32 %v1129, %v1233
        %v1235 = vpop.f32.mrf.mxu0
        %v1236 = vadd.f32 %v1131, %v1235
        %1237 = vmatprep.mubr.bf16.mxu0 0
        %1238 = vmatmul.mubr.bf16.gmra.mxu0 %v1187
        %v1239 = vpop.f32.mrf.mxu0
        %v1240 = vadd.f32 %v1135, %v1239
        %v1241 = vpop.f32.mrf.mxu0
        %v1242 = vadd.f32 %v1137, %v1241
        %v1243 = vpop.f32.mrf.mxu0
        %v1244 = vadd.f32 %v1139, %v1243
        %v1245 = vpop.f32.mrf.mxu0
        %v1246 = vadd.f32 %v1141, %v1245
        %1247 = vmatprep.mubr.bf16.mxu0 0
        %1248 = vmatmul.mubr.bf16.gmra.mxu0 %v1190
        %v1249 = vpop.f32.mrf.mxu0
        %v1250 = vadd.f32 %v1145, %v1249
        %v1251 = vpop.f32.mrf.mxu0
        %v1252 = vadd.f32 %v1147, %v1251
        %v1253 = vpop.f32.mrf.mxu0
        %v1254 = vadd.f32 %v1149, %v1253
        %v1255 = vpop.f32.mrf.mxu0
        %v1256 = vadd.f32 %v1151, %v1255
        %1257 = vmatprep.mubr.bf16.mxu0 0
        %1258 = vmatmul.mubr.bf16.gmra.mxu0 %v1193
        %v1259 = vpop.f32.mrf.mxu0
        %v1260 = vadd.f32 %v1155, %v1259
        %v1261 = vpop.f32.mrf.mxu0
        %v1262 = vadd.f32 %v1157, %v1261
        %v1263 = vpop.f32.mrf.mxu0
        %v1264 = vadd.f32 %v1159, %v1263
        %v1265 = vpop.f32.mrf.mxu0
        %v1266 = vadd.f32 %v1161, %v1265
        %1267 = vdwg.mxu0
        %v1276 = vunpack.c.l.b16 %v434
        %v1277 = vunpack.c.l.b16 %v435
        %v1278 = vunpack.c.l.b16 %v436
        %v1279 = vunpack.c.l.b16 %v437
        %v1280 = vunpack.c.l.b16 %v438
        %v1281 = vunpack.c.l.b16 %v439
        %v1282 = vunpack.c.l.b16 %v440
        %v1283 = vunpack.c.l.b16 %v441
        %v1284 = vpack.c.b16 %v1277, %v1276
        %v1285 = vpack.c.b16 %v1279, %v1278
        %v1286 = vpack.c.b16 %v1281, %v1280
        %v1287 = vpack.c.b16 %v1283, %v1282
        %1288 = vrot.lane.b32.xlu0 %v1034, 126
        %v1289 = vpop.permute.xlu0 %1288
        %1290 = vrot.lane.b32.xlu0 %v1035, 126
        %v1291 = vpop.permute.xlu0 %1290
        %1292 = vrot.lane.b32.xlu0 %v1036, 126
        %v1293 = vpop.permute.xlu0 %1292
        %1294 = vrot.lane.b32.xlu0 %v1037, 126
        %v1295 = vpop.permute.xlu0 %1294
        %vm1296 = vcmask 1031168
        %v1297 = vsel %vm1296, %v1289, %v1291
        %v1298 = vsel %vm1296, %v1293, %v1295
        %v1304 = vsel %vm1077, %v1284, 0
        %v1307 = vsel %vm1077, %v1285, 0
        %v1310 = vsel %vm1077, %v1286, 0
        %v1313 = vsel %vm1077, %v1287, 0
        %1315 = vmatprep.subr.bf16.mxu0 0
        %1316 = vmatpush1.bf16.msra.mxu0 0
        %1317 = vmatprep.subr.bf16.mxu0 0
        %1318 = vmatpush1.bf16.msra.mxu0 0
        %1319 = vmatprep.subr.bf16.mxu0 0
        %1320 = vmatpush1.bf16.msra.mxu0 0
        %1321 = vmatprep.subr.bf16.mxu0 0
        %1322 = vmatpush1.bf16.msra.mxu0 0
        %1323 = vmatprep.subr.bf16.mxu0 0
        %1324 = vmatpush1.bf16.msra.mxu0 0
        %1325 = vmatprep.subr.bf16.mxu0 0
        %1326 = vmatpush1.bf16.msra.mxu0 0
        %1327 = vmatprep.subr.bf16.mxu0 %v1295
        %1328 = vmatpush1.bf16.msra.mxu0 %v1298
        %1329 = vmatprep.subr.bf16.mxu0 %v1291
        %1330 = vmatpush1.bf16.msra.mxu0 %v1297
        %1331 = vmatprep.subr.bf16.mxu0 0
        %1332 = vmatpush2.bf16.msra.mxu0 0
        %1333 = vmatprep.subr.bf16.mxu0 0
        %1334 = vmatpush2.bf16.msra.mxu0 0
        %1335 = vmatprep.subr.bf16.mxu0 0
        %1336 = vmatpush2.bf16.msra.mxu0 0
        %1337 = vmatprep.subr.bf16.mxu0 0
        %1338 = vmatpush2.bf16.msra.mxu0 0
        %1339 = vmatprep.subr.bf16.mxu0 0
        %1340 = vmatpush2.bf16.msra.mxu0 0
        %1341 = vmatprep.subr.bf16.mxu0 0
        %1342 = vmatpush2.bf16.msra.mxu0 0
        %1343 = vmatprep.subr.bf16.mxu0 0
        %1344 = vmatpush2.bf16.msra.mxu0 0
        %1345 = vmatprep.subr.bf16.mxu0 0
        %1346 = vmatpush2.bf16.msra.mxu0 0
        %1347 = vmatprep.mubr.bf16.mxu0 0
        %1348 = vmatmul.mubr.bf16.gmra.mxu0 %v1304
        %v1349 = vpop.f32.mrf.mxu0
        %v1350 = vadd.f32 0.0, %v1349
        %v1351 = vpop.f32.mrf.mxu0
        %v1352 = vadd.f32 0.0, %v1351
        %v1353 = vpop.f32.mrf.mxu0
        %v1354 = vadd.f32 0.0, %v1353
        %v1355 = vpop.f32.mrf.mxu0
        %v1356 = vadd.f32 0.0, %v1355
        %1357 = vmatprep.mubr.bf16.mxu0 0
        %1358 = vmatmul.mubr.bf16.gmra.mxu0 %v1307
        %v1359 = vpop.f32.mrf.mxu0
        %v1360 = vadd.f32 0.0, %v1359
        %v1361 = vpop.f32.mrf.mxu0
        %v1362 = vadd.f32 0.0, %v1361
        %v1363 = vpop.f32.mrf.mxu0
        %v1364 = vadd.f32 0.0, %v1363
        %v1365 = vpop.f32.mrf.mxu0
        %v1366 = vadd.f32 0.0, %v1365
        %1367 = vmatprep.mubr.bf16.mxu0 0
        %1368 = vmatmul.mubr.bf16.gmra.mxu0 %v1310
        %v1369 = vpop.f32.mrf.mxu0
        %v1370 = vadd.f32 0.0, %v1369
        %v1371 = vpop.f32.mrf.mxu0
        %v1372 = vadd.f32 0.0, %v1371
        %v1373 = vpop.f32.mrf.mxu0
        %v1374 = vadd.f32 0.0, %v1373
        %v1375 = vpop.f32.mrf.mxu0
        %v1376 = vadd.f32 0.0, %v1375
        %1377 = vmatprep.mubr.bf16.mxu0 0
        %1378 = vmatmul.mubr.bf16.gmra.mxu0 %v1313
        %v1379 = vpop.f32.mrf.mxu0
        %v1380 = vadd.f32 0.0, %v1379
        %v1381 = vpop.f32.mrf.mxu0
        %v1382 = vadd.f32 0.0, %v1381
        %v1383 = vpop.f32.mrf.mxu0
        %v1384 = vadd.f32 0.0, %v1383
        %v1385 = vpop.f32.mrf.mxu0
        %v1386 = vadd.f32 0.0, %v1385
        %1387 = vdwg.mxu0
        %v1388 = vadd.f32 %v1230, %v1350
        %v1389 = vadd.f32 %v1232, %v1352
        %v1390 = vadd.f32 %v1234, %v1354
        %v1391 = vadd.f32 %v1236, %v1356
        %v1392 = vadd.f32 %v1240, %v1360
        %v1393 = vadd.f32 %v1242, %v1362
        %v1394 = vadd.f32 %v1244, %v1364
        %v1395 = vadd.f32 %v1246, %v1366
        %v1396 = vadd.f32 %v1250, %v1370
        %v1397 = vadd.f32 %v1252, %v1372
        %v1398 = vadd.f32 %v1254, %v1374
        %v1399 = vadd.f32 %v1256, %v1376
        %v1400 = vadd.f32 %v1260, %v1380
        %v1401 = vadd.f32 %v1262, %v1382
        %v1402 = vadd.f32 %v1264, %v1384
        %v1403 = vadd.f32 %v1266, %v1386
        %1405 = vset.pattern.permute.xlu0 0
        %1406 = vperm.xlu0 %1405, %v442
        %v1407 = vpop.permute.xlu0 %1406
        %1410 = vset.pattern.permute.xlu0 0
        %1411 = vperm.xlu0 %1410, %v443
        %v1412 = vpop.permute.xlu0 %1411
        %1415 = vset.pattern.permute.xlu0 0
        %1416 = vperm.xlu0 %1415, %v444
        %v1417 = vpop.permute.xlu0 %1416
        %1420 = vset.pattern.permute.xlu0 0
        %1421 = vperm.xlu0 %1420, %v445
        %v1422 = vpop.permute.xlu0 %1421
        %1425 = vset.pattern.permute.xlu0 0
        %1426 = vperm.xlu0 %1425, %v446
        %v1427 = vpop.permute.xlu0 %1426
        %1430 = vset.pattern.permute.xlu0 0
        %1431 = vperm.xlu0 %1430, %v447
        %v1432 = vpop.permute.xlu0 %1431
        %1435 = vset.pattern.permute.xlu0 0
        %1436 = vperm.xlu0 %1435, %v448
        %v1437 = vpop.permute.xlu0 %1436
        %1440 = vset.pattern.permute.xlu0 0
        %1441 = vperm.xlu0 %1440, %v449
        %v1442 = vpop.permute.xlu0 %1441
        %v1444 = vadd.f32 %v1388, %v1407
        %v1445 = vadd.f32 %v1389, %v1407
        %v1446 = vadd.f32 %v1390, %v1412
        %v1447 = vadd.f32 %v1391, %v1412
        %v1448 = vadd.f32 %v1392, %v1417
        %v1449 = vadd.f32 %v1393, %v1417
        %v1450 = vadd.f32 %v1394, %v1422
        %v1451 = vadd.f32 %v1395, %v1422
        %v1452 = vadd.f32 %v1396, %v1427
        %v1453 = vadd.f32 %v1397, %v1427
        %v1454 = vadd.f32 %v1398, %v1432
        %v1455 = vadd.f32 %v1399, %v1432
        %v1456 = vadd.f32 %v1400, %v1437
        %v1457 = vadd.f32 %v1401, %v1437
        %v1458 = vadd.f32 %v1402, %v1442
        %v1459 = vadd.f32 %v1403, %v1442
        %v1460 = vsub.f32 0.0, %v1444
        %v1461 = vsub.f32 0.0, %v1445
        %v1462 = vsub.f32 0.0, %v1446
        %v1463 = vsub.f32 0.0, %v1447
        %v1464 = vsub.f32 0.0, %v1448
        %v1465 = vsub.f32 0.0, %v1449
        %v1466 = vsub.f32 0.0, %v1450
        %v1467 = vsub.f32 0.0, %v1451
        %v1468 = vsub.f32 0.0, %v1452
        %v1469 = vsub.f32 0.0, %v1453
        %v1470 = vsub.f32 0.0, %v1454
        %v1471 = vsub.f32 0.0, %v1455
        %v1472 = vsub.f32 0.0, %v1456
        %v1473 = vsub.f32 0.0, %v1457
        %v1474 = vsub.f32 0.0, %v1458
        %v1475 = vsub.f32 0.0, %v1459
        %v1476 = vmul.f32 %v1460, 1.442695
        %v1477 = vpow.pop %v1476
        %v1478 = vmul.f32 %v1461, 1.442695
        %v1479 = vpow.pop %v1478
        %v1480 = vmul.f32 %v1462, 1.442695
        %v1481 = vpow.pop %v1480
        %v1482 = vmul.f32 %v1463, 1.442695
        %v1483 = vpow.pop %v1482
        %v1484 = vmul.f32 %v1464, 1.442695
        %v1485 = vpow.pop %v1484
        %v1486 = vmul.f32 %v1465, 1.442695
        %v1487 = vpow.pop %v1486
        %v1488 = vmul.f32 %v1466, 1.442695
        %v1489 = vpow.pop %v1488
        %v1490 = vmul.f32 %v1467, 1.442695
        %v1491 = vpow.pop %v1490
        %v1492 = vmul.f32 %v1468, 1.442695
        %v1493 = vpow.pop %v1492
        %v1494 = vmul.f32 %v1469, 1.442695
        %v1495 = vpow.pop %v1494
        %v1496 = vmul.f32 %v1470, 1.442695
        %v1497 = vpow.pop %v1496
        %v1498 = vmul.f32 %v1471, 1.442695
        %v1499 = vpow.pop %v1498
        %v1500 = vmul.f32 %v1472, 1.442695
        %v1501 = vpow.pop %v1500
        %v1502 = vmul.f32 %v1473, 1.442695
        %v1503 = vpow.pop %v1502
        %v1504 = vmul.f32 %v1474, 1.442695
        %v1505 = vpow.pop %v1504
        %v1506 = vmul.f32 %v1475, 1.442695
        %v1507 = vpow.pop %v1506
        %v1508 = vadd.f32 %v1477, 1.0
        %v1509 = vadd.f32 %v1479, 1.0
        %v1510 = vadd.f32 %v1481, 1.0
        %v1511 = vadd.f32 %v1483, 1.0
        %v1512 = vadd.f32 %v1485, 1.0
        %v1513 = vadd.f32 %v1487, 1.0
        %v1514 = vadd.f32 %v1489, 1.0
        %v1515 = vadd.f32 %v1491, 1.0
        %v1516 = vadd.f32 %v1493, 1.0
        %v1517 = vadd.f32 %v1495, 1.0
        %v1518 = vadd.f32 %v1497, 1.0
        %v1519 = vadd.f32 %v1499, 1.0
        %v1520 = vadd.f32 %v1501, 1.0
        %v1521 = vadd.f32 %v1503, 1.0
        %v1522 = vadd.f32 %v1505, 1.0
        %v1523 = vadd.f32 %v1507, 1.0
        %v1524 = vrcp.pop %v1508
        %v1525 = vrcp.pop %v1509
        %v1526 = vrcp.pop %v1510
        %v1527 = vrcp.pop %v1511
        %v1528 = vrcp.pop %v1512
        %v1529 = vrcp.pop %v1513
        %v1530 = vrcp.pop %v1514
        %v1531 = vrcp.pop %v1515
        %v1532 = vrcp.pop %v1516
        %v1533 = vrcp.pop %v1517
        %v1534 = vrcp.pop %v1518
        %v1535 = vrcp.pop %v1519
        %v1536 = vrcp.pop %v1520
        %v1537 = vrcp.pop %v1521
        %v1538 = vrcp.pop %v1522
        %v1539 = vrcp.pop %v1523
        %v1540 = vmul.f32 %v1444, %v1524
        %v1541 = vmul.f32 %v1445, %v1525
        %v1542 = vmul.f32 %v1446, %v1526
        %v1543 = vmul.f32 %v1447, %v1527
        %v1544 = vmul.f32 %v1448, %v1528
        %v1545 = vmul.f32 %v1449, %v1529
        %v1546 = vmul.f32 %v1450, %v1530
        %v1547 = vmul.f32 %v1451, %v1531
        %v1548 = vmul.f32 %v1452, %v1532
        %v1549 = vmul.f32 %v1453, %v1533
        %v1550 = vmul.f32 %v1454, %v1534
        %v1551 = vmul.f32 %v1455, %v1535
        %v1552 = vmul.f32 %v1456, %v1536
        %v1553 = vmul.f32 %v1457, %v1537
        %v1554 = vmul.f32 %v1458, %v1538
        %v1555 = vmul.f32 %v1459, %v1539
        %1556 = vrot.lane.b32.xlu0 %v570, 126
        %v1557 = vpop.permute.xlu0 %1556
        %1558 = vrot.lane.b32.xlu0 %v571, 126
        %v1559 = vpop.permute.xlu0 %1558
        %v1560 = vsel %vm728, %v1557, %v1559
        %v1563 = vmul.f32 %v1540, %v1560
        %v1564 = vmul.f32 %v1541, %v1559
        %v1565 = vmul.f32 %v1542, %v1560
        %v1566 = vmul.f32 %v1543, %v1559
        %v1567 = vmul.f32 %v1544, %v1560
        %v1568 = vmul.f32 %v1545, %v1559
        %v1569 = vmul.f32 %v1546, %v1560
        %v1570 = vmul.f32 %v1547, %v1559
        %v1571 = vmul.f32 %v1548, %v1560
        %v1572 = vmul.f32 %v1549, %v1559
        %v1573 = vmul.f32 %v1550, %v1560
        %v1574 = vmul.f32 %v1551, %v1559
        %v1575 = vmul.f32 %v1552, %v1560
        %v1576 = vmul.f32 %v1553, %v1559
        %v1577 = vmul.f32 %v1554, %v1560
        %v1578 = vmul.f32 %v1555, %v1559
        %v1579 = vpack.c.bf16 %v1565, %v1563
        %v1580 = vpack.c.bf16 %v1566, %v1564
        %v1581 = vpack.c.bf16 %v1569, %v1567
        %v1582 = vpack.c.bf16 %v1570, %v1568
        %v1583 = vpack.c.bf16 %v1573, %v1571
        %v1584 = vpack.c.bf16 %v1574, %v1572
        %v1585 = vpack.c.bf16 %v1577, %v1575
        %v1586 = vpack.c.bf16 %v1578, %v1576
        %v1595 = vunpack.c.l.b16 %v458
        %v1596 = vunpack.c.l.b16 %v459
        %v1597 = vunpack.c.l.b16 %v460
        %v1598 = vunpack.c.l.b16 %v461
        %v1599 = vunpack.c.l.b16 %v462
        %v1600 = vunpack.c.l.b16 %v463
        %v1601 = vunpack.c.l.b16 %v464
        %v1602 = vunpack.c.l.b16 %v465
        %v1603 = vpack.c.b16 %v1596, %v1595
        %v1604 = vpack.c.b16 %v1598, %v1597
        %v1605 = vpack.c.b16 %v1600, %v1599
        %v1606 = vpack.c.b16 %v1602, %v1601
        %1615 = vrot.lane.b32.xlu0 %v1579, 126
        %v1616 = vpop.permute.xlu0 %1615
        %1617 = vrot.lane.b32.xlu0 %v1580, 126
        %v1618 = vpop.permute.xlu0 %1617
        %1619 = vrot.lane.b32.xlu0 %v1581, 126
        %v1620 = vpop.permute.xlu0 %1619
        %1621 = vrot.lane.b32.xlu0 %v1582, 126
        %v1622 = vpop.permute.xlu0 %1621
        %1623 = vrot.lane.b32.xlu0 %v1583, 126
        %v1624 = vpop.permute.xlu0 %1623
        %1625 = vrot.lane.b32.xlu0 %v1584, 126
        %v1626 = vpop.permute.xlu0 %1625
        %1627 = vrot.lane.b32.xlu0 %v1585, 126
        %v1628 = vpop.permute.xlu0 %1627
        %1629 = vrot.lane.b32.xlu0 %v1586, 126
        %v1630 = vpop.permute.xlu0 %1629
        %v1631 = vsel %vm1296, %v1616, %v1618
        %v1632 = vsel %vm1296, %v1620, %v1622
        %v1633 = vsel %vm1296, %v1624, %v1626
        %v1634 = vsel %vm1296, %v1628, %v1630
        %vm1643 = vcmask 523264
        %v1645 = vsel %vm1643, %v1603, 0
        %v1648 = vsel %vm1643, %v1604, 0
        %v1651 = vsel %vm1643, %v1605, 0
        %v1654 = vsel %vm1643, %v1606, 0
        %1656 = vmatprep.subr.bf16.mxu0 0
        %1657 = vmatpush1.bf16.msra.mxu0 0
        %1658 = vmatprep.subr.bf16.mxu0 0
        %1659 = vmatpush1.bf16.msra.mxu0 0
        %1660 = vmatprep.subr.bf16.mxu0 0
        %1661 = vmatpush1.bf16.msra.mxu0 0
        %1662 = vmatprep.subr.bf16.mxu0 0
        %1663 = vmatpush1.bf16.msra.mxu0 0
        %1664 = vmatprep.subr.bf16.mxu0 %v1630
        %1665 = vmatpush1.bf16.msra.mxu0 %v1634
        %1666 = vmatprep.subr.bf16.mxu0 %v1626
        %1667 = vmatpush1.bf16.msra.mxu0 %v1633
        %1668 = vmatprep.subr.bf16.mxu0 %v1622
        %1669 = vmatpush1.bf16.msra.mxu0 %v1632
        %1670 = vmatprep.subr.bf16.mxu0 %v1618
        %1671 = vmatpush1.bf16.msra.mxu0 %v1631
        %1672 = vmatprep.subr.bf16.mxu0 0
        %1673 = vmatpush2.bf16.msra.mxu0 0
        %1674 = vmatprep.subr.bf16.mxu0 0
        %1675 = vmatpush2.bf16.msra.mxu0 0
        %1676 = vmatprep.subr.bf16.mxu0 0
        %1677 = vmatpush2.bf16.msra.mxu0 0
        %1678 = vmatprep.subr.bf16.mxu0 0
        %1679 = vmatpush2.bf16.msra.mxu0 0
        %1680 = vmatprep.subr.bf16.mxu0 0
        %1681 = vmatpush2.bf16.msra.mxu0 0
        %1682 = vmatprep.subr.bf16.mxu0 0
        %1683 = vmatpush2.bf16.msra.mxu0 0
        %1684 = vmatprep.subr.bf16.mxu0 0
        %1685 = vmatpush2.bf16.msra.mxu0 0
        %1686 = vmatprep.subr.bf16.mxu0 0
        %1687 = vmatpush2.bf16.msra.mxu0 0
        %1688 = vmatprep.mubr.bf16.mxu0 0
        %1689 = vmatmul.mubr.bf16.gmra.mxu0 %v1645
        %v1690 = vpop.f32.mrf.mxu0
        %v1691 = vadd.f32 0.0, %v1690
        %v1692 = vpop.f32.mrf.mxu0
        %v1693 = vadd.f32 0.0, %v1692
        %v1694 = vpop.f32.mrf.mxu0
        %v1695 = vadd.f32 0.0, %v1694
        %v1696 = vpop.f32.mrf.mxu0
        %v1697 = vadd.f32 0.0, %v1696
        %1698 = vmatprep.mubr.bf16.mxu0 0
        %1699 = vmatmul.mubr.bf16.gmra.mxu0 %v1648
        %v1700 = vpop.f32.mrf.mxu0
        %v1701 = vadd.f32 0.0, %v1700
        %v1702 = vpop.f32.mrf.mxu0
        %v1703 = vadd.f32 0.0, %v1702
        %v1704 = vpop.f32.mrf.mxu0
        %v1705 = vadd.f32 0.0, %v1704
        %v1706 = vpop.f32.mrf.mxu0
        %v1707 = vadd.f32 0.0, %v1706
        %1708 = vmatprep.mubr.bf16.mxu0 0
        %1709 = vmatmul.mubr.bf16.gmra.mxu0 %v1651
        %v1710 = vpop.f32.mrf.mxu0
        %v1711 = vadd.f32 0.0, %v1710
        %v1712 = vpop.f32.mrf.mxu0
        %v1713 = vadd.f32 0.0, %v1712
        %v1714 = vpop.f32.mrf.mxu0
        %v1715 = vadd.f32 0.0, %v1714
        %v1716 = vpop.f32.mrf.mxu0
        %v1717 = vadd.f32 0.0, %v1716
        %1718 = vmatprep.mubr.bf16.mxu0 0
        %1719 = vmatmul.mubr.bf16.gmra.mxu0 %v1654
        %v1720 = vpop.f32.mrf.mxu0
        %v1721 = vadd.f32 0.0, %v1720
        %v1722 = vpop.f32.mrf.mxu0
        %v1723 = vadd.f32 0.0, %v1722
        %v1724 = vpop.f32.mrf.mxu0
        %v1725 = vadd.f32 0.0, %v1724
        %v1726 = vpop.f32.mrf.mxu0
        %v1727 = vadd.f32 0.0, %v1726
        %1728 = vdwg.mxu0
        %v1737 = vunpack.c.l.b16 %v450
        %v1738 = vunpack.c.l.b16 %v451
        %v1739 = vunpack.c.l.b16 %v452
        %v1740 = vunpack.c.l.b16 %v453
        %v1741 = vunpack.c.l.b16 %v454
        %v1742 = vunpack.c.l.b16 %v455
        %v1743 = vunpack.c.l.b16 %v456
        %v1744 = vunpack.c.l.b16 %v457
        %v1745 = vpack.c.b16 %v1738, %v1737
        %v1746 = vpack.c.b16 %v1740, %v1739
        %v1747 = vpack.c.b16 %v1742, %v1741
        %v1748 = vpack.c.b16 %v1744, %v1743
        %v1750 = vsel %vm1643, %v1745, 0
        %v1753 = vsel %vm1643, %v1746, 0
        %v1756 = vsel %vm1643, %v1747, 0
        %v1759 = vsel %vm1643, %v1748, 0
        %1761 = vmatprep.subr.bf16.mxu0 0
        %1762 = vmatpush1.bf16.msra.mxu0 0
        %1763 = vmatprep.subr.bf16.mxu0 0
        %1764 = vmatpush1.bf16.msra.mxu0 0
        %1765 = vmatprep.subr.bf16.mxu0 0
        %1766 = vmatpush1.bf16.msra.mxu0 0
        %1767 = vmatprep.subr.bf16.mxu0 0
        %1768 = vmatpush1.bf16.msra.mxu0 0
        %1769 = vmatprep.subr.bf16.mxu0 %v1586
        %1770 = vmatpush1.bf16.msra.mxu0 %v1585
        %1771 = vmatprep.subr.bf16.mxu0 %v1584
        %1772 = vmatpush1.bf16.msra.mxu0 %v1583
        %1773 = vmatprep.subr.bf16.mxu0 %v1582
        %1774 = vmatpush1.bf16.msra.mxu0 %v1581
        %1775 = vmatprep.subr.bf16.mxu0 %v1580
        %1776 = vmatpush1.bf16.msra.mxu0 %v1579
        %1777 = vmatprep.subr.bf16.mxu0 0
        %1778 = vmatpush2.bf16.msra.mxu0 0
        %1779 = vmatprep.subr.bf16.mxu0 0
        %1780 = vmatpush2.bf16.msra.mxu0 0
        %1781 = vmatprep.subr.bf16.mxu0 0
        %1782 = vmatpush2.bf16.msra.mxu0 0
        %1783 = vmatprep.subr.bf16.mxu0 0
        %1784 = vmatpush2.bf16.msra.mxu0 0
        %1785 = vmatprep.subr.bf16.mxu0 0
        %1786 = vmatpush2.bf16.msra.mxu0 0
        %1787 = vmatprep.subr.bf16.mxu0 0
        %1788 = vmatpush2.bf16.msra.mxu0 0
        %1789 = vmatprep.subr.bf16.mxu0 0
        %1790 = vmatpush2.bf16.msra.mxu0 0
        %1791 = vmatprep.subr.bf16.mxu0 0
        %1792 = vmatpush2.bf16.msra.mxu0 0
        %1793 = vmatprep.mubr.bf16.mxu0 0
        %1794 = vmatmul.mubr.bf16.gmra.mxu0 %v1750
        %v1795 = vpop.f32.mrf.mxu0
        %v1796 = vadd.f32 %v1691, %v1795
        %v1797 = vpop.f32.mrf.mxu0
        %v1798 = vadd.f32 %v1693, %v1797
        %v1799 = vpop.f32.mrf.mxu0
        %v1800 = vadd.f32 %v1695, %v1799
        %v1801 = vpop.f32.mrf.mxu0
        %v1802 = vadd.f32 %v1697, %v1801
        %1803 = vmatprep.mubr.bf16.mxu0 0
        %1804 = vmatmul.mubr.bf16.gmra.mxu0 %v1753
        %v1805 = vpop.f32.mrf.mxu0
        %v1806 = vadd.f32 %v1701, %v1805
        %v1807 = vpop.f32.mrf.mxu0
        %v1808 = vadd.f32 %v1703, %v1807
        %v1809 = vpop.f32.mrf.mxu0
        %v1810 = vadd.f32 %v1705, %v1809
        %v1811 = vpop.f32.mrf.mxu0
        %v1812 = vadd.f32 %v1707, %v1811
        %1813 = vmatprep.mubr.bf16.mxu0 0
        %1814 = vmatmul.mubr.bf16.gmra.mxu0 %v1756
        %v1815 = vpop.f32.mrf.mxu0
        %v1816 = vadd.f32 %v1711, %v1815
        %v1817 = vpop.f32.mrf.mxu0
        %v1818 = vadd.f32 %v1713, %v1817
        %v1819 = vpop.f32.mrf.mxu0
        %v1820 = vadd.f32 %v1715, %v1819
        %v1821 = vpop.f32.mrf.mxu0
        %v1822 = vadd.f32 %v1717, %v1821
        %1823 = vmatprep.mubr.bf16.mxu0 0
        %1824 = vmatmul.mubr.bf16.gmra.mxu0 %v1759
        %v1825 = vpop.f32.mrf.mxu0
        %v1826 = vadd.f32 %v1721, %v1825
        %v1827 = vpop.f32.mrf.mxu0
        %v1828 = vadd.f32 %v1723, %v1827
        %v1829 = vpop.f32.mrf.mxu0
        %v1830 = vadd.f32 %v1725, %v1829
        %v1831 = vpop.f32.mrf.mxu0
        %v1832 = vadd.f32 %v1727, %v1831
        %1833 = vdwg.mxu0
        %v1842 = vunpack.c.l.b16 %v466
        %v1843 = vunpack.c.l.b16 %v467
        %v1844 = vunpack.c.l.b16 %v468
        %v1845 = vunpack.c.l.b16 %v469
        %v1846 = vunpack.c.l.b16 %v470
        %v1847 = vunpack.c.l.b16 %v471
        %v1848 = vunpack.c.l.b16 %v472
        %v1849 = vunpack.c.l.b16 %v473
        %v1850 = vpack.c.b16 %v1843, %v1842
        %v1851 = vpack.c.b16 %v1845, %v1844
        %v1852 = vpack.c.b16 %v1847, %v1846
        %v1853 = vpack.c.b16 %v1849, %v1848
        %1854 = vrot.lane.b32.xlu0 %v1579, 124
        %v1855 = vpop.permute.xlu0 %1854
        %1856 = vrot.lane.b32.xlu0 %v1580, 124
        %v1857 = vpop.permute.xlu0 %1856
        %1858 = vrot.lane.b32.xlu0 %v1581, 124
        %v1859 = vpop.permute.xlu0 %1858
        %1860 = vrot.lane.b32.xlu0 %v1582, 124
        %v1861 = vpop.permute.xlu0 %1860
        %1862 = vrot.lane.b32.xlu0 %v1583, 124
        %v1863 = vpop.permute.xlu0 %1862
        %1864 = vrot.lane.b32.xlu0 %v1584, 124
        %v1865 = vpop.permute.xlu0 %1864
        %1866 = vrot.lane.b32.xlu0 %v1585, 124
        %v1867 = vpop.permute.xlu0 %1866
        %1868 = vrot.lane.b32.xlu0 %v1586, 124
        %v1869 = vpop.permute.xlu0 %1868
        %vm1870 = vcmask 1014784
        %v1871 = vsel %vm1870, %v1855, %v1857
        %v1872 = vsel %vm1870, %v1859, %v1861
        %v1873 = vsel %vm1870, %v1863, %v1865
        %v1874 = vsel %vm1870, %v1867, %v1869
        %v1884 = vsel %vm1643, %v1850, 0
        %v1887 = vsel %vm1643, %v1851, 0
        %v1890 = vsel %vm1643, %v1852, 0
        %v1893 = vsel %vm1643, %v1853, 0
        %1895 = vmatprep.subr.bf16.mxu0 0
        %1896 = vmatpush1.bf16.msra.mxu0 0
        %1897 = vmatprep.subr.bf16.mxu0 0
        %1898 = vmatpush1.bf16.msra.mxu0 0
        %1899 = vmatprep.subr.bf16.mxu0 0
        %1900 = vmatpush1.bf16.msra.mxu0 0
        %1901 = vmatprep.subr.bf16.mxu0 0
        %1902 = vmatpush1.bf16.msra.mxu0 0
        %1903 = vmatprep.subr.bf16.mxu0 %v1869
        %1904 = vmatpush1.bf16.msra.mxu0 %v1874
        %1905 = vmatprep.subr.bf16.mxu0 %v1865
        %1906 = vmatpush1.bf16.msra.mxu0 %v1873
        %1907 = vmatprep.subr.bf16.mxu0 %v1861
        %1908 = vmatpush1.bf16.msra.mxu0 %v1872
        %1909 = vmatprep.subr.bf16.mxu0 %v1857
        %1910 = vmatpush1.bf16.msra.mxu0 %v1871
        %1911 = vmatprep.subr.bf16.mxu0 0
        %1912 = vmatpush2.bf16.msra.mxu0 0
        %1913 = vmatprep.subr.bf16.mxu0 0
        %1914 = vmatpush2.bf16.msra.mxu0 0
        %1915 = vmatprep.subr.bf16.mxu0 0
        %1916 = vmatpush2.bf16.msra.mxu0 0
        %1917 = vmatprep.subr.bf16.mxu0 0
        %1918 = vmatpush2.bf16.msra.mxu0 0
        %1919 = vmatprep.subr.bf16.mxu0 0
        %1920 = vmatpush2.bf16.msra.mxu0 0
        %1921 = vmatprep.subr.bf16.mxu0 0
        %1922 = vmatpush2.bf16.msra.mxu0 0
        %1923 = vmatprep.subr.bf16.mxu0 0
        %1924 = vmatpush2.bf16.msra.mxu0 0
        %1925 = vmatprep.subr.bf16.mxu0 0
        %1926 = vmatpush2.bf16.msra.mxu0 0
        %1927 = vmatprep.mubr.bf16.mxu0 0
        %1928 = vmatmul.mubr.bf16.gmra.mxu0 %v1884
        %v1929 = vpop.f32.mrf.mxu0
        %v1930 = vadd.f32 0.0, %v1929
        %v1931 = vpop.f32.mrf.mxu0
        %v1932 = vadd.f32 0.0, %v1931
        %v1933 = vpop.f32.mrf.mxu0
        %v1934 = vadd.f32 0.0, %v1933
        %v1935 = vpop.f32.mrf.mxu0
        %v1936 = vadd.f32 0.0, %v1935
        %1937 = vmatprep.mubr.bf16.mxu0 0
        %1938 = vmatmul.mubr.bf16.gmra.mxu0 %v1887
        %v1939 = vpop.f32.mrf.mxu0
        %v1940 = vadd.f32 0.0, %v1939
        %v1941 = vpop.f32.mrf.mxu0
        %v1942 = vadd.f32 0.0, %v1941
        %v1943 = vpop.f32.mrf.mxu0
        %v1944 = vadd.f32 0.0, %v1943
        %v1945 = vpop.f32.mrf.mxu0
        %v1946 = vadd.f32 0.0, %v1945
        %1947 = vmatprep.mubr.bf16.mxu0 0
        %1948 = vmatmul.mubr.bf16.gmra.mxu0 %v1890
        %v1949 = vpop.f32.mrf.mxu0
        %v1950 = vadd.f32 0.0, %v1949
        %v1951 = vpop.f32.mrf.mxu0
        %v1952 = vadd.f32 0.0, %v1951
        %v1953 = vpop.f32.mrf.mxu0
        %v1954 = vadd.f32 0.0, %v1953
        %v1955 = vpop.f32.mrf.mxu0
        %v1956 = vadd.f32 0.0, %v1955
        %1957 = vmatprep.mubr.bf16.mxu0 0
        %1958 = vmatmul.mubr.bf16.gmra.mxu0 %v1893
        %v1959 = vpop.f32.mrf.mxu0
        %v1960 = vadd.f32 0.0, %v1959
        %v1961 = vpop.f32.mrf.mxu0
        %v1962 = vadd.f32 0.0, %v1961
        %v1963 = vpop.f32.mrf.mxu0
        %v1964 = vadd.f32 0.0, %v1963
        %v1965 = vpop.f32.mrf.mxu0
        %v1966 = vadd.f32 0.0, %v1965
        %1967 = vdwg.mxu0
        %v1968 = vadd.f32 %v1796, %v1930
        %v1969 = vadd.f32 %v1798, %v1932
        %v1970 = vadd.f32 %v1800, %v1934
        %v1971 = vadd.f32 %v1802, %v1936
        %v1972 = vadd.f32 %v1806, %v1940
        %v1973 = vadd.f32 %v1808, %v1942
        %v1974 = vadd.f32 %v1810, %v1944
        %v1975 = vadd.f32 %v1812, %v1946
        %v1976 = vadd.f32 %v1816, %v1950
        %v1977 = vadd.f32 %v1818, %v1952
        %v1978 = vadd.f32 %v1820, %v1954
        %v1979 = vadd.f32 %v1822, %v1956
        %v1980 = vadd.f32 %v1826, %v1960
        %v1981 = vadd.f32 %v1828, %v1962
        %v1982 = vadd.f32 %v1830, %v1964
        %v1983 = vadd.f32 %v1832, %v1966
        %1985 = vset.pattern.permute.xlu0 0
        %1986 = vperm.xlu0 %1985, %v474
        %v1987 = vpop.permute.xlu0 %1986
        %1990 = vset.pattern.permute.xlu0 0
        %1991 = vperm.xlu0 %1990, %v475
        %v1992 = vpop.permute.xlu0 %1991
        %1995 = vset.pattern.permute.xlu0 0
        %1996 = vperm.xlu0 %1995, %v476
        %v1997 = vpop.permute.xlu0 %1996
        %2000 = vset.pattern.permute.xlu0 0
        %2001 = vperm.xlu0 %2000, %v477
        %v2002 = vpop.permute.xlu0 %2001
        %2005 = vset.pattern.permute.xlu0 0
        %2006 = vperm.xlu0 %2005, %v478
        %v2007 = vpop.permute.xlu0 %2006
        %2010 = vset.pattern.permute.xlu0 0
        %2011 = vperm.xlu0 %2010, %v479
        %v2012 = vpop.permute.xlu0 %2011
        %2015 = vset.pattern.permute.xlu0 0
        %2016 = vperm.xlu0 %2015, %v480
        %v2017 = vpop.permute.xlu0 %2016
        %2020 = vset.pattern.permute.xlu0 0
        %2021 = vperm.xlu0 %2020, %v481
        %v2022 = vpop.permute.xlu0 %2021
        %v2024 = vadd.f32 %v1968, %v1987
        %v2025 = vadd.f32 %v1969, %v1987
        %v2026 = vadd.f32 %v1970, %v1992
        %v2027 = vadd.f32 %v1971, %v1992
        %v2028 = vadd.f32 %v1972, %v1997
        %v2029 = vadd.f32 %v1973, %v1997
        %v2030 = vadd.f32 %v1974, %v2002
        %v2031 = vadd.f32 %v1975, %v2002
        %v2032 = vadd.f32 %v1976, %v2007
        %v2033 = vadd.f32 %v1977, %v2007
        %v2034 = vadd.f32 %v1978, %v2012
        %v2035 = vadd.f32 %v1979, %v2012
        %v2036 = vadd.f32 %v1980, %v2017
        %v2037 = vadd.f32 %v1981, %v2017
        %v2038 = vadd.f32 %v1982, %v2022
        %v2039 = vadd.f32 %v1983, %v2022
        %v2040 = vsub.f32 0.0, %v2024
        %v2041 = vsub.f32 0.0, %v2025
        %v2042 = vsub.f32 0.0, %v2026
        %v2043 = vsub.f32 0.0, %v2027
        %v2044 = vsub.f32 0.0, %v2028
        %v2045 = vsub.f32 0.0, %v2029
        %v2046 = vsub.f32 0.0, %v2030
        %v2047 = vsub.f32 0.0, %v2031
        %v2048 = vsub.f32 0.0, %v2032
        %v2049 = vsub.f32 0.0, %v2033
        %v2050 = vsub.f32 0.0, %v2034
        %v2051 = vsub.f32 0.0, %v2035
        %v2052 = vsub.f32 0.0, %v2036
        %v2053 = vsub.f32 0.0, %v2037
        %v2054 = vsub.f32 0.0, %v2038
        %v2055 = vsub.f32 0.0, %v2039
        %v2056 = vmul.f32 %v2040, 1.442695
        %v2057 = vpow.pop %v2056
        %v2058 = vmul.f32 %v2041, 1.442695
        %v2059 = vpow.pop %v2058
        %v2060 = vmul.f32 %v2042, 1.442695
        %v2061 = vpow.pop %v2060
        %v2062 = vmul.f32 %v2043, 1.442695
        %v2063 = vpow.pop %v2062
        %v2064 = vmul.f32 %v2044, 1.442695
        %v2065 = vpow.pop %v2064
        %v2066 = vmul.f32 %v2045, 1.442695
        %v2067 = vpow.pop %v2066
        %v2068 = vmul.f32 %v2046, 1.442695
        %v2069 = vpow.pop %v2068
        %v2070 = vmul.f32 %v2047, 1.442695
        %v2071 = vpow.pop %v2070
        %v2072 = vmul.f32 %v2048, 1.442695
        %v2073 = vpow.pop %v2072
        %v2074 = vmul.f32 %v2049, 1.442695
        %v2075 = vpow.pop %v2074
        %v2076 = vmul.f32 %v2050, 1.442695
        %v2077 = vpow.pop %v2076
        %v2078 = vmul.f32 %v2051, 1.442695
        %v2079 = vpow.pop %v2078
        %v2080 = vmul.f32 %v2052, 1.442695
        %v2081 = vpow.pop %v2080
        %v2082 = vmul.f32 %v2053, 1.442695
        %v2083 = vpow.pop %v2082
        %v2084 = vmul.f32 %v2054, 1.442695
        %v2085 = vpow.pop %v2084
        %v2086 = vmul.f32 %v2055, 1.442695
        %v2087 = vpow.pop %v2086
        %v2088 = vadd.f32 %v2057, 1.0
        %v2089 = vadd.f32 %v2059, 1.0
        %v2090 = vadd.f32 %v2061, 1.0
        %v2091 = vadd.f32 %v2063, 1.0
        %v2092 = vadd.f32 %v2065, 1.0
        %v2093 = vadd.f32 %v2067, 1.0
        %v2094 = vadd.f32 %v2069, 1.0
        %v2095 = vadd.f32 %v2071, 1.0
        %v2096 = vadd.f32 %v2073, 1.0
        %v2097 = vadd.f32 %v2075, 1.0
        %v2098 = vadd.f32 %v2077, 1.0
        %v2099 = vadd.f32 %v2079, 1.0
        %v2100 = vadd.f32 %v2081, 1.0
        %v2101 = vadd.f32 %v2083, 1.0
        %v2102 = vadd.f32 %v2085, 1.0
        %v2103 = vadd.f32 %v2087, 1.0
        %v2104 = vrcp.pop %v2088
        %v2105 = vrcp.pop %v2089
        %v2106 = vrcp.pop %v2090
        %v2107 = vrcp.pop %v2091
        %v2108 = vrcp.pop %v2092
        %v2109 = vrcp.pop %v2093
        %v2110 = vrcp.pop %v2094
        %v2111 = vrcp.pop %v2095
        %v2112 = vrcp.pop %v2096
        %v2113 = vrcp.pop %v2097
        %v2114 = vrcp.pop %v2098
        %v2115 = vrcp.pop %v2099
        %v2116 = vrcp.pop %v2100
        %v2117 = vrcp.pop %v2101
        %v2118 = vrcp.pop %v2102
        %v2119 = vrcp.pop %v2103
        %v2120 = vmul.f32 %v2024, %v2104
        %v2121 = vmul.f32 %v2025, %v2105
        %v2122 = vmul.f32 %v2026, %v2106
        %v2123 = vmul.f32 %v2027, %v2107
        %v2124 = vmul.f32 %v2028, %v2108
        %v2125 = vmul.f32 %v2029, %v2109
        %v2126 = vmul.f32 %v2030, %v2110
        %v2127 = vmul.f32 %v2031, %v2111
        %v2128 = vmul.f32 %v2032, %v2112
        %v2129 = vmul.f32 %v2033, %v2113
        %v2130 = vmul.f32 %v2034, %v2114
        %v2131 = vmul.f32 %v2035, %v2115
        %v2132 = vmul.f32 %v2036, %v2116
        %v2133 = vmul.f32 %v2037, %v2117
        %v2134 = vmul.f32 %v2038, %v2118
        %v2135 = vmul.f32 %v2039, %v2119
        %2136 = vrot.lane.b32.xlu0 %v570, 124
        %v2137 = vpop.permute.xlu0 %2136
        %2138 = vrot.lane.b32.xlu0 %v571, 124
        %v2139 = vpop.permute.xlu0 %2138
        %vm2140 = vcmask 1014784
        %v2141 = vsel %vm2140, %v2137, %v2139
        %v2144 = vmul.f32 %v2120, %v2141
        %v2145 = vmul.f32 %v2121, %v2139
        %v2146 = vmul.f32 %v2122, %v2141
        %v2147 = vmul.f32 %v2123, %v2139
        %v2148 = vmul.f32 %v2124, %v2141
        %v2149 = vmul.f32 %v2125, %v2139
        %v2150 = vmul.f32 %v2126, %v2141
        %v2151 = vmul.f32 %v2127, %v2139
        %v2152 = vmul.f32 %v2128, %v2141
        %v2153 = vmul.f32 %v2129, %v2139
        %v2154 = vmul.f32 %v2130, %v2141
        %v2155 = vmul.f32 %v2131, %v2139
        %v2156 = vmul.f32 %v2132, %v2141
        %v2157 = vmul.f32 %v2133, %v2139
        %v2158 = vmul.f32 %v2134, %v2141
        %v2159 = vmul.f32 %v2135, %v2139
        %v2160 = vpack.c.bf16 %v2146, %v2144
        %v2161 = vpack.c.bf16 %v2147, %v2145
        %v2162 = vpack.c.bf16 %v2150, %v2148
        %v2163 = vpack.c.bf16 %v2151, %v2149
        %v2164 = vpack.c.bf16 %v2154, %v2152
        %v2165 = vpack.c.bf16 %v2155, %v2153
        %v2166 = vpack.c.bf16 %v2158, %v2156
        %v2167 = vpack.c.bf16 %v2159, %v2157
        %v2176 = vunpack.c.l.b16 %v490
        %v2177 = vunpack.c.l.b16 %v491
        %v2178 = vunpack.c.l.b16 %v492
        %v2179 = vunpack.c.l.b16 %v493
        %v2180 = vunpack.c.l.b16 %v494
        %v2181 = vunpack.c.l.b16 %v495
        %v2182 = vunpack.c.l.b16 %v496
        %v2183 = vunpack.c.l.b16 %v497
        %v2184 = vpack.c.b16 %v2177, %v2176
        %v2185 = vpack.c.b16 %v2179, %v2178
        %v2186 = vpack.c.b16 %v2181, %v2180
        %v2187 = vpack.c.b16 %v2183, %v2182
        %2196 = vrot.lane.b32.xlu0 %v2160, 124
        %v2197 = vpop.permute.xlu0 %2196
        %2198 = vrot.lane.b32.xlu0 %v2161, 124
        %v2199 = vpop.permute.xlu0 %2198
        %2200 = vrot.lane.b32.xlu0 %v2162, 124
        %v2201 = vpop.permute.xlu0 %2200
        %2202 = vrot.lane.b32.xlu0 %v2163, 124
        %v2203 = vpop.permute.xlu0 %2202
        %2204 = vrot.lane.b32.xlu0 %v2164, 124
        %v2205 = vpop.permute.xlu0 %2204
        %2206 = vrot.lane.b32.xlu0 %v2165, 124
        %v2207 = vpop.permute.xlu0 %2206
        %2208 = vrot.lane.b32.xlu0 %v2166, 124
        %v2209 = vpop.permute.xlu0 %2208
        %2210 = vrot.lane.b32.xlu0 %v2167, 124
        %v2211 = vpop.permute.xlu0 %2210
        %v2212 = vsel %vm1870, %v2197, %v2199
        %v2213 = vsel %vm1870, %v2201, %v2203
        %v2214 = vsel %vm1870, %v2205, %v2207
        %v2215 = vsel %vm1870, %v2209, %v2211
        %v2225 = vsel %vm1643, %v2184, 0
        %v2228 = vsel %vm1643, %v2185, 0
        %v2231 = vsel %vm1643, %v2186, 0
        %v2234 = vsel %vm1643, %v2187, 0
        %2236 = vmatprep.subr.bf16.mxu0 0
        %2237 = vmatpush1.bf16.msra.mxu0 0
        %2238 = vmatprep.subr.bf16.mxu0 0
        %2239 = vmatpush1.bf16.msra.mxu0 0
        %2240 = vmatprep.subr.bf16.mxu0 0
        %2241 = vmatpush1.bf16.msra.mxu0 0
        %2242 = vmatprep.subr.bf16.mxu0 0
        %2243 = vmatpush1.bf16.msra.mxu0 0
        %2244 = vmatprep.subr.bf16.mxu0 %v2211
        %2245 = vmatpush1.bf16.msra.mxu0 %v2215
        %2246 = vmatprep.subr.bf16.mxu0 %v2207
        %2247 = vmatpush1.bf16.msra.mxu0 %v2214
        %2248 = vmatprep.subr.bf16.mxu0 %v2203
        %2249 = vmatpush1.bf16.msra.mxu0 %v2213
        %2250 = vmatprep.subr.bf16.mxu0 %v2199
        %2251 = vmatpush1.bf16.msra.mxu0 %v2212
        %2252 = vmatprep.subr.bf16.mxu0 0
        %2253 = vmatpush2.bf16.msra.mxu0 0
        %2254 = vmatprep.subr.bf16.mxu0 0
        %2255 = vmatpush2.bf16.msra.mxu0 0
        %2256 = vmatprep.subr.bf16.mxu0 0
        %2257 = vmatpush2.bf16.msra.mxu0 0
        %2258 = vmatprep.subr.bf16.mxu0 0
        %2259 = vmatpush2.bf16.msra.mxu0 0
        %2260 = vmatprep.subr.bf16.mxu0 0
        %2261 = vmatpush2.bf16.msra.mxu0 0
        %2262 = vmatprep.subr.bf16.mxu0 0
        %2263 = vmatpush2.bf16.msra.mxu0 0
        %2264 = vmatprep.subr.bf16.mxu0 0
        %2265 = vmatpush2.bf16.msra.mxu0 0
        %2266 = vmatprep.subr.bf16.mxu0 0
        %2267 = vmatpush2.bf16.msra.mxu0 0
        %2268 = vmatprep.mubr.bf16.mxu0 0
        %2269 = vmatmul.mubr.bf16.gmra.mxu0 %v2225
        %v2270 = vpop.f32.mrf.mxu0
        %v2271 = vadd.f32 0.0, %v2270
        %v2272 = vpop.f32.mrf.mxu0
        %v2273 = vadd.f32 0.0, %v2272
        %v2274 = vpop.f32.mrf.mxu0
        %v2275 = vadd.f32 0.0, %v2274
        %v2276 = vpop.f32.mrf.mxu0
        %v2277 = vadd.f32 0.0, %v2276
        %2278 = vmatprep.mubr.bf16.mxu0 0
        %2279 = vmatmul.mubr.bf16.gmra.mxu0 %v2228
        %v2280 = vpop.f32.mrf.mxu0
        %v2281 = vadd.f32 0.0, %v2280
        %v2282 = vpop.f32.mrf.mxu0
        %v2283 = vadd.f32 0.0, %v2282
        %v2284 = vpop.f32.mrf.mxu0
        %v2285 = vadd.f32 0.0, %v2284
        %v2286 = vpop.f32.mrf.mxu0
        %v2287 = vadd.f32 0.0, %v2286
        %2288 = vmatprep.mubr.bf16.mxu0 0
        %2289 = vmatmul.mubr.bf16.gmra.mxu0 %v2231
        %v2290 = vpop.f32.mrf.mxu0
        %v2291 = vadd.f32 0.0, %v2290
        %v2292 = vpop.f32.mrf.mxu0
        %v2293 = vadd.f32 0.0, %v2292
        %v2294 = vpop.f32.mrf.mxu0
        %v2295 = vadd.f32 0.0, %v2294
        %v2296 = vpop.f32.mrf.mxu0
        %v2297 = vadd.f32 0.0, %v2296
        %2298 = vmatprep.mubr.bf16.mxu0 0
        %2299 = vmatmul.mubr.bf16.gmra.mxu0 %v2234
        %v2300 = vpop.f32.mrf.mxu0
        %v2301 = vadd.f32 0.0, %v2300
        %v2302 = vpop.f32.mrf.mxu0
        %v2303 = vadd.f32 0.0, %v2302
        %v2304 = vpop.f32.mrf.mxu0
        %v2305 = vadd.f32 0.0, %v2304
        %v2306 = vpop.f32.mrf.mxu0
        %v2307 = vadd.f32 0.0, %v2306
        %2308 = vdwg.mxu0
        %v2317 = vunpack.c.l.b16 %v482
        %v2318 = vunpack.c.l.b16 %v483
        %v2319 = vunpack.c.l.b16 %v484
        %v2320 = vunpack.c.l.b16 %v485
        %v2321 = vunpack.c.l.b16 %v486
        %v2322 = vunpack.c.l.b16 %v487
        %v2323 = vunpack.c.l.b16 %v488
        %v2324 = vunpack.c.l.b16 %v489
        %v2325 = vpack.c.b16 %v2318, %v2317
        %v2326 = vpack.c.b16 %v2320, %v2319
        %v2327 = vpack.c.b16 %v2322, %v2321
        %v2328 = vpack.c.b16 %v2324, %v2323
        %v2330 = vsel %vm1643, %v2325, 0
        %v2333 = vsel %vm1643, %v2326, 0
        %v2336 = vsel %vm1643, %v2327, 0
        %v2339 = vsel %vm1643, %v2328, 0
        %2341 = vmatprep.subr.bf16.mxu0 0
        %2342 = vmatpush1.bf16.msra.mxu0 0
        %2343 = vmatprep.subr.bf16.mxu0 0
        %2344 = vmatpush1.bf16.msra.mxu0 0
        %2345 = vmatprep.subr.bf16.mxu0 0
        %2346 = vmatpush1.bf16.msra.mxu0 0
        %2347 = vmatprep.subr.bf16.mxu0 0
        %2348 = vmatpush1.bf16.msra.mxu0 0
        %2349 = vmatprep.subr.bf16.mxu0 %v2167
        %2350 = vmatpush1.bf16.msra.mxu0 %v2166
        %2351 = vmatprep.subr.bf16.mxu0 %v2165
        %2352 = vmatpush1.bf16.msra.mxu0 %v2164
        %2353 = vmatprep.subr.bf16.mxu0 %v2163
        %2354 = vmatpush1.bf16.msra.mxu0 %v2162
        %2355 = vmatprep.subr.bf16.mxu0 %v2161
        %2356 = vmatpush1.bf16.msra.mxu0 %v2160
        %2357 = vmatprep.subr.bf16.mxu0 0
        %2358 = vmatpush2.bf16.msra.mxu0 0
        %2359 = vmatprep.subr.bf16.mxu0 0
        %2360 = vmatpush2.bf16.msra.mxu0 0
        %2361 = vmatprep.subr.bf16.mxu0 0
        %2362 = vmatpush2.bf16.msra.mxu0 0
        %2363 = vmatprep.subr.bf16.mxu0 0
        %2364 = vmatpush2.bf16.msra.mxu0 0
        %2365 = vmatprep.subr.bf16.mxu0 0
        %2366 = vmatpush2.bf16.msra.mxu0 0
        %2367 = vmatprep.subr.bf16.mxu0 0
        %2368 = vmatpush2.bf16.msra.mxu0 0
        %2369 = vmatprep.subr.bf16.mxu0 0
        %2370 = vmatpush2.bf16.msra.mxu0 0
        %2371 = vmatprep.subr.bf16.mxu0 0
        %2372 = vmatpush2.bf16.msra.mxu0 0
        %2373 = vmatprep.mubr.bf16.mxu0 0
        %2374 = vmatmul.mubr.bf16.gmra.mxu0 %v2330
        %v2375 = vpop.f32.mrf.mxu0
        %v2376 = vadd.f32 %v2271, %v2375
        %v2377 = vpop.f32.mrf.mxu0
        %v2378 = vadd.f32 %v2273, %v2377
        %v2379 = vpop.f32.mrf.mxu0
        %v2380 = vadd.f32 %v2275, %v2379
        %v2381 = vpop.f32.mrf.mxu0
        %v2382 = vadd.f32 %v2277, %v2381
        %2383 = vmatprep.mubr.bf16.mxu0 0
        %2384 = vmatmul.mubr.bf16.gmra.mxu0 %v2333
        %v2385 = vpop.f32.mrf.mxu0
        %v2386 = vadd.f32 %v2281, %v2385
        %v2387 = vpop.f32.mrf.mxu0
        %v2388 = vadd.f32 %v2283, %v2387
        %v2389 = vpop.f32.mrf.mxu0
        %v2390 = vadd.f32 %v2285, %v2389
        %v2391 = vpop.f32.mrf.mxu0
        %v2392 = vadd.f32 %v2287, %v2391
        %2393 = vmatprep.mubr.bf16.mxu0 0
        %2394 = vmatmul.mubr.bf16.gmra.mxu0 %v2336
        %v2395 = vpop.f32.mrf.mxu0
        %v2396 = vadd.f32 %v2291, %v2395
        %v2397 = vpop.f32.mrf.mxu0
        %v2398 = vadd.f32 %v2293, %v2397
        %v2399 = vpop.f32.mrf.mxu0
        %v2400 = vadd.f32 %v2295, %v2399
        %v2401 = vpop.f32.mrf.mxu0
        %v2402 = vadd.f32 %v2297, %v2401
        %2403 = vmatprep.mubr.bf16.mxu0 0
        %2404 = vmatmul.mubr.bf16.gmra.mxu0 %v2339
        %v2405 = vpop.f32.mrf.mxu0
        %v2406 = vadd.f32 %v2301, %v2405
        %v2407 = vpop.f32.mrf.mxu0
        %v2408 = vadd.f32 %v2303, %v2407
        %v2409 = vpop.f32.mrf.mxu0
        %v2410 = vadd.f32 %v2305, %v2409
        %v2411 = vpop.f32.mrf.mxu0
        %v2412 = vadd.f32 %v2307, %v2411
        %2413 = vdwg.mxu0
        %v2422 = vunpack.c.l.b16 %v498
        %v2423 = vunpack.c.l.b16 %v499
        %v2424 = vunpack.c.l.b16 %v500
        %v2425 = vunpack.c.l.b16 %v501
        %v2426 = vunpack.c.l.b16 %v502
        %v2427 = vunpack.c.l.b16 %v503
        %v2428 = vunpack.c.l.b16 %v504
        %v2429 = vunpack.c.l.b16 %v505
        %v2430 = vpack.c.b16 %v2423, %v2422
        %v2431 = vpack.c.b16 %v2425, %v2424
        %v2432 = vpack.c.b16 %v2427, %v2426
        %v2433 = vpack.c.b16 %v2429, %v2428
        %2434 = vrot.lane.b32.xlu0 %v2160, 120
        %v2435 = vpop.permute.xlu0 %2434
        %2436 = vrot.lane.b32.xlu0 %v2161, 120
        %v2437 = vpop.permute.xlu0 %2436
        %2438 = vrot.lane.b32.xlu0 %v2162, 120
        %v2439 = vpop.permute.xlu0 %2438
        %2440 = vrot.lane.b32.xlu0 %v2163, 120
        %v2441 = vpop.permute.xlu0 %2440
        %2442 = vrot.lane.b32.xlu0 %v2164, 120
        %v2443 = vpop.permute.xlu0 %2442
        %2444 = vrot.lane.b32.xlu0 %v2165, 120
        %v2445 = vpop.permute.xlu0 %2444
        %2446 = vrot.lane.b32.xlu0 %v2166, 120
        %v2447 = vpop.permute.xlu0 %2446
        %2448 = vrot.lane.b32.xlu0 %v2167, 120
        %v2449 = vpop.permute.xlu0 %2448
        %vm2450 = vcmask 982016
        %v2451 = vsel %vm2450, %v2435, %v2437
        %v2452 = vsel %vm2450, %v2439, %v2441
        %v2453 = vsel %vm2450, %v2443, %v2445
        %v2454 = vsel %vm2450, %v2447, %v2449
        %v2464 = vsel %vm1643, %v2430, 0
        %v2467 = vsel %vm1643, %v2431, 0
        %v2470 = vsel %vm1643, %v2432, 0
        %v2473 = vsel %vm1643, %v2433, 0
        %2475 = vmatprep.subr.bf16.mxu0 0
        %2476 = vmatpush1.bf16.msra.mxu0 0
        %2477 = vmatprep.subr.bf16.mxu0 0
        %2478 = vmatpush1.bf16.msra.mxu0 0
        %2479 = vmatprep.subr.bf16.mxu0 0
        %2480 = vmatpush1.bf16.msra.mxu0 0
        %2481 = vmatprep.subr.bf16.mxu0 0
        %2482 = vmatpush1.bf16.msra.mxu0 0
        %2483 = vmatprep.subr.bf16.mxu0 %v2449
        %2484 = vmatpush1.bf16.msra.mxu0 %v2454
        %2485 = vmatprep.subr.bf16.mxu0 %v2445
        %2486 = vmatpush1.bf16.msra.mxu0 %v2453
        %2487 = vmatprep.subr.bf16.mxu0 %v2441
        %2488 = vmatpush1.bf16.msra.mxu0 %v2452
        %2489 = vmatprep.subr.bf16.mxu0 %v2437
        %2490 = vmatpush1.bf16.msra.mxu0 %v2451
        %2491 = vmatprep.subr.bf16.mxu0 0
        %2492 = vmatpush2.bf16.msra.mxu0 0
        %2493 = vmatprep.subr.bf16.mxu0 0
        %2494 = vmatpush2.bf16.msra.mxu0 0
        %2495 = vmatprep.subr.bf16.mxu0 0
        %2496 = vmatpush2.bf16.msra.mxu0 0
        %2497 = vmatprep.subr.bf16.mxu0 0
        %2498 = vmatpush2.bf16.msra.mxu0 0
        %2499 = vmatprep.subr.bf16.mxu0 0
        %2500 = vmatpush2.bf16.msra.mxu0 0
        %2501 = vmatprep.subr.bf16.mxu0 0
        %2502 = vmatpush2.bf16.msra.mxu0 0
        %2503 = vmatprep.subr.bf16.mxu0 0
        %2504 = vmatpush2.bf16.msra.mxu0 0
        %2505 = vmatprep.subr.bf16.mxu0 0
        %2506 = vmatpush2.bf16.msra.mxu0 0
        %2507 = vmatprep.mubr.bf16.mxu0 0
        %2508 = vmatmul.mubr.bf16.gmra.mxu0 %v2464
        %v2509 = vpop.f32.mrf.mxu0
        %v2510 = vadd.f32 0.0, %v2509
        %v2511 = vpop.f32.mrf.mxu0
        %v2512 = vadd.f32 0.0, %v2511
        %v2513 = vpop.f32.mrf.mxu0
        %v2514 = vadd.f32 0.0, %v2513
        %v2515 = vpop.f32.mrf.mxu0
        %v2516 = vadd.f32 0.0, %v2515
        %2517 = vmatprep.mubr.bf16.mxu0 0
        %2518 = vmatmul.mubr.bf16.gmra.mxu0 %v2467
        %v2519 = vpop.f32.mrf.mxu0
        %v2520 = vadd.f32 0.0, %v2519
        %v2521 = vpop.f32.mrf.mxu0
        %v2522 = vadd.f32 0.0, %v2521
        %v2523 = vpop.f32.mrf.mxu0
        %v2524 = vadd.f32 0.0, %v2523
        %v2525 = vpop.f32.mrf.mxu0
        %v2526 = vadd.f32 0.0, %v2525
        %2527 = vmatprep.mubr.bf16.mxu0 0
        %2528 = vmatmul.mubr.bf16.gmra.mxu0 %v2470
        %v2529 = vpop.f32.mrf.mxu0
        %v2530 = vadd.f32 0.0, %v2529
        %v2531 = vpop.f32.mrf.mxu0
        %v2532 = vadd.f32 0.0, %v2531
        %v2533 = vpop.f32.mrf.mxu0
        %v2534 = vadd.f32 0.0, %v2533
        %v2535 = vpop.f32.mrf.mxu0
        %v2536 = vadd.f32 0.0, %v2535
        %2537 = vmatprep.mubr.bf16.mxu0 0
        %2538 = vmatmul.mubr.bf16.gmra.mxu0 %v2473
        %v2539 = vpop.f32.mrf.mxu0
        %v2540 = vadd.f32 0.0, %v2539
        %v2541 = vpop.f32.mrf.mxu0
        %v2542 = vadd.f32 0.0, %v2541
        %v2543 = vpop.f32.mrf.mxu0
        %v2544 = vadd.f32 0.0, %v2543
        %v2545 = vpop.f32.mrf.mxu0
        %v2546 = vadd.f32 0.0, %v2545
        %2547 = vdwg.mxu0
        %v2548 = vadd.f32 %v2376, %v2510
        %v2549 = vadd.f32 %v2378, %v2512
        %v2550 = vadd.f32 %v2380, %v2514
        %v2551 = vadd.f32 %v2382, %v2516
        %v2552 = vadd.f32 %v2386, %v2520
        %v2553 = vadd.f32 %v2388, %v2522
        %v2554 = vadd.f32 %v2390, %v2524
        %v2555 = vadd.f32 %v2392, %v2526
        %v2556 = vadd.f32 %v2396, %v2530
        %v2557 = vadd.f32 %v2398, %v2532
        %v2558 = vadd.f32 %v2400, %v2534
        %v2559 = vadd.f32 %v2402, %v2536
        %v2560 = vadd.f32 %v2406, %v2540
        %v2561 = vadd.f32 %v2408, %v2542
        %v2562 = vadd.f32 %v2410, %v2544
        %v2563 = vadd.f32 %v2412, %v2546
        %2565 = vset.pattern.permute.xlu0 0
        %2566 = vperm.xlu0 %2565, %v506
        %v2567 = vpop.permute.xlu0 %2566
        %2570 = vset.pattern.permute.xlu0 0
        %2571 = vperm.xlu0 %2570, %v507
        %v2572 = vpop.permute.xlu0 %2571
        %2575 = vset.pattern.permute.xlu0 0
        %2576 = vperm.xlu0 %2575, %v508
        %v2577 = vpop.permute.xlu0 %2576
        %2580 = vset.pattern.permute.xlu0 0
        %2581 = vperm.xlu0 %2580, %v509
        %v2582 = vpop.permute.xlu0 %2581
        %2585 = vset.pattern.permute.xlu0 0
        %2586 = vperm.xlu0 %2585, %v510
        %v2587 = vpop.permute.xlu0 %2586
        %2590 = vset.pattern.permute.xlu0 0
        %2591 = vperm.xlu0 %2590, %v511
        %v2592 = vpop.permute.xlu0 %2591
        %2595 = vset.pattern.permute.xlu0 0
        %2596 = vperm.xlu0 %2595, %v512
        %v2597 = vpop.permute.xlu0 %2596
        %2600 = vset.pattern.permute.xlu0 0
        %2601 = vperm.xlu0 %2600, %v513
        %v2602 = vpop.permute.xlu0 %2601
        %v2604 = vadd.f32 %v2548, %v2567
        %v2605 = vadd.f32 %v2549, %v2567
        %v2606 = vadd.f32 %v2550, %v2572
        %v2607 = vadd.f32 %v2551, %v2572
        %v2608 = vadd.f32 %v2552, %v2577
        %v2609 = vadd.f32 %v2553, %v2577
        %v2610 = vadd.f32 %v2554, %v2582
        %v2611 = vadd.f32 %v2555, %v2582
        %v2612 = vadd.f32 %v2556, %v2587
        %v2613 = vadd.f32 %v2557, %v2587
        %v2614 = vadd.f32 %v2558, %v2592
        %v2615 = vadd.f32 %v2559, %v2592
        %v2616 = vadd.f32 %v2560, %v2597
        %v2617 = vadd.f32 %v2561, %v2597
        %v2618 = vadd.f32 %v2562, %v2602
        %v2619 = vadd.f32 %v2563, %v2602
        %v2620 = vsub.f32 0.0, %v2604
        %v2621 = vsub.f32 0.0, %v2605
        %v2622 = vsub.f32 0.0, %v2606
        %v2623 = vsub.f32 0.0, %v2607
        %v2624 = vsub.f32 0.0, %v2608
        %v2625 = vsub.f32 0.0, %v2609
        %v2626 = vsub.f32 0.0, %v2610
        %v2627 = vsub.f32 0.0, %v2611
        %v2628 = vsub.f32 0.0, %v2612
        %v2629 = vsub.f32 0.0, %v2613
        %v2630 = vsub.f32 0.0, %v2614
        %v2631 = vsub.f32 0.0, %v2615
        %v2632 = vsub.f32 0.0, %v2616
        %v2633 = vsub.f32 0.0, %v2617
        %v2634 = vsub.f32 0.0, %v2618
        %v2635 = vsub.f32 0.0, %v2619
        %v2636 = vmul.f32 %v2620, 1.442695
        %v2637 = vpow.pop %v2636
        %v2638 = vmul.f32 %v2621, 1.442695
        %v2639 = vpow.pop %v2638
        %v2640 = vmul.f32 %v2622, 1.442695
        %v2641 = vpow.pop %v2640
        %v2642 = vmul.f32 %v2623, 1.442695
        %v2643 = vpow.pop %v2642
        %v2644 = vmul.f32 %v2624, 1.442695
        %v2645 = vpow.pop %v2644
        %v2646 = vmul.f32 %v2625, 1.442695
        %v2647 = vpow.pop %v2646
        %v2648 = vmul.f32 %v2626, 1.442695
        %v2649 = vpow.pop %v2648
        %v2650 = vmul.f32 %v2627, 1.442695
        %v2651 = vpow.pop %v2650
        %v2652 = vmul.f32 %v2628, 1.442695
        %v2653 = vpow.pop %v2652
        %v2654 = vmul.f32 %v2629, 1.442695
        %v2655 = vpow.pop %v2654
        %v2656 = vmul.f32 %v2630, 1.442695
        %v2657 = vpow.pop %v2656
        %v2658 = vmul.f32 %v2631, 1.442695
        %v2659 = vpow.pop %v2658
        %v2660 = vmul.f32 %v2632, 1.442695
        %v2661 = vpow.pop %v2660
        %v2662 = vmul.f32 %v2633, 1.442695
        %v2663 = vpow.pop %v2662
        %v2664 = vmul.f32 %v2634, 1.442695
        %v2665 = vpow.pop %v2664
        %v2666 = vmul.f32 %v2635, 1.442695
        %v2667 = vpow.pop %v2666
        %v2668 = vadd.f32 %v2637, 1.0
        %v2669 = vadd.f32 %v2639, 1.0
        %v2670 = vadd.f32 %v2641, 1.0
        %v2671 = vadd.f32 %v2643, 1.0
        %v2672 = vadd.f32 %v2645, 1.0
        %v2673 = vadd.f32 %v2647, 1.0
        %v2674 = vadd.f32 %v2649, 1.0
        %v2675 = vadd.f32 %v2651, 1.0
        %v2676 = vadd.f32 %v2653, 1.0
        %v2677 = vadd.f32 %v2655, 1.0
        %v2678 = vadd.f32 %v2657, 1.0
        %v2679 = vadd.f32 %v2659, 1.0
        %v2680 = vadd.f32 %v2661, 1.0
        %v2681 = vadd.f32 %v2663, 1.0
        %v2682 = vadd.f32 %v2665, 1.0
        %v2683 = vadd.f32 %v2667, 1.0
        %v2684 = vrcp.pop %v2668
        %v2685 = vrcp.pop %v2669
        %v2686 = vrcp.pop %v2670
        %v2687 = vrcp.pop %v2671
        %v2688 = vrcp.pop %v2672
        %v2689 = vrcp.pop %v2673
        %v2690 = vrcp.pop %v2674
        %v2691 = vrcp.pop %v2675
        %v2692 = vrcp.pop %v2676
        %v2693 = vrcp.pop %v2677
        %v2694 = vrcp.pop %v2678
        %v2695 = vrcp.pop %v2679
        %v2696 = vrcp.pop %v2680
        %v2697 = vrcp.pop %v2681
        %v2698 = vrcp.pop %v2682
        %v2699 = vrcp.pop %v2683
        %v2700 = vmul.f32 %v2604, %v2684
        %v2701 = vmul.f32 %v2605, %v2685
        %v2702 = vmul.f32 %v2606, %v2686
        %v2703 = vmul.f32 %v2607, %v2687
        %v2704 = vmul.f32 %v2608, %v2688
        %v2705 = vmul.f32 %v2609, %v2689
        %v2706 = vmul.f32 %v2610, %v2690
        %v2707 = vmul.f32 %v2611, %v2691
        %v2708 = vmul.f32 %v2612, %v2692
        %v2709 = vmul.f32 %v2613, %v2693
        %v2710 = vmul.f32 %v2614, %v2694
        %v2711 = vmul.f32 %v2615, %v2695
        %v2712 = vmul.f32 %v2616, %v2696
        %v2713 = vmul.f32 %v2617, %v2697
        %v2714 = vmul.f32 %v2618, %v2698
        %v2715 = vmul.f32 %v2619, %v2699
        %2716 = vrot.lane.b32.xlu0 %v570, 120
        %v2717 = vpop.permute.xlu0 %2716
        %2718 = vrot.lane.b32.xlu0 %v571, 120
        %v2719 = vpop.permute.xlu0 %2718
        %vm2720 = vcmask 982016
        %v2721 = vsel %vm2720, %v2717, %v2719
        %v2724 = vmul.f32 %v2700, %v2721
        %v2725 = vmul.f32 %v2701, %v2719
        %v2726 = vmul.f32 %v2702, %v2721
        %v2727 = vmul.f32 %v2703, %v2719
        %v2728 = vmul.f32 %v2704, %v2721
        %v2729 = vmul.f32 %v2705, %v2719
        %v2730 = vmul.f32 %v2706, %v2721
        %v2731 = vmul.f32 %v2707, %v2719
        %v2732 = vmul.f32 %v2708, %v2721
        %v2733 = vmul.f32 %v2709, %v2719
        %v2734 = vmul.f32 %v2710, %v2721
        %v2735 = vmul.f32 %v2711, %v2719
        %v2736 = vmul.f32 %v2712, %v2721
        %v2737 = vmul.f32 %v2713, %v2719
        %v2738 = vmul.f32 %v2714, %v2721
        %v2739 = vmul.f32 %v2715, %v2719
        %v2740 = vpack.c.bf16 %v2726, %v2724
        %v2741 = vpack.c.bf16 %v2727, %v2725
        %v2742 = vpack.c.bf16 %v2730, %v2728
        %v2743 = vpack.c.bf16 %v2731, %v2729
        %v2744 = vpack.c.bf16 %v2734, %v2732
        %v2745 = vpack.c.bf16 %v2735, %v2733
        %v2746 = vpack.c.bf16 %v2738, %v2736
        %v2747 = vpack.c.bf16 %v2739, %v2737
        %v2756 = vunpack.c.l.b16 %v522
        %v2757 = vunpack.c.l.b16 %v523
        %v2758 = vunpack.c.l.b16 %v524
        %v2759 = vunpack.c.l.b16 %v525
        %v2760 = vunpack.c.l.b16 %v526
        %v2761 = vunpack.c.l.b16 %v527
        %v2762 = vunpack.c.l.b16 %v528
        %v2763 = vunpack.c.l.b16 %v529
        %v2764 = vpack.c.b16 %v2757, %v2756
        %v2765 = vpack.c.b16 %v2759, %v2758
        %v2766 = vpack.c.b16 %v2761, %v2760
        %v2767 = vpack.c.b16 %v2763, %v2762
        %2776 = vrot.lane.b32.xlu0 %v2740, 120
        %v2777 = vpop.permute.xlu0 %2776
        %2778 = vrot.lane.b32.xlu0 %v2741, 120
        %v2779 = vpop.permute.xlu0 %2778
        %2780 = vrot.lane.b32.xlu0 %v2742, 120
        %v2781 = vpop.permute.xlu0 %2780
        %2782 = vrot.lane.b32.xlu0 %v2743, 120
        %v2783 = vpop.permute.xlu0 %2782
        %2784 = vrot.lane.b32.xlu0 %v2744, 120
        %v2785 = vpop.permute.xlu0 %2784
        %2786 = vrot.lane.b32.xlu0 %v2745, 120
        %v2787 = vpop.permute.xlu0 %2786
        %2788 = vrot.lane.b32.xlu0 %v2746, 120
        %v2789 = vpop.permute.xlu0 %2788
        %2790 = vrot.lane.b32.xlu0 %v2747, 120
        %v2791 = vpop.permute.xlu0 %2790
        %v2792 = vsel %vm2450, %v2777, %v2779
        %v2793 = vsel %vm2450, %v2781, %v2783
        %v2794 = vsel %vm2450, %v2785, %v2787
        %v2795 = vsel %vm2450, %v2789, %v2791
        %v2801 = vsel %vm1643, %v2764, 0
        %v2804 = vsel %vm1643, %v2765, 0
        %v2807 = vsel %vm1643, %v2766, 0
        %v2810 = vsel %vm1643, %v2767, 0
        %2812 = vmatprep.subr.bf16.mxu0 0
        %2813 = vmatpush1.bf16.msra.mxu0 0
        %2814 = vmatprep.subr.bf16.mxu0 0
        %2815 = vmatpush1.bf16.msra.mxu0 0
        %2816 = vmatprep.subr.bf16.mxu0 0
        %2817 = vmatpush1.bf16.msra.mxu0 0
        %2818 = vmatprep.subr.bf16.mxu0 0
        %2819 = vmatpush1.bf16.msra.mxu0 0
        %2820 = vmatprep.subr.bf16.mxu0 0
        %2821 = vmatpush1.bf16.msra.mxu0 %v2795
        %2822 = vmatprep.subr.bf16.mxu0 0
        %2823 = vmatpush1.bf16.msra.mxu0 %v2794
        %2824 = vmatprep.subr.bf16.mxu0 0
        %2825 = vmatpush1.bf16.msra.mxu0 %v2793
        %2826 = vmatprep.subr.bf16.mxu0 0
        %2827 = vmatpush1.bf16.msra.mxu0 %v2792
        %2828 = vmatprep.subr.bf16.mxu0 0
        %2829 = vmatpush2.bf16.msra.mxu0 0
        %2830 = vmatprep.subr.bf16.mxu0 0
        %2831 = vmatpush2.bf16.msra.mxu0 0
        %2832 = vmatprep.subr.bf16.mxu0 0
        %2833 = vmatpush2.bf16.msra.mxu0 0
        %2834 = vmatprep.subr.bf16.mxu0 0
        %2835 = vmatpush2.bf16.msra.mxu0 0
        %2836 = vmatprep.subr.bf16.mxu0 0
        %2837 = vmatpush2.bf16.msra.mxu0 0
        %2838 = vmatprep.subr.bf16.mxu0 0
        %2839 = vmatpush2.bf16.msra.mxu0 0
        %2840 = vmatprep.subr.bf16.mxu0 0
        %2841 = vmatpush2.bf16.msra.mxu0 0
        %2842 = vmatprep.subr.bf16.mxu0 0
        %2843 = vmatpush2.bf16.msra.mxu0 0
        %2844 = vmatprep.mubr.bf16.mxu0 0
        %2845 = vmatmul.mubr.bf16.gmra.mxu0 %v2801
        %v2846 = vpop.f32.mrf.mxu0
        %v2847 = vadd.f32 0.0, %v2846
        %v2848 = vpop.f32.mrf.mxu0
        %v2849 = vpop.f32.mrf.mxu0
        %v2850 = vadd.f32 0.0, %v2849
        %v2851 = vpop.f32.mrf.mxu0
        %2852 = vmatprep.mubr.bf16.mxu0 0
        %2853 = vmatmul.mubr.bf16.gmra.mxu0 %v2804
        %v2854 = vpop.f32.mrf.mxu0
        %v2855 = vadd.f32 0.0, %v2854
        %v2856 = vpop.f32.mrf.mxu0
        %v2857 = vpop.f32.mrf.mxu0
        %v2858 = vadd.f32 0.0, %v2857
        %v2859 = vpop.f32.mrf.mxu0
        %2860 = vmatprep.mubr.bf16.mxu0 0
        %2861 = vmatmul.mubr.bf16.gmra.mxu0 %v2807
        %v2862 = vpop.f32.mrf.mxu0
        %v2863 = vadd.f32 0.0, %v2862
        %v2864 = vpop.f32.mrf.mxu0
        %v2865 = vpop.f32.mrf.mxu0
        %v2866 = vadd.f32 0.0, %v2865
        %v2867 = vpop.f32.mrf.mxu0
        %2868 = vmatprep.mubr.bf16.mxu0 0
        %2869 = vmatmul.mubr.bf16.gmra.mxu0 %v2810
        %v2870 = vpop.f32.mrf.mxu0
        %v2871 = vadd.f32 0.0, %v2870
        %v2872 = vpop.f32.mrf.mxu0
        %v2873 = vpop.f32.mrf.mxu0
        %v2874 = vadd.f32 0.0, %v2873
        %v2875 = vpop.f32.mrf.mxu0
        %2876 = vdwg.mxu0
        %v2885 = vunpack.c.l.b16 %v514
        %v2886 = vunpack.c.l.b16 %v515
        %v2887 = vunpack.c.l.b16 %v516
        %v2888 = vunpack.c.l.b16 %v517
        %v2889 = vunpack.c.l.b16 %v518
        %v2890 = vunpack.c.l.b16 %v519
        %v2891 = vunpack.c.l.b16 %v520
        %v2892 = vunpack.c.l.b16 %v521
        %v2893 = vpack.c.b16 %v2886, %v2885
        %v2894 = vpack.c.b16 %v2888, %v2887
        %v2895 = vpack.c.b16 %v2890, %v2889
        %v2896 = vpack.c.b16 %v2892, %v2891
        %v2898 = vsel %vm1643, %v2893, 0
        %v2901 = vsel %vm1643, %v2894, 0
        %v2904 = vsel %vm1643, %v2895, 0
        %v2907 = vsel %vm1643, %v2896, 0
        %2909 = vmatprep.subr.bf16.mxu0 0
        %2910 = vmatpush1.bf16.msra.mxu0 0
        %2911 = vmatprep.subr.bf16.mxu0 0
        %2912 = vmatpush1.bf16.msra.mxu0 0
        %2913 = vmatprep.subr.bf16.mxu0 0
        %2914 = vmatpush1.bf16.msra.mxu0 0
        %2915 = vmatprep.subr.bf16.mxu0 0
        %2916 = vmatpush1.bf16.msra.mxu0 0
        %2917 = vmatprep.subr.bf16.mxu0 0
        %2918 = vmatpush1.bf16.msra.mxu0 %v2746
        %2919 = vmatprep.subr.bf16.mxu0 0
        %2920 = vmatpush1.bf16.msra.mxu0 %v2744
        %2921 = vmatprep.subr.bf16.mxu0 0
        %2922 = vmatpush1.bf16.msra.mxu0 %v2742
        %2923 = vmatprep.subr.bf16.mxu0 0
        %2924 = vmatpush1.bf16.msra.mxu0 %v2740
        %2925 = vmatprep.subr.bf16.mxu0 0
        %2926 = vmatpush2.bf16.msra.mxu0 0
        %2927 = vmatprep.subr.bf16.mxu0 0
        %2928 = vmatpush2.bf16.msra.mxu0 0
        %2929 = vmatprep.subr.bf16.mxu0 0
        %2930 = vmatpush2.bf16.msra.mxu0 0
        %2931 = vmatprep.subr.bf16.mxu0 0
        %2932 = vmatpush2.bf16.msra.mxu0 0
        %2933 = vmatprep.subr.bf16.mxu0 0
        %2934 = vmatpush2.bf16.msra.mxu0 0
        %2935 = vmatprep.subr.bf16.mxu0 0
        %2936 = vmatpush2.bf16.msra.mxu0 0
        %2937 = vmatprep.subr.bf16.mxu0 0
        %2938 = vmatpush2.bf16.msra.mxu0 0
        %2939 = vmatprep.subr.bf16.mxu0 0
        %2940 = vmatpush2.bf16.msra.mxu0 0
        %2941 = vmatprep.mubr.bf16.mxu0 0
        %2942 = vmatmul.mubr.bf16.gmra.mxu0 %v2898
        %v2943 = vpop.f32.mrf.mxu0
        %v2944 = vadd.f32 %v2847, %v2943
        %v2945 = vpop.f32.mrf.mxu0
        %v2946 = vpop.f32.mrf.mxu0
        %v2947 = vadd.f32 %v2850, %v2946
        %v2948 = vpop.f32.mrf.mxu0
        %2949 = vmatprep.mubr.bf16.mxu0 0
        %2950 = vmatmul.mubr.bf16.gmra.mxu0 %v2901
        %v2951 = vpop.f32.mrf.mxu0
        %v2952 = vadd.f32 %v2855, %v2951
        %v2953 = vpop.f32.mrf.mxu0
        %v2954 = vpop.f32.mrf.mxu0
        %v2955 = vadd.f32 %v2858, %v2954
        %v2956 = vpop.f32.mrf.mxu0
        %2957 = vmatprep.mubr.bf16.mxu0 0
        %2958 = vmatmul.mubr.bf16.gmra.mxu0 %v2904
        %v2959 = vpop.f32.mrf.mxu0
        %v2960 = vadd.f32 %v2863, %v2959
        %v2961 = vpop.f32.mrf.mxu0
        %v2962 = vpop.f32.mrf.mxu0
        %v2963 = vadd.f32 %v2866, %v2962
        %v2964 = vpop.f32.mrf.mxu0
        %2965 = vmatprep.mubr.bf16.mxu0 0
        %2966 = vmatmul.mubr.bf16.gmra.mxu0 %v2907
        %v2967 = vpop.f32.mrf.mxu0
        %v2968 = vadd.f32 %v2871, %v2967
        %v2969 = vpop.f32.mrf.mxu0
        %v2970 = vpop.f32.mrf.mxu0
        %v2971 = vadd.f32 %v2874, %v2970
        %v2972 = vpop.f32.mrf.mxu0
        %2973 = vdwg.mxu0
        %v2982 = vunpack.c.l.b16 %v530
        %v2983 = vunpack.c.l.b16 %v531
        %v2984 = vunpack.c.l.b16 %v532
        %v2985 = vunpack.c.l.b16 %v533
        %v2986 = vunpack.c.l.b16 %v534
        %v2987 = vunpack.c.l.b16 %v535
        %v2988 = vunpack.c.l.b16 %v536
        %v2989 = vunpack.c.l.b16 %v537
        %v2990 = vpack.c.b16 %v2983, %v2982
        %v2991 = vpack.c.b16 %v2985, %v2984
        %v2992 = vpack.c.b16 %v2987, %v2986
        %v2993 = vpack.c.b16 %v2989, %v2988
        %2994 = vrot.lane.b32.xlu0 %v2740, 112
        %v2995 = vpop.permute.xlu0 %2994
        %2996 = vrot.lane.b32.xlu0 %v2741, 112
        %v2997 = vpop.permute.xlu0 %2996
        %2998 = vrot.lane.b32.xlu0 %v2742, 112
        %v2999 = vpop.permute.xlu0 %2998
        %3000 = vrot.lane.b32.xlu0 %v2743, 112
        %v3001 = vpop.permute.xlu0 %3000
        %3002 = vrot.lane.b32.xlu0 %v2744, 112
        %v3003 = vpop.permute.xlu0 %3002
        %3004 = vrot.lane.b32.xlu0 %v2745, 112
        %v3005 = vpop.permute.xlu0 %3004
        %3006 = vrot.lane.b32.xlu0 %v2746, 112
        %v3007 = vpop.permute.xlu0 %3006
        %3008 = vrot.lane.b32.xlu0 %v2747, 112
        %v3009 = vpop.permute.xlu0 %3008
        %vm3010 = vcmask 916480
        %v3011 = vsel %vm3010, %v2995, %v2997
        %v3012 = vsel %vm3010, %v2999, %v3001
        %v3013 = vsel %vm3010, %v3003, %v3005
        %v3014 = vsel %vm3010, %v3007, %v3009
        %v3020 = vsel %vm1643, %v2990, 0
        %v3023 = vsel %vm1643, %v2991, 0
        %v3026 = vsel %vm1643, %v2992, 0
        %v3029 = vsel %vm1643, %v2993, 0
        %3031 = vmatprep.subr.bf16.mxu0 0
        %3032 = vmatpush1.bf16.msra.mxu0 0
        %3033 = vmatprep.subr.bf16.mxu0 0
        %3034 = vmatpush1.bf16.msra.mxu0 0
        %3035 = vmatprep.subr.bf16.mxu0 0
        %3036 = vmatpush1.bf16.msra.mxu0 0
        %3037 = vmatprep.subr.bf16.mxu0 0
        %3038 = vmatpush1.bf16.msra.mxu0 0
        %3039 = vmatprep.subr.bf16.mxu0 0
        %3040 = vmatpush1.bf16.msra.mxu0 %v3014
        %3041 = vmatprep.subr.bf16.mxu0 0
        %3042 = vmatpush1.bf16.msra.mxu0 %v3013
        %3043 = vmatprep.subr.bf16.mxu0 0
        %3044 = vmatpush1.bf16.msra.mxu0 %v3012
        %3045 = vmatprep.subr.bf16.mxu0 0
        %3046 = vmatpush1.bf16.msra.mxu0 %v3011
        %3047 = vmatprep.subr.bf16.mxu0 0
        %3048 = vmatpush2.bf16.msra.mxu0 0
        %3049 = vmatprep.subr.bf16.mxu0 0
        %3050 = vmatpush2.bf16.msra.mxu0 0
        %3051 = vmatprep.subr.bf16.mxu0 0
        %3052 = vmatpush2.bf16.msra.mxu0 0
        %3053 = vmatprep.subr.bf16.mxu0 0
        %3054 = vmatpush2.bf16.msra.mxu0 0
        %3055 = vmatprep.subr.bf16.mxu0 0
        %3056 = vmatpush2.bf16.msra.mxu0 0
        %3057 = vmatprep.subr.bf16.mxu0 0
        %3058 = vmatpush2.bf16.msra.mxu0 0
        %3059 = vmatprep.subr.bf16.mxu0 0
        %3060 = vmatpush2.bf16.msra.mxu0 0
        %3061 = vmatprep.subr.bf16.mxu0 0
        %3062 = vmatpush2.bf16.msra.mxu0 0
        %3063 = vmatprep.mubr.bf16.mxu0 0
        %3064 = vmatmul.mubr.bf16.gmra.mxu0 %v3020
        %v3065 = vpop.f32.mrf.mxu0
        %v3066 = vadd.f32 0.0, %v3065
        %v3067 = vpop.f32.mrf.mxu0
        %v3068 = vpop.f32.mrf.mxu0
        %v3069 = vadd.f32 0.0, %v3068
        %v3070 = vpop.f32.mrf.mxu0
        %3071 = vmatprep.mubr.bf16.mxu0 0
        %3072 = vmatmul.mubr.bf16.gmra.mxu0 %v3023
        %v3073 = vpop.f32.mrf.mxu0
        %v3074 = vadd.f32 0.0, %v3073
        %v3075 = vpop.f32.mrf.mxu0
        %v3076 = vpop.f32.mrf.mxu0
        %v3077 = vadd.f32 0.0, %v3076
        %v3078 = vpop.f32.mrf.mxu0
        %3079 = vmatprep.mubr.bf16.mxu0 0
        %3080 = vmatmul.mubr.bf16.gmra.mxu0 %v3026
        %v3081 = vpop.f32.mrf.mxu0
        %v3082 = vadd.f32 0.0, %v3081
        %v3083 = vpop.f32.mrf.mxu0
        %v3084 = vpop.f32.mrf.mxu0
        %v3085 = vadd.f32 0.0, %v3084
        %v3086 = vpop.f32.mrf.mxu0
        %3087 = vmatprep.mubr.bf16.mxu0 0
        %3088 = vmatmul.mubr.bf16.gmra.mxu0 %v3029
        %v3089 = vpop.f32.mrf.mxu0
        %v3090 = vadd.f32 0.0, %v3089
        %v3091 = vpop.f32.mrf.mxu0
        %v3092 = vpop.f32.mrf.mxu0
        %v3093 = vadd.f32 0.0, %v3092
        %v3094 = vpop.f32.mrf.mxu0
        %3095 = vdwg.mxu0
        %v3096 = vadd.f32 %v2944, %v3066
        %v3097 = vadd.f32 %v2947, %v3069
        %v3098 = vadd.f32 %v2952, %v3074
        %v3099 = vadd.f32 %v2955, %v3077
        %v3100 = vadd.f32 %v2960, %v3082
        %v3101 = vadd.f32 %v2963, %v3085
        %v3102 = vadd.f32 %v2968, %v3090
        %v3103 = vadd.f32 %v2971, %v3093
        %3105 = vset.pattern.permute.xlu0 0
        %3106 = vperm.xlu0 %3105, %v538
        %v3107 = vpop.permute.xlu0 %3106
        %3110 = vset.pattern.permute.xlu0 0
        %3111 = vperm.xlu0 %3110, %v539
        %v3112 = vpop.permute.xlu0 %3111
        %3115 = vset.pattern.permute.xlu0 0
        %3116 = vperm.xlu0 %3115, %v540
        %v3117 = vpop.permute.xlu0 %3116
        %3120 = vset.pattern.permute.xlu0 0
        %3121 = vperm.xlu0 %3120, %v541
        %v3122 = vpop.permute.xlu0 %3121
        %3125 = vset.pattern.permute.xlu0 0
        %3126 = vperm.xlu0 %3125, %v542
        %v3127 = vpop.permute.xlu0 %3126
        %3130 = vset.pattern.permute.xlu0 0
        %3131 = vperm.xlu0 %3130, %v543
        %v3132 = vpop.permute.xlu0 %3131
        %3135 = vset.pattern.permute.xlu0 0
        %3136 = vperm.xlu0 %3135, %v544
        %v3137 = vpop.permute.xlu0 %3136
        %3140 = vset.pattern.permute.xlu0 0
        %3141 = vperm.xlu0 %3140, %v545
        %v3142 = vpop.permute.xlu0 %3141
        %v3144 = vadd.f32 %v3096, %v3107
        %v3145 = vadd.f32 %v3097, %v3112
        %v3146 = vadd.f32 %v3098, %v3117
        %v3147 = vadd.f32 %v3099, %v3122
        %v3148 = vadd.f32 %v3100, %v3127
        %v3149 = vadd.f32 %v3101, %v3132
        %v3150 = vadd.f32 %v3102, %v3137
        %v3151 = vadd.f32 %v3103, %v3142
        %v3152 = vsub.f32 0.0, %v3144
        %v3153 = vsub.f32 0.0, %v3145
        %v3154 = vsub.f32 0.0, %v3146
        %v3155 = vsub.f32 0.0, %v3147
        %v3156 = vsub.f32 0.0, %v3148
        %v3157 = vsub.f32 0.0, %v3149
        %v3158 = vsub.f32 0.0, %v3150
        %v3159 = vsub.f32 0.0, %v3151
        %v3160 = vmul.f32 %v3152, 1.442695
        %v3161 = vpow.pop %v3160
        %v3162 = vmul.f32 %v3153, 1.442695
        %v3163 = vpow.pop %v3162
        %v3164 = vmul.f32 %v3154, 1.442695
        %v3165 = vpow.pop %v3164
        %v3166 = vmul.f32 %v3155, 1.442695
        %v3167 = vpow.pop %v3166
        %v3168 = vmul.f32 %v3156, 1.442695
        %v3169 = vpow.pop %v3168
        %v3170 = vmul.f32 %v3157, 1.442695
        %v3171 = vpow.pop %v3170
        %v3172 = vmul.f32 %v3158, 1.442695
        %v3173 = vpow.pop %v3172
        %v3174 = vmul.f32 %v3159, 1.442695
        %v3175 = vpow.pop %v3174
        %v3176 = vadd.f32 %v3161, 1.0
        %v3177 = vadd.f32 %v3163, 1.0
        %v3178 = vadd.f32 %v3165, 1.0
        %v3179 = vadd.f32 %v3167, 1.0
        %v3180 = vadd.f32 %v3169, 1.0
        %v3181 = vadd.f32 %v3171, 1.0
        %v3182 = vadd.f32 %v3173, 1.0
        %v3183 = vadd.f32 %v3175, 1.0
        %v3184 = vrcp.pop %v3176
        %v3185 = vrcp.pop %v3177
        %v3186 = vrcp.pop %v3178
        %v3187 = vrcp.pop %v3179
        %v3188 = vrcp.pop %v3180
        %v3189 = vrcp.pop %v3181
        %v3190 = vrcp.pop %v3182
        %v3191 = vrcp.pop %v3183
        %v3192 = vmul.f32 %v3144, %v3184
        %v3193 = vmul.f32 %v3145, %v3185
        %v3194 = vmul.f32 %v3146, %v3186
        %v3195 = vmul.f32 %v3147, %v3187
        %v3196 = vmul.f32 %v3148, %v3188
        %v3197 = vmul.f32 %v3149, %v3189
        %v3198 = vmul.f32 %v3150, %v3190
        %v3199 = vmul.f32 %v3151, %v3191
        %3200 = vst [vmem:[%s403] sm:$0xff] %v3192
        %3201 = vst [vmem:[%s403 + $0x8] sm:$0xff] %v3193
        %3202 = vst [vmem:[%s403 + $0x10] sm:$0xff] %v3194
        %3203 = vst [vmem:[%s403 + $0x18] sm:$0xff] %v3195
        %3204 = vst [vmem:[%s403 + $0x20] sm:$0xff] %v3196
        %3205 = vst [vmem:[%s403 + $0x28] sm:$0xff] %v3197
        %3206 = vst [vmem:[%s403 + $0x30] sm:$0xff] %v3198
        %3207 = vst [vmem:[%s403 + $0x38] sm:$0xff] %v3199
      $region68: #{tpu_custom_call.1} parent=63 // pred_fallthru
        _
      %p3208 = pneg %p551
      // Predicated region
      $region69: #{tpu_custom_call.1} parent=63 // pred_check
        _
      $region70: #{tpu_custom_call.1} parent=63 // pred_check_branch
        %3210 = sbr.rel (%p551) target = $region72
      $region71: #{tpu_custom_call.1} parent=63 // pred_region
        %3212 = vset.pattern.permute.xlu0 0
        %3213 = vperm.xlu0 %3212, %v410
        %v3214 = vpop.permute.xlu0 %3213
        %3217 = vset.pattern.permute.xlu0 0
        %3218 = vperm.xlu0 %3217, %v411
        %v3219 = vpop.permute.xlu0 %3218
        %3222 = vset.pattern.permute.xlu0 0
        %3223 = vperm.xlu0 %3222, %v412
        %v3224 = vpop.permute.xlu0 %3223
        %3227 = vset.pattern.permute.xlu0 0
        %3228 = vperm.xlu0 %3227, %v413
        %v3229 = vpop.permute.xlu0 %3228
        %v3232 = vlaneseq
        %v3233 = vshrl.u32 %v3232, 7
        %v3234 = vsub.s32 0, %v3233
        %v3235 = vrot.slane %v409, %v3234
        %v3236 = vlaneseq
        %v3237 = vshrl.u32 %v3236, 7
        %v3238 = vsub.s32 1, %v3237
        %v3239 = vrot.slane %v409, %v3238
        %v3242 = vmul.f32 %v3214, %v3235
        %v3243 = vmul.f32 %v3214, %v3239
        %v3244 = vmul.f32 %v3219, %v3235
        %v3245 = vmul.f32 %v3219, %v3239
        %v3246 = vmul.f32 %v3224, %v3235
        %v3247 = vmul.f32 %v3224, %v3239
        %v3248 = vmul.f32 %v3229, %v3235
        %v3249 = vmul.f32 %v3229, %v3239
        %3250 = vset.pattern.permute.xlu0 1
        %3251 = vperm.xlu0 %3250, %v410
        %v3252 = vpop.permute.xlu0 %3251
        %3254 = vset.pattern.permute.xlu0 1
        %3255 = vperm.xlu0 %3254, %v411
        %v3256 = vpop.permute.xlu0 %3255
        %3258 = vset.pattern.permute.xlu0 1
        %3259 = vperm.xlu0 %3258, %v412
        %v3260 = vpop.permute.xlu0 %3259
        %3262 = vset.pattern.permute.xlu0 1
        %3263 = vperm.xlu0 %3262, %v413
        %v3264 = vpop.permute.xlu0 %3263
        %v3266 = vmul.f32 %v3252, %v3235
        %v3267 = vmul.f32 %v3252, %v3239
        %v3268 = vmul.f32 %v3256, %v3235
        %v3269 = vmul.f32 %v3256, %v3239
        %v3270 = vmul.f32 %v3260, %v3235
        %v3271 = vmul.f32 %v3260, %v3239
        %v3272 = vmul.f32 %v3264, %v3235
        %v3273 = vmul.f32 %v3264, %v3239
        %3282 = vrot.lane.b32.xlu0 %v3266, 127
        %v3283 = vpop.permute.xlu0 %3282
        %3284 = vrot.lane.b32.xlu0 %v3267, 127
        %v3285 = vpop.permute.xlu0 %3284
        %3286 = vrot.lane.b32.xlu0 %v3268, 127
        %v3287 = vpop.permute.xlu0 %3286
        %3288 = vrot.lane.b32.xlu0 %v3269, 127
        %v3289 = vpop.permute.xlu0 %3288
        %3290 = vrot.lane.b32.xlu0 %v3270, 127
        %v3291 = vpop.permute.xlu0 %3290
        %3292 = vrot.lane.b32.xlu0 %v3271, 127
        %v3293 = vpop.permute.xlu0 %3292
        %3294 = vrot.lane.b32.xlu0 %v3272, 127
        %v3295 = vpop.permute.xlu0 %3294
        %3296 = vrot.lane.b32.xlu0 %v3273, 127
        %v3297 = vpop.permute.xlu0 %3296
        %vm3298 = vcmask 1039360
        %v3299 = vsel %vm3298, %v3283, %v3285
        %v3300 = vsel %vm3298, %v3287, %v3289
        %v3301 = vsel %vm3298, %v3291, %v3293
        %v3302 = vsel %vm3298, %v3295, %v3297
        %v3311 = vadd.f32 %v3242, %v3299
        %v3312 = vadd.f32 %v3243, %v3285
        %v3313 = vadd.f32 %v3244, %v3300
        %v3314 = vadd.f32 %v3245, %v3289
        %v3315 = vadd.f32 %v3246, %v3301
        %v3316 = vadd.f32 %v3247, %v3293
        %v3317 = vadd.f32 %v3248, %v3302
        %v3318 = vadd.f32 %v3249, %v3297
        %3319 = vset.pattern.permute.xlu0 2
        %3320 = vperm.xlu0 %3319, %v410
        %v3321 = vpop.permute.xlu0 %3320
        %3323 = vset.pattern.permute.xlu0 2
        %3324 = vperm.xlu0 %3323, %v411
        %v3325 = vpop.permute.xlu0 %3324
        %3327 = vset.pattern.permute.xlu0 2
        %3328 = vperm.xlu0 %3327, %v412
        %v3329 = vpop.permute.xlu0 %3328
        %3331 = vset.pattern.permute.xlu0 2
        %3332 = vperm.xlu0 %3331, %v413
        %v3333 = vpop.permute.xlu0 %3332
        %v3335 = vmul.f32 %v3321, %v3235
        %v3336 = vmul.f32 %v3321, %v3239
        %v3337 = vmul.f32 %v3325, %v3235
        %v3338 = vmul.f32 %v3325, %v3239
        %v3339 = vmul.f32 %v3329, %v3235
        %v3340 = vmul.f32 %v3329, %v3239
        %v3341 = vmul.f32 %v3333, %v3235
        %v3342 = vmul.f32 %v3333, %v3239
        %3351 = vrot.lane.b32.xlu0 %v3335, 126
        %v3352 = vpop.permute.xlu0 %3351
        %3353 = vrot.lane.b32.xlu0 %v3336, 126
        %v3354 = vpop.permute.xlu0 %3353
        %3355 = vrot.lane.b32.xlu0 %v3337, 126
        %v3356 = vpop.permute.xlu0 %3355
        %3357 = vrot.lane.b32.xlu0 %v3338, 126
        %v3358 = vpop.permute.xlu0 %3357
        %3359 = vrot.lane.b32.xlu0 %v3339, 126
        %v3360 = vpop.permute.xlu0 %3359
        %3361 = vrot.lane.b32.xlu0 %v3340, 126
        %v3362 = vpop.permute.xlu0 %3361
        %3363 = vrot.lane.b32.xlu0 %v3341, 126
        %v3364 = vpop.permute.xlu0 %3363
        %3365 = vrot.lane.b32.xlu0 %v3342, 126
        %v3366 = vpop.permute.xlu0 %3365
        %vm3367 = vcmask 1031168
        %v3368 = vsel %vm3367, %v3352, %v3354
        %v3369 = vsel %vm3367, %v3356, %v3358
        %v3370 = vsel %vm3367, %v3360, %v3362
        %v3371 = vsel %vm3367, %v3364, %v3366
        %v3380 = vadd.f32 %v3311, %v3368
        %v3381 = vadd.f32 %v3312, %v3354
        %v3382 = vadd.f32 %v3313, %v3369
        %v3383 = vadd.f32 %v3314, %v3358
        %v3384 = vadd.f32 %v3315, %v3370
        %v3385 = vadd.f32 %v3316, %v3362
        %v3386 = vadd.f32 %v3317, %v3371
        %v3387 = vadd.f32 %v3318, %v3366
        %3389 = vset.pattern.permute.xlu0 0
        %3390 = vperm.xlu0 %3389, %v414
        %v3391 = vpop.permute.xlu0 %3390
        %3394 = vset.pattern.permute.xlu0 0
        %3395 = vperm.xlu0 %3394, %v415
        %v3396 = vpop.permute.xlu0 %3395
        %3399 = vset.pattern.permute.xlu0 0
        %3400 = vperm.xlu0 %3399, %v416
        %v3401 = vpop.permute.xlu0 %3400
        %3404 = vset.pattern.permute.xlu0 0
        %3405 = vperm.xlu0 %3404, %v417
        %v3406 = vpop.permute.xlu0 %3405
        %v3408 = vadd.f32 %v3380, %v3391
        %v3409 = vadd.f32 %v3381, %v3391
        %v3410 = vadd.f32 %v3382, %v3396
        %v3411 = vadd.f32 %v3383, %v3396
        %v3412 = vadd.f32 %v3384, %v3401
        %v3413 = vadd.f32 %v3385, %v3401
        %v3414 = vadd.f32 %v3386, %v3406
        %v3415 = vadd.f32 %v3387, %v3406
        %v3416 = vmul.f32 %v3408, 0.5
        %v3417 = vmul.f32 %v3409, 0.5
        %v3418 = vmul.f32 %v3410, 0.5
        %v3419 = vmul.f32 %v3411, 0.5
        %v3420 = vmul.f32 %v3412, 0.5
        %v3421 = vmul.f32 %v3413, 0.5
        %v3422 = vmul.f32 %v3414, 0.5
        %v3423 = vmul.f32 %v3415, 0.5
        %v3424 = vmul.f32 %v3408, 0.70710677
        %v3425 = vmul.f32 %v3409, 0.70710677
        %v3426 = vmul.f32 %v3410, 0.70710677
        %v3427 = vmul.f32 %v3411, 0.70710677
        %v3428 = vmul.f32 %v3412, 0.70710677
        %v3429 = vmul.f32 %v3413, 0.70710677
        %v3430 = vmul.f32 %v3414, 0.70710677
        %v3431 = vmul.f32 %v3415, 0.70710677
        %v3432 = vmax.f32 %v3424, -4.0
        %v3433 = vmax.f32 %v3425, -4.0
        %v3434 = vmax.f32 %v3426, -4.0
        %v3435 = vmax.f32 %v3427, -4.0
        %v3436 = vmax.f32 %v3428, -4.0
        %v3437 = vmax.f32 %v3429, -4.0
        %v3438 = vmax.f32 %v3430, -4.0
        %v3439 = vmax.f32 %v3431, -4.0
        %v3440 = vmin.f32 %v3432, 4.0
        %v3441 = vmin.f32 %v3433, 4.0
        %v3442 = vmin.f32 %v3434, 4.0
        %v3443 = vmin.f32 %v3435, 4.0
        %v3444 = vmin.f32 %v3436, 4.0
        %v3445 = vmin.f32 %v3437, 4.0
        %v3446 = vmin.f32 %v3438, 4.0
        %v3447 = vmin.f32 %v3439, 4.0
        %v3448 = vmul.f32 %v3440, %v3440
        %v3449 = vmul.f32 %v3441, %v3441
        %v3450 = vmul.f32 %v3442, %v3442
        %v3451 = vmul.f32 %v3443, %v3443
        %v3452 = vmul.f32 %v3444, %v3444
        %v3453 = vmul.f32 %v3445, %v3445
        %v3454 = vmul.f32 %v3446, %v3446
        %v3455 = vmul.f32 %v3447, %v3447
        %v3456 = vmul.f32 %v3448, -2.7261424e-10
        %v3457 = vmul.f32 %v3449, -2.7261424e-10
        %v3458 = vmul.f32 %v3450, -2.7261424e-10
        %v3459 = vmul.f32 %v3451, -2.7261424e-10
        %v3460 = vmul.f32 %v3452, -2.7261424e-10
        %v3461 = vmul.f32 %v3453, -2.7261424e-10
        %v3462 = vmul.f32 %v3454, -2.7261424e-10
        %v3463 = vmul.f32 %v3455, -2.7261424e-10
        %v3464 = vadd.f32 %v3456, 2.7706815e-08
        %v3465 = vadd.f32 %v3457, 2.7706815e-08
        %v3466 = vadd.f32 %v3458, 2.7706815e-08
        %v3467 = vadd.f32 %v3459, 2.7706815e-08
        %v3468 = vadd.f32 %v3460, 2.7706815e-08
        %v3469 = vadd.f32 %v3461, 2.7706815e-08
        %v3470 = vadd.f32 %v3462, 2.7706815e-08
        %v3471 = vadd.f32 %v3463, 2.7706815e-08
        %v3472 = vmul.f32 %v3464, %v3448
        %v3473 = vmul.f32 %v3465, %v3449
        %v3474 = vmul.f32 %v3466, %v3450
        %v3475 = vmul.f32 %v3467, %v3451
        %v3476 = vmul.f32 %v3468, %v3452
        %v3477 = vmul.f32 %v3469, %v3453
        %v3478 = vmul.f32 %v3470, %v3454
        %v3479 = vmul.f32 %v3471, %v3455
        %v3480 = vadd.f32 %v3472, -2.101024e-06
        %v3481 = vadd.f32 %v3473, -2.101024e-06
        %v3482 = vadd.f32 %v3474, -2.101024e-06
        %v3483 = vadd.f32 %v3475, -2.101024e-06
        %v3484 = vadd.f32 %v3476, -2.101024e-06
        %v3485 = vadd.f32 %v3477, -2.101024e-06
        %v3486 = vadd.f32 %v3478, -2.101024e-06
        %v3487 = vadd.f32 %v3479, -2.101024e-06
        %v3488 = vmul.f32 %v3480, %v3448
        %v3489 = vmul.f32 %v3481, %v3449
        %v3490 = vmul.f32 %v3482, %v3450
        %v3491 = vmul.f32 %v3483, %v3451
        %v3492 = vmul.f32 %v3484, %v3452
        %v3493 = vmul.f32 %v3485, %v3453
        %v3494 = vmul.f32 %v3486, %v3454
        %v3495 = vmul.f32 %v3487, %v3455
        %v3496 = vadd.f32 %v3488, -5.6925062e-05
        %v3497 = vadd.f32 %v3489, -5.6925062e-05
        %v3498 = vadd.f32 %v3490, -5.6925062e-05
        %v3499 = vadd.f32 %v3491, -5.6925062e-05
        %v3500 = vadd.f32 %v3492, -5.6925062e-05
        %v3501 = vadd.f32 %v3493, -5.6925062e-05
        %v3502 = vadd.f32 %v3494, -5.6925062e-05
        %v3503 = vadd.f32 %v3495, -5.6925062e-05
        %v3504 = vmul.f32 %v3496, %v3448
        %v3505 = vmul.f32 %v3497, %v3449
        %v3506 = vmul.f32 %v3498, %v3450
        %v3507 = vmul.f32 %v3499, %v3451
        %v3508 = vmul.f32 %v3500, %v3452
        %v3509 = vmul.f32 %v3501, %v3453
        %v3510 = vmul.f32 %v3502, %v3454
        %v3511 = vmul.f32 %v3503, %v3455
        %v3512 = vadd.f32 %v3504, -0.00073499064
        %v3513 = vadd.f32 %v3505, -0.00073499064
        %v3514 = vadd.f32 %v3506, -0.00073499064
        %v3515 = vadd.f32 %v3507, -0.00073499064
        %v3516 = vadd.f32 %v3508, -0.00073499064
        %v3517 = vadd.f32 %v3509, -0.00073499064
        %v3518 = vadd.f32 %v3510, -0.00073499064
        %v3519 = vadd.f32 %v3511, -0.00073499064
        %v3520 = vmul.f32 %v3512, %v3448
        %v3521 = vmul.f32 %v3513, %v3449
        %v3522 = vmul.f32 %v3514, %v3450
        %v3523 = vmul.f32 %v3515, %v3451
        %v3524 = vmul.f32 %v3516, %v3452
        %v3525 = vmul.f32 %v3517, %v3453
        %v3526 = vmul.f32 %v3518, %v3454
        %v3527 = vmul.f32 %v3519, %v3455
        %v3528 = vadd.f32 %v3520, -0.0029546
        %v3529 = vadd.f32 %v3521, -0.0029546
        %v3530 = vadd.f32 %v3522, -0.0029546
        %v3531 = vadd.f32 %v3523, -0.0029546
        %v3532 = vadd.f32 %v3524, -0.0029546
        %v3533 = vadd.f32 %v3525, -0.0029546
        %v3534 = vadd.f32 %v3526, -0.0029546
        %v3535 = vadd.f32 %v3527, -0.0029546
        %v3536 = vmul.f32 %v3528, %v3448
        %v3537 = vmul.f32 %v3529, %v3449
        %v3538 = vmul.f32 %v3530, %v3450
        %v3539 = vmul.f32 %v3531, %v3451
        %v3540 = vmul.f32 %v3532, %v3452
        %v3541 = vmul.f32 %v3533, %v3453
        %v3542 = vmul.f32 %v3534, %v3454
        %v3543 = vmul.f32 %v3535, %v3455
        %v3544 = vadd.f32 %v3536, -0.016096033
        %v3545 = vadd.f32 %v3537, -0.016096033
        %v3546 = vadd.f32 %v3538, -0.016096033
        %v3547 = vadd.f32 %v3539, -0.016096033
        %v3548 = vadd.f32 %v3540, -0.016096033
        %v3549 = vadd.f32 %v3541, -0.016096033
        %v3550 = vadd.f32 %v3542, -0.016096033
        %v3551 = vadd.f32 %v3543, -0.016096033
        %v3552 = vmul.f32 %v3448, -1.45660715e-05
        %v3553 = vmul.f32 %v3449, -1.45660715e-05
        %v3554 = vmul.f32 %v3450, -1.45660715e-05
        %v3555 = vmul.f32 %v3451, -1.45660715e-05
        %v3556 = vmul.f32 %v3452, -1.45660715e-05
        %v3557 = vmul.f32 %v3453, -1.45660715e-05
        %v3558 = vmul.f32 %v3454, -1.45660715e-05
        %v3559 = vmul.f32 %v3455, -1.45660715e-05
        %v3560 = vadd.f32 %v3552, -0.00021337405
        %v3561 = vadd.f32 %v3553, -0.00021337405
        %v3562 = vadd.f32 %v3554, -0.00021337405
        %v3563 = vadd.f32 %v3555, -0.00021337405
        %v3564 = vadd.f32 %v3556, -0.00021337405
        %v3565 = vadd.f32 %v3557, -0.00021337405
        %v3566 = vadd.f32 %v3558, -0.00021337405
        %v3567 = vadd.f32 %v3559, -0.00021337405
        %v3568 = vmul.f32 %v3560, %v3448
        %v3569 = vmul.f32 %v3561, %v3449
        %v3570 = vmul.f32 %v3562, %v3450
        %v3571 = vmul.f32 %v3563, %v3451
        %v3572 = vmul.f32 %v3564, %v3452
        %v3573 = vmul.f32 %v3565, %v3453
        %v3574 = vmul.f32 %v3566, %v3454
        %v3575 = vmul.f32 %v3567, %v3455
        %v3576 = vadd.f32 %v3568, -0.001682827
        %v3577 = vadd.f32 %v3569, -0.001682827
        %v3578 = vadd.f32 %v3570, -0.001682827
        %v3579 = vadd.f32 %v3571, -0.001682827
        %v3580 = vadd.f32 %v3572, -0.001682827
        %v3581 = vadd.f32 %v3573, -0.001682827
        %v3582 = vadd.f32 %v3574, -0.001682827
        %v3583 = vadd.f32 %v3575, -0.001682827
        %v3584 = vmul.f32 %v3576, %v3448
        %v3585 = vmul.f32 %v3577, %v3449
        %v3586 = vmul.f32 %v3578, %v3450
        %v3587 = vmul.f32 %v3579, %v3451
        %v3588 = vmul.f32 %v3580, %v3452
        %v3589 = vmul.f32 %v3581, %v3453
        %v3590 = vmul.f32 %v3582, %v3454
        %v3591 = vmul.f32 %v3583, %v3455
        %v3592 = vadd.f32 %v3584, -0.0073733293
        %v3593 = vadd.f32 %v3585, -0.0073733293
        %v3594 = vadd.f32 %v3586, -0.0073733293
        %v3595 = vadd.f32 %v3587, -0.0073733293
        %v3596 = vadd.f32 %v3588, -0.0073733293
        %v3597 = vadd.f32 %v3589, -0.0073733293
        %v3598 = vadd.f32 %v3590, -0.0073733293
        %v3599 = vadd.f32 %v3591, -0.0073733293
        %v3600 = vmul.f32 %v3592, %v3448
        %v3601 = vmul.f32 %v3593, %v3449
        %v3602 = vmul.f32 %v3594, %v3450
        %v3603 = vmul.f32 %v3595, %v3451
        %v3604 = vmul.f32 %v3596, %v3452
        %v3605 = vmul.f32 %v3597, %v3453
        %v3606 = vmul.f32 %v3598, %v3454
        %v3607 = vmul.f32 %v3599, %v3455
        %v3608 = vadd.f32 %v3600, -0.014264739
        %v3609 = vadd.f32 %v3601, -0.014264739
        %v3610 = vadd.f32 %v3602, -0.014264739
        %v3611 = vadd.f32 %v3603, -0.014264739
        %v3612 = vadd.f32 %v3604, -0.014264739
        %v3613 = vadd.f32 %v3605, -0.014264739
        %v3614 = vadd.f32 %v3606, -0.014264739
        %v3615 = vadd.f32 %v3607, -0.014264739
        %v3616 = vmul.f32 %v3440, %v3544
        %v3617 = vmul.f32 %v3441, %v3545
        %v3618 = vmul.f32 %v3442, %v3546
        %v3619 = vmul.f32 %v3443, %v3547
        %v3620 = vmul.f32 %v3444, %v3548
        %v3621 = vmul.f32 %v3445, %v3549
        %v3622 = vmul.f32 %v3446, %v3550
        %v3623 = vmul.f32 %v3447, %v3551
        %v3624 = vrcp.pop %v3608
        %v3625 = vrcp.pop %v3609
        %v3626 = vrcp.pop %v3610
        %v3627 = vrcp.pop %v3611
        %v3628 = vrcp.pop %v3612
        %v3629 = vrcp.pop %v3613
        %v3630 = vrcp.pop %v3614
        %v3631 = vrcp.pop %v3615
        %v3632 = vmul.f32 %v3616, %v3624
        %v3633 = vmul.f32 %v3617, %v3625
        %v3634 = vmul.f32 %v3618, %v3626
        %v3635 = vmul.f32 %v3619, %v3627
        %v3636 = vmul.f32 %v3620, %v3628
        %v3637 = vmul.f32 %v3621, %v3629
        %v3638 = vmul.f32 %v3622, %v3630
        %v3639 = vmul.f32 %v3623, %v3631
        %v3640 = vadd.f32 %v3632, 1.0
        %v3641 = vadd.f32 %v3633, 1.0
        %v3642 = vadd.f32 %v3634, 1.0
        %v3643 = vadd.f32 %v3635, 1.0
        %v3644 = vadd.f32 %v3636, 1.0
        %v3645 = vadd.f32 %v3637, 1.0
        %v3646 = vadd.f32 %v3638, 1.0
        %v3647 = vadd.f32 %v3639, 1.0
        %v3648 = vmul.f32 %v3416, %v3640
        %v3649 = vmul.f32 %v3417, %v3641
        %v3650 = vmul.f32 %v3418, %v3642
        %v3651 = vmul.f32 %v3419, %v3643
        %v3652 = vmul.f32 %v3420, %v3644
        %v3653 = vmul.f32 %v3421, %v3645
        %v3654 = vmul.f32 %v3422, %v3646
        %v3655 = vmul.f32 %v3423, %v3647
        %v3656 = vpack.c.bf16 %v3650, %v3648
        %v3657 = vpack.c.bf16 %v3651, %v3649
        %v3658 = vpack.c.bf16 %v3654, %v3652
        %v3659 = vpack.c.bf16 %v3655, %v3653
        %v3668 = vunpack.c.l.b16 %v426
        %v3669 = vunpack.c.l.b16 %v427
        %v3670 = vunpack.c.l.b16 %v428
        %v3671 = vunpack.c.l.b16 %v429
        %v3672 = vunpack.c.l.b16 %v430
        %v3673 = vunpack.c.l.b16 %v431
        %v3674 = vunpack.c.l.b16 %v432
        %v3675 = vunpack.c.l.b16 %v433
        %v3676 = vpack.c.b16 %v3669, %v3668
        %v3677 = vpack.c.b16 %v3671, %v3670
        %v3678 = vpack.c.b16 %v3673, %v3672
        %v3679 = vpack.c.b16 %v3675, %v3674
        %3684 = vrot.lane.b32.xlu0 %v3656, 127
        %v3685 = vpop.permute.xlu0 %3684
        %3686 = vrot.lane.b32.xlu0 %v3657, 127
        %v3687 = vpop.permute.xlu0 %3686
        %3688 = vrot.lane.b32.xlu0 %v3658, 127
        %v3689 = vpop.permute.xlu0 %3688
        %3690 = vrot.lane.b32.xlu0 %v3659, 127
        %v3691 = vpop.permute.xlu0 %3690
        %vm3692 = vcmask 1039360
        %v3693 = vsel %vm3692, %v3685, %v3687
        %v3694 = vsel %vm3692, %v3689, %v3691
        %vm3699 = vcmask 261120
        %v3701 = vsel %vm3699, %v3676, 0
        %v3704 = vsel %vm3699, %v3677, 0
        %v3707 = vsel %vm3699, %v3678, 0
        %v3710 = vsel %vm3699, %v3679, 0
        %3712 = vmatprep.subr.bf16.mxu0 0
        %3713 = vmatpush1.bf16.msra.mxu0 0
        %3714 = vmatprep.subr.bf16.mxu0 0
        %3715 = vmatpush1.bf16.msra.mxu0 0
        %3716 = vmatprep.subr.bf16.mxu0 0
        %3717 = vmatpush1.bf16.msra.mxu0 0
        %3718 = vmatprep.subr.bf16.mxu0 0
        %3719 = vmatpush1.bf16.msra.mxu0 0
        %3720 = vmatprep.subr.bf16.mxu0 0
        %3721 = vmatpush1.bf16.msra.mxu0 0
        %3722 = vmatprep.subr.bf16.mxu0 0
        %3723 = vmatpush1.bf16.msra.mxu0 0
        %3724 = vmatprep.subr.bf16.mxu0 %v3691
        %3725 = vmatpush1.bf16.msra.mxu0 %v3694
        %3726 = vmatprep.subr.bf16.mxu0 %v3687
        %3727 = vmatpush1.bf16.msra.mxu0 %v3693
        %3728 = vmatprep.subr.bf16.mxu0 0
        %3729 = vmatpush2.bf16.msra.mxu0 0
        %3730 = vmatprep.subr.bf16.mxu0 0
        %3731 = vmatpush2.bf16.msra.mxu0 0
        %3732 = vmatprep.subr.bf16.mxu0 0
        %3733 = vmatpush2.bf16.msra.mxu0 0
        %3734 = vmatprep.subr.bf16.mxu0 0
        %3735 = vmatpush2.bf16.msra.mxu0 0
        %3736 = vmatprep.subr.bf16.mxu0 0
        %3737 = vmatpush2.bf16.msra.mxu0 0
        %3738 = vmatprep.subr.bf16.mxu0 0
        %3739 = vmatpush2.bf16.msra.mxu0 0
        %3740 = vmatprep.subr.bf16.mxu0 0
        %3741 = vmatpush2.bf16.msra.mxu0 0
        %3742 = vmatprep.subr.bf16.mxu0 0
        %3743 = vmatpush2.bf16.msra.mxu0 0
        %3744 = vmatprep.mubr.bf16.mxu0 0
        %3745 = vmatmul.mubr.bf16.gmra.mxu0 %v3701
        %v3746 = vpop.f32.mrf.mxu0
        %v3747 = vadd.f32 0.0, %v3746
        %v3748 = vpop.f32.mrf.mxu0
        %v3749 = vadd.f32 0.0, %v3748
        %v3750 = vpop.f32.mrf.mxu0
        %v3751 = vadd.f32 0.0, %v3750
        %v3752 = vpop.f32.mrf.mxu0
        %v3753 = vadd.f32 0.0, %v3752
        %3754 = vmatprep.mubr.bf16.mxu0 0
        %3755 = vmatmul.mubr.bf16.gmra.mxu0 %v3704
        %v3756 = vpop.f32.mrf.mxu0
        %v3757 = vadd.f32 0.0, %v3756
        %v3758 = vpop.f32.mrf.mxu0
        %v3759 = vadd.f32 0.0, %v3758
        %v3760 = vpop.f32.mrf.mxu0
        %v3761 = vadd.f32 0.0, %v3760
        %v3762 = vpop.f32.mrf.mxu0
        %v3763 = vadd.f32 0.0, %v3762
        %3764 = vmatprep.mubr.bf16.mxu0 0
        %3765 = vmatmul.mubr.bf16.gmra.mxu0 %v3707
        %v3766 = vpop.f32.mrf.mxu0
        %v3767 = vadd.f32 0.0, %v3766
        %v3768 = vpop.f32.mrf.mxu0
        %v3769 = vadd.f32 0.0, %v3768
        %v3770 = vpop.f32.mrf.mxu0
        %v3771 = vadd.f32 0.0, %v3770
        %v3772 = vpop.f32.mrf.mxu0
        %v3773 = vadd.f32 0.0, %v3772
        %3774 = vmatprep.mubr.bf16.mxu0 0
        %3775 = vmatmul.mubr.bf16.gmra.mxu0 %v3710
        %v3776 = vpop.f32.mrf.mxu0
        %v3777 = vadd.f32 0.0, %v3776
        %v3778 = vpop.f32.mrf.mxu0
        %v3779 = vadd.f32 0.0, %v3778
        %v3780 = vpop.f32.mrf.mxu0
        %v3781 = vadd.f32 0.0, %v3780
        %v3782 = vpop.f32.mrf.mxu0
        %v3783 = vadd.f32 0.0, %v3782
        %3784 = vdwg.mxu0
        %v3793 = vunpack.c.l.b16 %v418
        %v3794 = vunpack.c.l.b16 %v419
        %v3795 = vunpack.c.l.b16 %v420
        %v3796 = vunpack.c.l.b16 %v421
        %v3797 = vunpack.c.l.b16 %v422
        %v3798 = vunpack.c.l.b16 %v423
        %v3799 = vunpack.c.l.b16 %v424
        %v3800 = vunpack.c.l.b16 %v425
        %v3801 = vpack.c.b16 %v3794, %v3793
        %v3802 = vpack.c.b16 %v3796, %v3795
        %v3803 = vpack.c.b16 %v3798, %v3797
        %v3804 = vpack.c.b16 %v3800, %v3799
        %v3806 = vsel %vm3699, %v3801, 0
        %v3809 = vsel %vm3699, %v3802, 0
        %v3812 = vsel %vm3699, %v3803, 0
        %v3815 = vsel %vm3699, %v3804, 0
        %3817 = vmatprep.subr.bf16.mxu0 0
        %3818 = vmatpush1.bf16.msra.mxu0 0
        %3819 = vmatprep.subr.bf16.mxu0 0
        %3820 = vmatpush1.bf16.msra.mxu0 0
        %3821 = vmatprep.subr.bf16.mxu0 0
        %3822 = vmatpush1.bf16.msra.mxu0 0
        %3823 = vmatprep.subr.bf16.mxu0 0
        %3824 = vmatpush1.bf16.msra.mxu0 0
        %3825 = vmatprep.subr.bf16.mxu0 0
        %3826 = vmatpush1.bf16.msra.mxu0 0
        %3827 = vmatprep.subr.bf16.mxu0 0
        %3828 = vmatpush1.bf16.msra.mxu0 0
        %3829 = vmatprep.subr.bf16.mxu0 %v3659
        %3830 = vmatpush1.bf16.msra.mxu0 %v3658
        %3831 = vmatprep.subr.bf16.mxu0 %v3657
        %3832 = vmatpush1.bf16.msra.mxu0 %v3656
        %3833 = vmatprep.subr.bf16.mxu0 0
        %3834 = vmatpush2.bf16.msra.mxu0 0
        %3835 = vmatprep.subr.bf16.mxu0 0
        %3836 = vmatpush2.bf16.msra.mxu0 0
        %3837 = vmatprep.subr.bf16.mxu0 0
        %3838 = vmatpush2.bf16.msra.mxu0 0
        %3839 = vmatprep.subr.bf16.mxu0 0
        %3840 = vmatpush2.bf16.msra.mxu0 0
        %3841 = vmatprep.subr.bf16.mxu0 0
        %3842 = vmatpush2.bf16.msra.mxu0 0
        %3843 = vmatprep.subr.bf16.mxu0 0
        %3844 = vmatpush2.bf16.msra.mxu0 0
        %3845 = vmatprep.subr.bf16.mxu0 0
        %3846 = vmatpush2.bf16.msra.mxu0 0
        %3847 = vmatprep.subr.bf16.mxu0 0
        %3848 = vmatpush2.bf16.msra.mxu0 0
        %3849 = vmatprep.mubr.bf16.mxu0 0
        %3850 = vmatmul.mubr.bf16.gmra.mxu0 %v3806
        %v3851 = vpop.f32.mrf.mxu0
        %v3852 = vadd.f32 %v3747, %v3851
        %v3853 = vpop.f32.mrf.mxu0
        %v3854 = vadd.f32 %v3749, %v3853
        %v3855 = vpop.f32.mrf.mxu0
        %v3856 = vadd.f32 %v3751, %v3855
        %v3857 = vpop.f32.mrf.mxu0
        %v3858 = vadd.f32 %v3753, %v3857
        %3859 = vmatprep.mubr.bf16.mxu0 0
        %3860 = vmatmul.mubr.bf16.gmra.mxu0 %v3809
        %v3861 = vpop.f32.mrf.mxu0
        %v3862 = vadd.f32 %v3757, %v3861
        %v3863 = vpop.f32.mrf.mxu0
        %v3864 = vadd.f32 %v3759, %v3863
        %v3865 = vpop.f32.mrf.mxu0
        %v3866 = vadd.f32 %v3761, %v3865
        %v3867 = vpop.f32.mrf.mxu0
        %v3868 = vadd.f32 %v3763, %v3867
        %3869 = vmatprep.mubr.bf16.mxu0 0
        %3870 = vmatmul.mubr.bf16.gmra.mxu0 %v3812
        %v3871 = vpop.f32.mrf.mxu0
        %v3872 = vadd.f32 %v3767, %v3871
        %v3873 = vpop.f32.mrf.mxu0
        %v3874 = vadd.f32 %v3769, %v3873
        %v3875 = vpop.f32.mrf.mxu0
        %v3876 = vadd.f32 %v3771, %v3875
        %v3877 = vpop.f32.mrf.mxu0
        %v3878 = vadd.f32 %v3773, %v3877
        %3879 = vmatprep.mubr.bf16.mxu0 0
        %3880 = vmatmul.mubr.bf16.gmra.mxu0 %v3815
        %v3881 = vpop.f32.mrf.mxu0
        %v3882 = vadd.f32 %v3777, %v3881
        %v3883 = vpop.f32.mrf.mxu0
        %v3884 = vadd.f32 %v3779, %v3883
        %v3885 = vpop.f32.mrf.mxu0
        %v3886 = vadd.f32 %v3781, %v3885
        %v3887 = vpop.f32.mrf.mxu0
        %v3888 = vadd.f32 %v3783, %v3887
        %3889 = vdwg.mxu0
        %v3898 = vunpack.c.l.b16 %v434
        %v3899 = vunpack.c.l.b16 %v435
        %v3900 = vunpack.c.l.b16 %v436
        %v3901 = vunpack.c.l.b16 %v437
        %v3902 = vunpack.c.l.b16 %v438
        %v3903 = vunpack.c.l.b16 %v439
        %v3904 = vunpack.c.l.b16 %v440
        %v3905 = vunpack.c.l.b16 %v441
        %v3906 = vpack.c.b16 %v3899, %v3898
        %v3907 = vpack.c.b16 %v3901, %v3900
        %v3908 = vpack.c.b16 %v3903, %v3902
        %v3909 = vpack.c.b16 %v3905, %v3904
        %3910 = vrot.lane.b32.xlu0 %v3656, 126
        %v3911 = vpop.permute.xlu0 %3910
        %3912 = vrot.lane.b32.xlu0 %v3657, 126
        %v3913 = vpop.permute.xlu0 %3912
        %3914 = vrot.lane.b32.xlu0 %v3658, 126
        %v3915 = vpop.permute.xlu0 %3914
        %3916 = vrot.lane.b32.xlu0 %v3659, 126
        %v3917 = vpop.permute.xlu0 %3916
        %vm3918 = vcmask 1031168
        %v3919 = vsel %vm3918, %v3911, %v3913
        %v3920 = vsel %vm3918, %v3915, %v3917
        %v3926 = vsel %vm3699, %v3906, 0
        %v3929 = vsel %vm3699, %v3907, 0
        %v3932 = vsel %vm3699, %v3908, 0
        %v3935 = vsel %vm3699, %v3909, 0
        %3937 = vmatprep.subr.bf16.mxu0 0
        %3938 = vmatpush1.bf16.msra.mxu0 0
        %3939 = vmatprep.subr.bf16.mxu0 0
        %3940 = vmatpush1.bf16.msra.mxu0 0
        %3941 = vmatprep.subr.bf16.mxu0 0
        %3942 = vmatpush1.bf16.msra.mxu0 0
        %3943 = vmatprep.subr.bf16.mxu0 0
        %3944 = vmatpush1.bf16.msra.mxu0 0
        %3945 = vmatprep.subr.bf16.mxu0 0
        %3946 = vmatpush1.bf16.msra.mxu0 0
        %3947 = vmatprep.subr.bf16.mxu0 0
        %3948 = vmatpush1.bf16.msra.mxu0 0
        %3949 = vmatprep.subr.bf16.mxu0 %v3917
        %3950 = vmatpush1.bf16.msra.mxu0 %v3920
        %3951 = vmatprep.subr.bf16.mxu0 %v3913
        %3952 = vmatpush1.bf16.msra.mxu0 %v3919
        %3953 = vmatprep.subr.bf16.mxu0 0
        %3954 = vmatpush2.bf16.msra.mxu0 0
        %3955 = vmatprep.subr.bf16.mxu0 0
        %3956 = vmatpush2.bf16.msra.mxu0 0
        %3957 = vmatprep.subr.bf16.mxu0 0
        %3958 = vmatpush2.bf16.msra.mxu0 0
        %3959 = vmatprep.subr.bf16.mxu0 0
        %3960 = vmatpush2.bf16.msra.mxu0 0
        %3961 = vmatprep.subr.bf16.mxu0 0
        %3962 = vmatpush2.bf16.msra.mxu0 0
        %3963 = vmatprep.subr.bf16.mxu0 0
        %3964 = vmatpush2.bf16.msra.mxu0 0
        %3965 = vmatprep.subr.bf16.mxu0 0
        %3966 = vmatpush2.bf16.msra.mxu0 0
        %3967 = vmatprep.subr.bf16.mxu0 0
        %3968 = vmatpush2.bf16.msra.mxu0 0
        %3969 = vmatprep.mubr.bf16.mxu0 0
        %3970 = vmatmul.mubr.bf16.gmra.mxu0 %v3926
        %v3971 = vpop.f32.mrf.mxu0
        %v3972 = vadd.f32 0.0, %v3971
        %v3973 = vpop.f32.mrf.mxu0
        %v3974 = vadd.f32 0.0, %v3973
        %v3975 = vpop.f32.mrf.mxu0
        %v3976 = vadd.f32 0.0, %v3975
        %v3977 = vpop.f32.mrf.mxu0
        %v3978 = vadd.f32 0.0, %v3977
        %3979 = vmatprep.mubr.bf16.mxu0 0
        %3980 = vmatmul.mubr.bf16.gmra.mxu0 %v3929
        %v3981 = vpop.f32.mrf.mxu0
        %v3982 = vadd.f32 0.0, %v3981
        %v3983 = vpop.f32.mrf.mxu0
        %v3984 = vadd.f32 0.0, %v3983
        %v3985 = vpop.f32.mrf.mxu0
        %v3986 = vadd.f32 0.0, %v3985
        %v3987 = vpop.f32.mrf.mxu0
        %v3988 = vadd.f32 0.0, %v3987
        %3989 = vmatprep.mubr.bf16.mxu0 0
        %3990 = vmatmul.mubr.bf16.gmra.mxu0 %v3932
        %v3991 = vpop.f32.mrf.mxu0
        %v3992 = vadd.f32 0.0, %v3991
        %v3993 = vpop.f32.mrf.mxu0
        %v3994 = vadd.f32 0.0, %v3993
        %v3995 = vpop.f32.mrf.mxu0
        %v3996 = vadd.f32 0.0, %v3995
        %v3997 = vpop.f32.mrf.mxu0
        %v3998 = vadd.f32 0.0, %v3997
        %3999 = vmatprep.mubr.bf16.mxu0 0
        %4000 = vmatmul.mubr.bf16.gmra.mxu0 %v3935
        %v4001 = vpop.f32.mrf.mxu0
        %v4002 = vadd.f32 0.0, %v4001
        %v4003 = vpop.f32.mrf.mxu0
        %v4004 = vadd.f32 0.0, %v4003
        %v4005 = vpop.f32.mrf.mxu0
        %v4006 = vadd.f32 0.0, %v4005
        %v4007 = vpop.f32.mrf.mxu0
        %v4008 = vadd.f32 0.0, %v4007
        %4009 = vdwg.mxu0
        %v4010 = vadd.f32 %v3852, %v3972
        %v4011 = vadd.f32 %v3854, %v3974
        %v4012 = vadd.f32 %v3856, %v3976
        %v4013 = vadd.f32 %v3858, %v3978
        %v4014 = vadd.f32 %v3862, %v3982
        %v4015 = vadd.f32 %v3864, %v3984
        %v4016 = vadd.f32 %v3866, %v3986
        %v4017 = vadd.f32 %v3868, %v3988
        %v4018 = vadd.f32 %v3872, %v3992
        %v4019 = vadd.f32 %v3874, %v3994
        %v4020 = vadd.f32 %v3876, %v3996
        %v4021 = vadd.f32 %v3878, %v3998
        %v4022 = vadd.f32 %v3882, %v4002
        %v4023 = vadd.f32 %v3884, %v4004
        %v4024 = vadd.f32 %v3886, %v4006
        %v4025 = vadd.f32 %v3888, %v4008
        %4027 = vset.pattern.permute.xlu0 0
        %4028 = vperm.xlu0 %4027, %v442
        %v4029 = vpop.permute.xlu0 %4028
        %4032 = vset.pattern.permute.xlu0 0
        %4033 = vperm.xlu0 %4032, %v443
        %v4034 = vpop.permute.xlu0 %4033
        %4037 = vset.pattern.permute.xlu0 0
        %4038 = vperm.xlu0 %4037, %v444
        %v4039 = vpop.permute.xlu0 %4038
        %4042 = vset.pattern.permute.xlu0 0
        %4043 = vperm.xlu0 %4042, %v445
        %v4044 = vpop.permute.xlu0 %4043
        %4047 = vset.pattern.permute.xlu0 0
        %4048 = vperm.xlu0 %4047, %v446
        %v4049 = vpop.permute.xlu0 %4048
        %4052 = vset.pattern.permute.xlu0 0
        %4053 = vperm.xlu0 %4052, %v447
        %v4054 = vpop.permute.xlu0 %4053
        %4057 = vset.pattern.permute.xlu0 0
        %4058 = vperm.xlu0 %4057, %v448
        %v4059 = vpop.permute.xlu0 %4058
        %4062 = vset.pattern.permute.xlu0 0
        %4063 = vperm.xlu0 %4062, %v449
        %v4064 = vpop.permute.xlu0 %4063
        %v4066 = vadd.f32 %v4010, %v4029
        %v4067 = vadd.f32 %v4011, %v4029
        %v4068 = vadd.f32 %v4012, %v4034
        %v4069 = vadd.f32 %v4013, %v4034
        %v4070 = vadd.f32 %v4014, %v4039
        %v4071 = vadd.f32 %v4015, %v4039
        %v4072 = vadd.f32 %v4016, %v4044
        %v4073 = vadd.f32 %v4017, %v4044
        %v4074 = vadd.f32 %v4018, %v4049
        %v4075 = vadd.f32 %v4019, %v4049
        %v4076 = vadd.f32 %v4020, %v4054
        %v4077 = vadd.f32 %v4021, %v4054
        %v4078 = vadd.f32 %v4022, %v4059
        %v4079 = vadd.f32 %v4023, %v4059
        %v4080 = vadd.f32 %v4024, %v4064
        %v4081 = vadd.f32 %v4025, %v4064
        %v4082 = vsub.f32 0.0, %v4066
        %v4083 = vsub.f32 0.0, %v4067
        %v4084 = vsub.f32 0.0, %v4068
        %v4085 = vsub.f32 0.0, %v4069
        %v4086 = vsub.f32 0.0, %v4070
        %v4087 = vsub.f32 0.0, %v4071
        %v4088 = vsub.f32 0.0, %v4072
        %v4089 = vsub.f32 0.0, %v4073
        %v4090 = vsub.f32 0.0, %v4074
        %v4091 = vsub.f32 0.0, %v4075
        %v4092 = vsub.f32 0.0, %v4076
        %v4093 = vsub.f32 0.0, %v4077
        %v4094 = vsub.f32 0.0, %v4078
        %v4095 = vsub.f32 0.0, %v4079
        %v4096 = vsub.f32 0.0, %v4080
        %v4097 = vsub.f32 0.0, %v4081
        %v4098 = vmul.f32 %v4082, 1.442695
        %v4099 = vpow.pop %v4098
        %v4100 = vmul.f32 %v4083, 1.442695
        %v4101 = vpow.pop %v4100
        %v4102 = vmul.f32 %v4084, 1.442695
        %v4103 = vpow.pop %v4102
        %v4104 = vmul.f32 %v4085, 1.442695
        %v4105 = vpow.pop %v4104
        %v4106 = vmul.f32 %v4086, 1.442695
        %v4107 = vpow.pop %v4106
        %v4108 = vmul.f32 %v4087, 1.442695
        %v4109 = vpow.pop %v4108
        %v4110 = vmul.f32 %v4088, 1.442695
        %v4111 = vpow.pop %v4110
        %v4112 = vmul.f32 %v4089, 1.442695
        %v4113 = vpow.pop %v4112
        %v4114 = vmul.f32 %v4090, 1.442695
        %v4115 = vpow.pop %v4114
        %v4116 = vmul.f32 %v4091, 1.442695
        %v4117 = vpow.pop %v4116
        %v4118 = vmul.f32 %v4092, 1.442695
        %v4119 = vpow.pop %v4118
        %v4120 = vmul.f32 %v4093, 1.442695
        %v4121 = vpow.pop %v4120
        %v4122 = vmul.f32 %v4094, 1.442695
        %v4123 = vpow.pop %v4122
        %v4124 = vmul.f32 %v4095, 1.442695
        %v4125 = vpow.pop %v4124
        %v4126 = vmul.f32 %v4096, 1.442695
        %v4127 = vpow.pop %v4126
        %v4128 = vmul.f32 %v4097, 1.442695
        %v4129 = vpow.pop %v4128
        %v4130 = vadd.f32 %v4099, 1.0
        %v4131 = vadd.f32 %v4101, 1.0
        %v4132 = vadd.f32 %v4103, 1.0
        %v4133 = vadd.f32 %v4105, 1.0
        %v4134 = vadd.f32 %v4107, 1.0
        %v4135 = vadd.f32 %v4109, 1.0
        %v4136 = vadd.f32 %v4111, 1.0
        %v4137 = vadd.f32 %v4113, 1.0
        %v4138 = vadd.f32 %v4115, 1.0
        %v4139 = vadd.f32 %v4117, 1.0
        %v4140 = vadd.f32 %v4119, 1.0
        %v4141 = vadd.f32 %v4121, 1.0
        %v4142 = vadd.f32 %v4123, 1.0
        %v4143 = vadd.f32 %v4125, 1.0
        %v4144 = vadd.f32 %v4127, 1.0
        %v4145 = vadd.f32 %v4129, 1.0
        %v4146 = vrcp.pop %v4130
        %v4147 = vrcp.pop %v4131
        %v4148 = vrcp.pop %v4132
        %v4149 = vrcp.pop %v4133
        %v4150 = vrcp.pop %v4134
        %v4151 = vrcp.pop %v4135
        %v4152 = vrcp.pop %v4136
        %v4153 = vrcp.pop %v4137
        %v4154 = vrcp.pop %v4138
        %v4155 = vrcp.pop %v4139
        %v4156 = vrcp.pop %v4140
        %v4157 = vrcp.pop %v4141
        %v4158 = vrcp.pop %v4142
        %v4159 = vrcp.pop %v4143
        %v4160 = vrcp.pop %v4144
        %v4161 = vrcp.pop %v4145
        %v4162 = vmul.f32 %v4066, %v4146
        %v4163 = vmul.f32 %v4067, %v4147
        %v4164 = vmul.f32 %v4068, %v4148
        %v4165 = vmul.f32 %v4069, %v4149
        %v4166 = vmul.f32 %v4070, %v4150
        %v4167 = vmul.f32 %v4071, %v4151
        %v4168 = vmul.f32 %v4072, %v4152
        %v4169 = vmul.f32 %v4073, %v4153
        %v4170 = vmul.f32 %v4074, %v4154
        %v4171 = vmul.f32 %v4075, %v4155
        %v4172 = vmul.f32 %v4076, %v4156
        %v4173 = vmul.f32 %v4077, %v4157
        %v4174 = vmul.f32 %v4078, %v4158
        %v4175 = vmul.f32 %v4079, %v4159
        %v4176 = vmul.f32 %v4080, %v4160
        %v4177 = vmul.f32 %v4081, %v4161
        %v4178 = vpack.c.bf16 %v4164, %v4162
        %v4179 = vpack.c.bf16 %v4165, %v4163
        %v4180 = vpack.c.bf16 %v4168, %v4166
        %v4181 = vpack.c.bf16 %v4169, %v4167
        %v4182 = vpack.c.bf16 %v4172, %v4170
        %v4183 = vpack.c.bf16 %v4173, %v4171
        %v4184 = vpack.c.bf16 %v4176, %v4174
        %v4185 = vpack.c.bf16 %v4177, %v4175
        %v4194 = vunpack.c.l.b16 %v458
        %v4195 = vunpack.c.l.b16 %v459
        %v4196 = vunpack.c.l.b16 %v460
        %v4197 = vunpack.c.l.b16 %v461
        %v4198 = vunpack.c.l.b16 %v462
        %v4199 = vunpack.c.l.b16 %v463
        %v4200 = vunpack.c.l.b16 %v464
        %v4201 = vunpack.c.l.b16 %v465
        %v4202 = vpack.c.b16 %v4195, %v4194
        %v4203 = vpack.c.b16 %v4197, %v4196
        %v4204 = vpack.c.b16 %v4199, %v4198
        %v4205 = vpack.c.b16 %v4201, %v4200
        %4214 = vrot.lane.b32.xlu0 %v4178, 126
        %v4215 = vpop.permute.xlu0 %4214
        %4216 = vrot.lane.b32.xlu0 %v4179, 126
        %v4217 = vpop.permute.xlu0 %4216
        %4218 = vrot.lane.b32.xlu0 %v4180, 126
        %v4219 = vpop.permute.xlu0 %4218
        %4220 = vrot.lane.b32.xlu0 %v4181, 126
        %v4221 = vpop.permute.xlu0 %4220
        %4222 = vrot.lane.b32.xlu0 %v4182, 126
        %v4223 = vpop.permute.xlu0 %4222
        %4224 = vrot.lane.b32.xlu0 %v4183, 126
        %v4225 = vpop.permute.xlu0 %4224
        %4226 = vrot.lane.b32.xlu0 %v4184, 126
        %v4227 = vpop.permute.xlu0 %4226
        %4228 = vrot.lane.b32.xlu0 %v4185, 126
        %v4229 = vpop.permute.xlu0 %4228
        %v4230 = vsel %vm3918, %v4215, %v4217
        %v4231 = vsel %vm3918, %v4219, %v4221
        %v4232 = vsel %vm3918, %v4223, %v4225
        %v4233 = vsel %vm3918, %v4227, %v4229
        %vm4242 = vcmask 523264
        %v4244 = vsel %vm4242, %v4202, 0
        %v4247 = vsel %vm4242, %v4203, 0
        %v4250 = vsel %vm4242, %v4204, 0
        %v4253 = vsel %vm4242, %v4205, 0
        %4255 = vmatprep.subr.bf16.mxu0 0
        %4256 = vmatpush1.bf16.msra.mxu0 0
        %4257 = vmatprep.subr.bf16.mxu0 0
        %4258 = vmatpush1.bf16.msra.mxu0 0
        %4259 = vmatprep.subr.bf16.mxu0 0
        %4260 = vmatpush1.bf16.msra.mxu0 0
        %4261 = vmatprep.subr.bf16.mxu0 0
        %4262 = vmatpush1.bf16.msra.mxu0 0
        %4263 = vmatprep.subr.bf16.mxu0 %v4229
        %4264 = vmatpush1.bf16.msra.mxu0 %v4233
        %4265 = vmatprep.subr.bf16.mxu0 %v4225
        %4266 = vmatpush1.bf16.msra.mxu0 %v4232
        %4267 = vmatprep.subr.bf16.mxu0 %v4221
        %4268 = vmatpush1.bf16.msra.mxu0 %v4231
        %4269 = vmatprep.subr.bf16.mxu0 %v4217
        %4270 = vmatpush1.bf16.msra.mxu0 %v4230
        %4271 = vmatprep.subr.bf16.mxu0 0
        %4272 = vmatpush2.bf16.msra.mxu0 0
        %4273 = vmatprep.subr.bf16.mxu0 0
        %4274 = vmatpush2.bf16.msra.mxu0 0
        %4275 = vmatprep.subr.bf16.mxu0 0
        %4276 = vmatpush2.bf16.msra.mxu0 0
        %4277 = vmatprep.subr.bf16.mxu0 0
        %4278 = vmatpush2.bf16.msra.mxu0 0
        %4279 = vmatprep.subr.bf16.mxu0 0
        %4280 = vmatpush2.bf16.msra.mxu0 0
        %4281 = vmatprep.subr.bf16.mxu0 0
        %4282 = vmatpush2.bf16.msra.mxu0 0
        %4283 = vmatprep.subr.bf16.mxu0 0
        %4284 = vmatpush2.bf16.msra.mxu0 0
        %4285 = vmatprep.subr.bf16.mxu0 0
        %4286 = vmatpush2.bf16.msra.mxu0 0
        %4287 = vmatprep.mubr.bf16.mxu0 0
        %4288 = vmatmul.mubr.bf16.gmra.mxu0 %v4244
        %v4289 = vpop.f32.mrf.mxu0
        %v4290 = vadd.f32 0.0, %v4289
        %v4291 = vpop.f32.mrf.mxu0
        %v4292 = vadd.f32 0.0, %v4291
        %v4293 = vpop.f32.mrf.mxu0
        %v4294 = vadd.f32 0.0, %v4293
        %v4295 = vpop.f32.mrf.mxu0
        %v4296 = vadd.f32 0.0, %v4295
        %4297 = vmatprep.mubr.bf16.mxu0 0
        %4298 = vmatmul.mubr.bf16.gmra.mxu0 %v4247
        %v4299 = vpop.f32.mrf.mxu0
        %v4300 = vadd.f32 0.0, %v4299
        %v4301 = vpop.f32.mrf.mxu0
        %v4302 = vadd.f32 0.0, %v4301
        %v4303 = vpop.f32.mrf.mxu0
        %v4304 = vadd.f32 0.0, %v4303
        %v4305 = vpop.f32.mrf.mxu0
        %v4306 = vadd.f32 0.0, %v4305
        %4307 = vmatprep.mubr.bf16.mxu0 0
        %4308 = vmatmul.mubr.bf16.gmra.mxu0 %v4250
        %v4309 = vpop.f32.mrf.mxu0
        %v4310 = vadd.f32 0.0, %v4309
        %v4311 = vpop.f32.mrf.mxu0
        %v4312 = vadd.f32 0.0, %v4311
        %v4313 = vpop.f32.mrf.mxu0
        %v4314 = vadd.f32 0.0, %v4313
        %v4315 = vpop.f32.mrf.mxu0
        %v4316 = vadd.f32 0.0, %v4315
        %4317 = vmatprep.mubr.bf16.mxu0 0
        %4318 = vmatmul.mubr.bf16.gmra.mxu0 %v4253
        %v4319 = vpop.f32.mrf.mxu0
        %v4320 = vadd.f32 0.0, %v4319
        %v4321 = vpop.f32.mrf.mxu0
        %v4322 = vadd.f32 0.0, %v4321
        %v4323 = vpop.f32.mrf.mxu0
        %v4324 = vadd.f32 0.0, %v4323
        %v4325 = vpop.f32.mrf.mxu0
        %v4326 = vadd.f32 0.0, %v4325
        %4327 = vdwg.mxu0
        %v4336 = vunpack.c.l.b16 %v450
        %v4337 = vunpack.c.l.b16 %v451
        %v4338 = vunpack.c.l.b16 %v452
        %v4339 = vunpack.c.l.b16 %v453
        %v4340 = vunpack.c.l.b16 %v454
        %v4341 = vunpack.c.l.b16 %v455
        %v4342 = vunpack.c.l.b16 %v456
        %v4343 = vunpack.c.l.b16 %v457
        %v4344 = vpack.c.b16 %v4337, %v4336
        %v4345 = vpack.c.b16 %v4339, %v4338
        %v4346 = vpack.c.b16 %v4341, %v4340
        %v4347 = vpack.c.b16 %v4343, %v4342
        %v4349 = vsel %vm4242, %v4344, 0
        %v4352 = vsel %vm4242, %v4345, 0
        %v4355 = vsel %vm4242, %v4346, 0
        %v4358 = vsel %vm4242, %v4347, 0
        %4360 = vmatprep.subr.bf16.mxu0 0
        %4361 = vmatpush1.bf16.msra.mxu0 0
        %4362 = vmatprep.subr.bf16.mxu0 0
        %4363 = vmatpush1.bf16.msra.mxu0 0
        %4364 = vmatprep.subr.bf16.mxu0 0
        %4365 = vmatpush1.bf16.msra.mxu0 0
        %4366 = vmatprep.subr.bf16.mxu0 0
        %4367 = vmatpush1.bf16.msra.mxu0 0
        %4368 = vmatprep.subr.bf16.mxu0 %v4185
        %4369 = vmatpush1.bf16.msra.mxu0 %v4184
        %4370 = vmatprep.subr.bf16.mxu0 %v4183
        %4371 = vmatpush1.bf16.msra.mxu0 %v4182
        %4372 = vmatprep.subr.bf16.mxu0 %v4181
        %4373 = vmatpush1.bf16.msra.mxu0 %v4180
        %4374 = vmatprep.subr.bf16.mxu0 %v4179
        %4375 = vmatpush1.bf16.msra.mxu0 %v4178
        %4376 = vmatprep.subr.bf16.mxu0 0
        %4377 = vmatpush2.bf16.msra.mxu0 0
        %4378 = vmatprep.subr.bf16.mxu0 0
        %4379 = vmatpush2.bf16.msra.mxu0 0
        %4380 = vmatprep.subr.bf16.mxu0 0
        %4381 = vmatpush2.bf16.msra.mxu0 0
        %4382 = vmatprep.subr.bf16.mxu0 0
        %4383 = vmatpush2.bf16.msra.mxu0 0
        %4384 = vmatprep.subr.bf16.mxu0 0
        %4385 = vmatpush2.bf16.msra.mxu0 0
        %4386 = vmatprep.subr.bf16.mxu0 0
        %4387 = vmatpush2.bf16.msra.mxu0 0
        %4388 = vmatprep.subr.bf16.mxu0 0
        %4389 = vmatpush2.bf16.msra.mxu0 0
        %4390 = vmatprep.subr.bf16.mxu0 0
        %4391 = vmatpush2.bf16.msra.mxu0 0
        %4392 = vmatprep.mubr.bf16.mxu0 0
        %4393 = vmatmul.mubr.bf16.gmra.mxu0 %v4349
        %v4394 = vpop.f32.mrf.mxu0
        %v4395 = vadd.f32 %v4290, %v4394
        %v4396 = vpop.f32.mrf.mxu0
        %v4397 = vadd.f32 %v4292, %v4396
        %v4398 = vpop.f32.mrf.mxu0
        %v4399 = vadd.f32 %v4294, %v4398
        %v4400 = vpop.f32.mrf.mxu0
        %v4401 = vadd.f32 %v4296, %v4400
        %4402 = vmatprep.mubr.bf16.mxu0 0
        %4403 = vmatmul.mubr.bf16.gmra.mxu0 %v4352
        %v4404 = vpop.f32.mrf.mxu0
        %v4405 = vadd.f32 %v4300, %v4404
        %v4406 = vpop.f32.mrf.mxu0
        %v4407 = vadd.f32 %v4302, %v4406
        %v4408 = vpop.f32.mrf.mxu0
        %v4409 = vadd.f32 %v4304, %v4408
        %v4410 = vpop.f32.mrf.mxu0
        %v4411 = vadd.f32 %v4306, %v4410
        %4412 = vmatprep.mubr.bf16.mxu0 0
        %4413 = vmatmul.mubr.bf16.gmra.mxu0 %v4355
        %v4414 = vpop.f32.mrf.mxu0
        %v4415 = vadd.f32 %v4310, %v4414
        %v4416 = vpop.f32.mrf.mxu0
        %v4417 = vadd.f32 %v4312, %v4416
        %v4418 = vpop.f32.mrf.mxu0
        %v4419 = vadd.f32 %v4314, %v4418
        %v4420 = vpop.f32.mrf.mxu0
        %v4421 = vadd.f32 %v4316, %v4420
        %4422 = vmatprep.mubr.bf16.mxu0 0
        %4423 = vmatmul.mubr.bf16.gmra.mxu0 %v4358
        %v4424 = vpop.f32.mrf.mxu0
        %v4425 = vadd.f32 %v4320, %v4424
        %v4426 = vpop.f32.mrf.mxu0
        %v4427 = vadd.f32 %v4322, %v4426
        %v4428 = vpop.f32.mrf.mxu0
        %v4429 = vadd.f32 %v4324, %v4428
        %v4430 = vpop.f32.mrf.mxu0
        %v4431 = vadd.f32 %v4326, %v4430
        %4432 = vdwg.mxu0
        %v4441 = vunpack.c.l.b16 %v466
        %v4442 = vunpack.c.l.b16 %v467
        %v4443 = vunpack.c.l.b16 %v468
        %v4444 = vunpack.c.l.b16 %v469
        %v4445 = vunpack.c.l.b16 %v470
        %v4446 = vunpack.c.l.b16 %v471
        %v4447 = vunpack.c.l.b16 %v472
        %v4448 = vunpack.c.l.b16 %v473
        %v4449 = vpack.c.b16 %v4442, %v4441
        %v4450 = vpack.c.b16 %v4444, %v4443
        %v4451 = vpack.c.b16 %v4446, %v4445
        %v4452 = vpack.c.b16 %v4448, %v4447
        %4453 = vrot.lane.b32.xlu0 %v4178, 124
        %v4454 = vpop.permute.xlu0 %4453
        %4455 = vrot.lane.b32.xlu0 %v4179, 124
        %v4456 = vpop.permute.xlu0 %4455
        %4457 = vrot.lane.b32.xlu0 %v4180, 124
        %v4458 = vpop.permute.xlu0 %4457
        %4459 = vrot.lane.b32.xlu0 %v4181, 124
        %v4460 = vpop.permute.xlu0 %4459
        %4461 = vrot.lane.b32.xlu0 %v4182, 124
        %v4462 = vpop.permute.xlu0 %4461
        %4463 = vrot.lane.b32.xlu0 %v4183, 124
        %v4464 = vpop.permute.xlu0 %4463
        %4465 = vrot.lane.b32.xlu0 %v4184, 124
        %v4466 = vpop.permute.xlu0 %4465
        %4467 = vrot.lane.b32.xlu0 %v4185, 124
        %v4468 = vpop.permute.xlu0 %4467
        %vm4469 = vcmask 1014784
        %v4470 = vsel %vm4469, %v4454, %v4456
        %v4471 = vsel %vm4469, %v4458, %v4460
        %v4472 = vsel %vm4469, %v4462, %v4464
        %v4473 = vsel %vm4469, %v4466, %v4468
        %v4483 = vsel %vm4242, %v4449, 0
        %v4486 = vsel %vm4242, %v4450, 0
        %v4489 = vsel %vm4242, %v4451, 0
        %v4492 = vsel %vm4242, %v4452, 0
        %4494 = vmatprep.subr.bf16.mxu0 0
        %4495 = vmatpush1.bf16.msra.mxu0 0
        %4496 = vmatprep.subr.bf16.mxu0 0
        %4497 = vmatpush1.bf16.msra.mxu0 0
        %4498 = vmatprep.subr.bf16.mxu0 0
        %4499 = vmatpush1.bf16.msra.mxu0 0
        %4500 = vmatprep.subr.bf16.mxu0 0
        %4501 = vmatpush1.bf16.msra.mxu0 0
        %4502 = vmatprep.subr.bf16.mxu0 %v4468
        %4503 = vmatpush1.bf16.msra.mxu0 %v4473
        %4504 = vmatprep.subr.bf16.mxu0 %v4464
        %4505 = vmatpush1.bf16.msra.mxu0 %v4472
        %4506 = vmatprep.subr.bf16.mxu0 %v4460
        %4507 = vmatpush1.bf16.msra.mxu0 %v4471
        %4508 = vmatprep.subr.bf16.mxu0 %v4456
        %4509 = vmatpush1.bf16.msra.mxu0 %v4470
        %4510 = vmatprep.subr.bf16.mxu0 0
        %4511 = vmatpush2.bf16.msra.mxu0 0
        %4512 = vmatprep.subr.bf16.mxu0 0
        %4513 = vmatpush2.bf16.msra.mxu0 0
        %4514 = vmatprep.subr.bf16.mxu0 0
        %4515 = vmatpush2.bf16.msra.mxu0 0
        %4516 = vmatprep.subr.bf16.mxu0 0
        %4517 = vmatpush2.bf16.msra.mxu0 0
        %4518 = vmatprep.subr.bf16.mxu0 0
        %4519 = vmatpush2.bf16.msra.mxu0 0
        %4520 = vmatprep.subr.bf16.mxu0 0
        %4521 = vmatpush2.bf16.msra.mxu0 0
        %4522 = vmatprep.subr.bf16.mxu0 0
        %4523 = vmatpush2.bf16.msra.mxu0 0
        %4524 = vmatprep.subr.bf16.mxu0 0
        %4525 = vmatpush2.bf16.msra.mxu0 0
        %4526 = vmatprep.mubr.bf16.mxu0 0
        %4527 = vmatmul.mubr.bf16.gmra.mxu0 %v4483
        %v4528 = vpop.f32.mrf.mxu0
        %v4529 = vadd.f32 0.0, %v4528
        %v4530 = vpop.f32.mrf.mxu0
        %v4531 = vadd.f32 0.0, %v4530
        %v4532 = vpop.f32.mrf.mxu0
        %v4533 = vadd.f32 0.0, %v4532
        %v4534 = vpop.f32.mrf.mxu0
        %v4535 = vadd.f32 0.0, %v4534
        %4536 = vmatprep.mubr.bf16.mxu0 0
        %4537 = vmatmul.mubr.bf16.gmra.mxu0 %v4486
        %v4538 = vpop.f32.mrf.mxu0
        %v4539 = vadd.f32 0.0, %v4538
        %v4540 = vpop.f32.mrf.mxu0
        %v4541 = vadd.f32 0.0, %v4540
        %v4542 = vpop.f32.mrf.mxu0
        %v4543 = vadd.f32 0.0, %v4542
        %v4544 = vpop.f32.mrf.mxu0
        %v4545 = vadd.f32 0.0, %v4544
        %4546 = vmatprep.mubr.bf16.mxu0 0
        %4547 = vmatmul.mubr.bf16.gmra.mxu0 %v4489
        %v4548 = vpop.f32.mrf.mxu0
        %v4549 = vadd.f32 0.0, %v4548
        %v4550 = vpop.f32.mrf.mxu0
        %v4551 = vadd.f32 0.0, %v4550
        %v4552 = vpop.f32.mrf.mxu0
        %v4553 = vadd.f32 0.0, %v4552
        %v4554 = vpop.f32.mrf.mxu0
        %v4555 = vadd.f32 0.0, %v4554
        %4556 = vmatprep.mubr.bf16.mxu0 0
        %4557 = vmatmul.mubr.bf16.gmra.mxu0 %v4492
        %v4558 = vpop.f32.mrf.mxu0
        %v4559 = vadd.f32 0.0, %v4558
        %v4560 = vpop.f32.mrf.mxu0
        %v4561 = vadd.f32 0.0, %v4560
        %v4562 = vpop.f32.mrf.mxu0
        %v4563 = vadd.f32 0.0, %v4562
        %v4564 = vpop.f32.mrf.mxu0
        %v4565 = vadd.f32 0.0, %v4564
        %4566 = vdwg.mxu0
        %v4567 = vadd.f32 %v4395, %v4529
        %v4568 = vadd.f32 %v4397, %v4531
        %v4569 = vadd.f32 %v4399, %v4533
        %v4570 = vadd.f32 %v4401, %v4535
        %v4571 = vadd.f32 %v4405, %v4539
        %v4572 = vadd.f32 %v4407, %v4541
        %v4573 = vadd.f32 %v4409, %v4543
        %v4574 = vadd.f32 %v4411, %v4545
        %v4575 = vadd.f32 %v4415, %v4549
        %v4576 = vadd.f32 %v4417, %v4551
        %v4577 = vadd.f32 %v4419, %v4553
        %v4578 = vadd.f32 %v4421, %v4555
        %v4579 = vadd.f32 %v4425, %v4559
        %v4580 = vadd.f32 %v4427, %v4561
        %v4581 = vadd.f32 %v4429, %v4563
        %v4582 = vadd.f32 %v4431, %v4565
        %4584 = vset.pattern.permute.xlu0 0
        %4585 = vperm.xlu0 %4584, %v474
        %v4586 = vpop.permute.xlu0 %4585
        %4589 = vset.pattern.permute.xlu0 0
        %4590 = vperm.xlu0 %4589, %v475
        %v4591 = vpop.permute.xlu0 %4590
        %4594 = vset.pattern.permute.xlu0 0
        %4595 = vperm.xlu0 %4594, %v476
        %v4596 = vpop.permute.xlu0 %4595
        %4599 = vset.pattern.permute.xlu0 0
        %4600 = vperm.xlu0 %4599, %v477
        %v4601 = vpop.permute.xlu0 %4600
        %4604 = vset.pattern.permute.xlu0 0
        %4605 = vperm.xlu0 %4604, %v478
        %v4606 = vpop.permute.xlu0 %4605
        %4609 = vset.pattern.permute.xlu0 0
        %4610 = vperm.xlu0 %4609, %v479
        %v4611 = vpop.permute.xlu0 %4610
        %4614 = vset.pattern.permute.xlu0 0
        %4615 = vperm.xlu0 %4614, %v480
        %v4616 = vpop.permute.xlu0 %4615
        %4619 = vset.pattern.permute.xlu0 0
        %4620 = vperm.xlu0 %4619, %v481
        %v4621 = vpop.permute.xlu0 %4620
        %v4623 = vadd.f32 %v4567, %v4586
        %v4624 = vadd.f32 %v4568, %v4586
        %v4625 = vadd.f32 %v4569, %v4591
        %v4626 = vadd.f32 %v4570, %v4591
        %v4627 = vadd.f32 %v4571, %v4596
        %v4628 = vadd.f32 %v4572, %v4596
        %v4629 = vadd.f32 %v4573, %v4601
        %v4630 = vadd.f32 %v4574, %v4601
        %v4631 = vadd.f32 %v4575, %v4606
        %v4632 = vadd.f32 %v4576, %v4606
        %v4633 = vadd.f32 %v4577, %v4611
        %v4634 = vadd.f32 %v4578, %v4611
        %v4635 = vadd.f32 %v4579, %v4616
        %v4636 = vadd.f32 %v4580, %v4616
        %v4637 = vadd.f32 %v4581, %v4621
        %v4638 = vadd.f32 %v4582, %v4621
        %v4639 = vsub.f32 0.0, %v4623
        %v4640 = vsub.f32 0.0, %v4624
        %v4641 = vsub.f32 0.0, %v4625
        %v4642 = vsub.f32 0.0, %v4626
        %v4643 = vsub.f32 0.0, %v4627
        %v4644 = vsub.f32 0.0, %v4628
        %v4645 = vsub.f32 0.0, %v4629
        %v4646 = vsub.f32 0.0, %v4630
        %v4647 = vsub.f32 0.0, %v4631
        %v4648 = vsub.f32 0.0, %v4632
        %v4649 = vsub.f32 0.0, %v4633
        %v4650 = vsub.f32 0.0, %v4634
        %v4651 = vsub.f32 0.0, %v4635
        %v4652 = vsub.f32 0.0, %v4636
        %v4653 = vsub.f32 0.0, %v4637
        %v4654 = vsub.f32 0.0, %v4638
        %v4655 = vmul.f32 %v4639, 1.442695
        %v4656 = vpow.pop %v4655
        %v4657 = vmul.f32 %v4640, 1.442695
        %v4658 = vpow.pop %v4657
        %v4659 = vmul.f32 %v4641, 1.442695
        %v4660 = vpow.pop %v4659
        %v4661 = vmul.f32 %v4642, 1.442695
        %v4662 = vpow.pop %v4661
        %v4663 = vmul.f32 %v4643, 1.442695
        %v4664 = vpow.pop %v4663
        %v4665 = vmul.f32 %v4644, 1.442695
        %v4666 = vpow.pop %v4665
        %v4667 = vmul.f32 %v4645, 1.442695
        %v4668 = vpow.pop %v4667
        %v4669 = vmul.f32 %v4646, 1.442695
        %v4670 = vpow.pop %v4669
        %v4671 = vmul.f32 %v4647, 1.442695
        %v4672 = vpow.pop %v4671
        %v4673 = vmul.f32 %v4648, 1.442695
        %v4674 = vpow.pop %v4673
        %v4675 = vmul.f32 %v4649, 1.442695
        %v4676 = vpow.pop %v4675
        %v4677 = vmul.f32 %v4650, 1.442695
        %v4678 = vpow.pop %v4677
        %v4679 = vmul.f32 %v4651, 1.442695
        %v4680 = vpow.pop %v4679
        %v4681 = vmul.f32 %v4652, 1.442695
        %v4682 = vpow.pop %v4681
        %v4683 = vmul.f32 %v4653, 1.442695
        %v4684 = vpow.pop %v4683
        %v4685 = vmul.f32 %v4654, 1.442695
        %v4686 = vpow.pop %v4685
        %v4687 = vadd.f32 %v4656, 1.0
        %v4688 = vadd.f32 %v4658, 1.0
        %v4689 = vadd.f32 %v4660, 1.0
        %v4690 = vadd.f32 %v4662, 1.0
        %v4691 = vadd.f32 %v4664, 1.0
        %v4692 = vadd.f32 %v4666, 1.0
        %v4693 = vadd.f32 %v4668, 1.0
        %v4694 = vadd.f32 %v4670, 1.0
        %v4695 = vadd.f32 %v4672, 1.0
        %v4696 = vadd.f32 %v4674, 1.0
        %v4697 = vadd.f32 %v4676, 1.0
        %v4698 = vadd.f32 %v4678, 1.0
        %v4699 = vadd.f32 %v4680, 1.0
        %v4700 = vadd.f32 %v4682, 1.0
        %v4701 = vadd.f32 %v4684, 1.0
        %v4702 = vadd.f32 %v4686, 1.0
        %v4703 = vrcp.pop %v4687
        %v4704 = vrcp.pop %v4688
        %v4705 = vrcp.pop %v4689
        %v4706 = vrcp.pop %v4690
        %v4707 = vrcp.pop %v4691
        %v4708 = vrcp.pop %v4692
        %v4709 = vrcp.pop %v4693
        %v4710 = vrcp.pop %v4694
        %v4711 = vrcp.pop %v4695
        %v4712 = vrcp.pop %v4696
        %v4713 = vrcp.pop %v4697
        %v4714 = vrcp.pop %v4698
        %v4715 = vrcp.pop %v4699
        %v4716 = vrcp.pop %v4700
        %v4717 = vrcp.pop %v4701
        %v4718 = vrcp.pop %v4702
        %v4719 = vmul.f32 %v4623, %v4703
        %v4720 = vmul.f32 %v4624, %v4704
        %v4721 = vmul.f32 %v4625, %v4705
        %v4722 = vmul.f32 %v4626, %v4706
        %v4723 = vmul.f32 %v4627, %v4707
        %v4724 = vmul.f32 %v4628, %v4708
        %v4725 = vmul.f32 %v4629, %v4709
        %v4726 = vmul.f32 %v4630, %v4710
        %v4727 = vmul.f32 %v4631, %v4711
        %v4728 = vmul.f32 %v4632, %v4712
        %v4729 = vmul.f32 %v4633, %v4713
        %v4730 = vmul.f32 %v4634, %v4714
        %v4731 = vmul.f32 %v4635, %v4715
        %v4732 = vmul.f32 %v4636, %v4716
        %v4733 = vmul.f32 %v4637, %v4717
        %v4734 = vmul.f32 %v4638, %v4718
        %v4735 = vpack.c.bf16 %v4721, %v4719
        %v4736 = vpack.c.bf16 %v4722, %v4720
        %v4737 = vpack.c.bf16 %v4725, %v4723
        %v4738 = vpack.c.bf16 %v4726, %v4724
        %v4739 = vpack.c.bf16 %v4729, %v4727
        %v4740 = vpack.c.bf16 %v4730, %v4728
        %v4741 = vpack.c.bf16 %v4733, %v4731
        %v4742 = vpack.c.bf16 %v4734, %v4732
        %v4751 = vunpack.c.l.b16 %v490
        %v4752 = vunpack.c.l.b16 %v491
        %v4753 = vunpack.c.l.b16 %v492
        %v4754 = vunpack.c.l.b16 %v493
        %v4755 = vunpack.c.l.b16 %v494
        %v4756 = vunpack.c.l.b16 %v495
        %v4757 = vunpack.c.l.b16 %v496
        %v4758 = vunpack.c.l.b16 %v497
        %v4759 = vpack.c.b16 %v4752, %v4751
        %v4760 = vpack.c.b16 %v4754, %v4753
        %v4761 = vpack.c.b16 %v4756, %v4755
        %v4762 = vpack.c.b16 %v4758, %v4757
        %4771 = vrot.lane.b32.xlu0 %v4735, 124
        %v4772 = vpop.permute.xlu0 %4771
        %4773 = vrot.lane.b32.xlu0 %v4736, 124
        %v4774 = vpop.permute.xlu0 %4773
        %4775 = vrot.lane.b32.xlu0 %v4737, 124
        %v4776 = vpop.permute.xlu0 %4775
        %4777 = vrot.lane.b32.xlu0 %v4738, 124
        %v4778 = vpop.permute.xlu0 %4777
        %4779 = vrot.lane.b32.xlu0 %v4739, 124
        %v4780 = vpop.permute.xlu0 %4779
        %4781 = vrot.lane.b32.xlu0 %v4740, 124
        %v4782 = vpop.permute.xlu0 %4781
        %4783 = vrot.lane.b32.xlu0 %v4741, 124
        %v4784 = vpop.permute.xlu0 %4783
        %4785 = vrot.lane.b32.xlu0 %v4742, 124
        %v4786 = vpop.permute.xlu0 %4785
        %v4787 = vsel %vm4469, %v4772, %v4774
        %v4788 = vsel %vm4469, %v4776, %v4778
        %v4789 = vsel %vm4469, %v4780, %v4782
        %v4790 = vsel %vm4469, %v4784, %v4786
        %v4800 = vsel %vm4242, %v4759, 0
        %v4803 = vsel %vm4242, %v4760, 0
        %v4806 = vsel %vm4242, %v4761, 0
        %v4809 = vsel %vm4242, %v4762, 0
        %4811 = vmatprep.subr.bf16.mxu0 0
        %4812 = vmatpush1.bf16.msra.mxu0 0
        %4813 = vmatprep.subr.bf16.mxu0 0
        %4814 = vmatpush1.bf16.msra.mxu0 0
        %4815 = vmatprep.subr.bf16.mxu0 0
        %4816 = vmatpush1.bf16.msra.mxu0 0
        %4817 = vmatprep.subr.bf16.mxu0 0
        %4818 = vmatpush1.bf16.msra.mxu0 0
        %4819 = vmatprep.subr.bf16.mxu0 %v4786
        %4820 = vmatpush1.bf16.msra.mxu0 %v4790
        %4821 = vmatprep.subr.bf16.mxu0 %v4782
        %4822 = vmatpush1.bf16.msra.mxu0 %v4789
        %4823 = vmatprep.subr.bf16.mxu0 %v4778
        %4824 = vmatpush1.bf16.msra.mxu0 %v4788
        %4825 = vmatprep.subr.bf16.mxu0 %v4774
        %4826 = vmatpush1.bf16.msra.mxu0 %v4787
        %4827 = vmatprep.subr.bf16.mxu0 0
        %4828 = vmatpush2.bf16.msra.mxu0 0
        %4829 = vmatprep.subr.bf16.mxu0 0
        %4830 = vmatpush2.bf16.msra.mxu0 0
        %4831 = vmatprep.subr.bf16.mxu0 0
        %4832 = vmatpush2.bf16.msra.mxu0 0
        %4833 = vmatprep.subr.bf16.mxu0 0
        %4834 = vmatpush2.bf16.msra.mxu0 0
        %4835 = vmatprep.subr.bf16.mxu0 0
        %4836 = vmatpush2.bf16.msra.mxu0 0
        %4837 = vmatprep.subr.bf16.mxu0 0
        %4838 = vmatpush2.bf16.msra.mxu0 0
        %4839 = vmatprep.subr.bf16.mxu0 0
        %4840 = vmatpush2.bf16.msra.mxu0 0
        %4841 = vmatprep.subr.bf16.mxu0 0
        %4842 = vmatpush2.bf16.msra.mxu0 0
        %4843 = vmatprep.mubr.bf16.mxu0 0
        %4844 = vmatmul.mubr.bf16.gmra.mxu0 %v4800
        %v4845 = vpop.f32.mrf.mxu0
        %v4846 = vadd.f32 0.0, %v4845
        %v4847 = vpop.f32.mrf.mxu0
        %v4848 = vadd.f32 0.0, %v4847
        %v4849 = vpop.f32.mrf.mxu0
        %v4850 = vadd.f32 0.0, %v4849
        %v4851 = vpop.f32.mrf.mxu0
        %v4852 = vadd.f32 0.0, %v4851
        %4853 = vmatprep.mubr.bf16.mxu0 0
        %4854 = vmatmul.mubr.bf16.gmra.mxu0 %v4803
        %v4855 = vpop.f32.mrf.mxu0
        %v4856 = vadd.f32 0.0, %v4855
        %v4857 = vpop.f32.mrf.mxu0
        %v4858 = vadd.f32 0.0, %v4857
        %v4859 = vpop.f32.mrf.mxu0
        %v4860 = vadd.f32 0.0, %v4859
        %v4861 = vpop.f32.mrf.mxu0
        %v4862 = vadd.f32 0.0, %v4861
        %4863 = vmatprep.mubr.bf16.mxu0 0
        %4864 = vmatmul.mubr.bf16.gmra.mxu0 %v4806
        %v4865 = vpop.f32.mrf.mxu0
        %v4866 = vadd.f32 0.0, %v4865
        %v4867 = vpop.f32.mrf.mxu0
        %v4868 = vadd.f32 0.0, %v4867
        %v4869 = vpop.f32.mrf.mxu0
        %v4870 = vadd.f32 0.0, %v4869
        %v4871 = vpop.f32.mrf.mxu0
        %v4872 = vadd.f32 0.0, %v4871
        %4873 = vmatprep.mubr.bf16.mxu0 0
        %4874 = vmatmul.mubr.bf16.gmra.mxu0 %v4809
        %v4875 = vpop.f32.mrf.mxu0
        %v4876 = vadd.f32 0.0, %v4875
        %v4877 = vpop.f32.mrf.mxu0
        %v4878 = vadd.f32 0.0, %v4877
        %v4879 = vpop.f32.mrf.mxu0
        %v4880 = vadd.f32 0.0, %v4879
        %v4881 = vpop.f32.mrf.mxu0
        %v4882 = vadd.f32 0.0, %v4881
        %4883 = vdwg.mxu0
        %v4892 = vunpack.c.l.b16 %v482
        %v4893 = vunpack.c.l.b16 %v483
        %v4894 = vunpack.c.l.b16 %v484
        %v4895 = vunpack.c.l.b16 %v485
        %v4896 = vunpack.c.l.b16 %v486
        %v4897 = vunpack.c.l.b16 %v487
        %v4898 = vunpack.c.l.b16 %v488
        %v4899 = vunpack.c.l.b16 %v489
        %v4900 = vpack.c.b16 %v4893, %v4892
        %v4901 = vpack.c.b16 %v4895, %v4894
        %v4902 = vpack.c.b16 %v4897, %v4896
        %v4903 = vpack.c.b16 %v4899, %v4898
        %v4905 = vsel %vm4242, %v4900, 0
        %v4908 = vsel %vm4242, %v4901, 0
        %v4911 = vsel %vm4242, %v4902, 0
        %v4914 = vsel %vm4242, %v4903, 0
        %4916 = vmatprep.subr.bf16.mxu0 0
        %4917 = vmatpush1.bf16.msra.mxu0 0
        %4918 = vmatprep.subr.bf16.mxu0 0
        %4919 = vmatpush1.bf16.msra.mxu0 0
        %4920 = vmatprep.subr.bf16.mxu0 0
        %4921 = vmatpush1.bf16.msra.mxu0 0
        %4922 = vmatprep.subr.bf16.mxu0 0
        %4923 = vmatpush1.bf16.msra.mxu0 0
        %4924 = vmatprep.subr.bf16.mxu0 %v4742
        %4925 = vmatpush1.bf16.msra.mxu0 %v4741
        %4926 = vmatprep.subr.bf16.mxu0 %v4740
        %4927 = vmatpush1.bf16.msra.mxu0 %v4739
        %4928 = vmatprep.subr.bf16.mxu0 %v4738
        %4929 = vmatpush1.bf16.msra.mxu0 %v4737
        %4930 = vmatprep.subr.bf16.mxu0 %v4736
        %4931 = vmatpush1.bf16.msra.mxu0 %v4735
        %4932 = vmatprep.subr.bf16.mxu0 0
        %4933 = vmatpush2.bf16.msra.mxu0 0
        %4934 = vmatprep.subr.bf16.mxu0 0
        %4935 = vmatpush2.bf16.msra.mxu0 0
        %4936 = vmatprep.subr.bf16.mxu0 0
        %4937 = vmatpush2.bf16.msra.mxu0 0
        %4938 = vmatprep.subr.bf16.mxu0 0
        %4939 = vmatpush2.bf16.msra.mxu0 0
        %4940 = vmatprep.subr.bf16.mxu0 0
        %4941 = vmatpush2.bf16.msra.mxu0 0
        %4942 = vmatprep.subr.bf16.mxu0 0
        %4943 = vmatpush2.bf16.msra.mxu0 0
        %4944 = vmatprep.subr.bf16.mxu0 0
        %4945 = vmatpush2.bf16.msra.mxu0 0
        %4946 = vmatprep.subr.bf16.mxu0 0
        %4947 = vmatpush2.bf16.msra.mxu0 0
        %4948 = vmatprep.mubr.bf16.mxu0 0
        %4949 = vmatmul.mubr.bf16.gmra.mxu0 %v4905
        %v4950 = vpop.f32.mrf.mxu0
        %v4951 = vadd.f32 %v4846, %v4950
        %v4952 = vpop.f32.mrf.mxu0
        %v4953 = vadd.f32 %v4848, %v4952
        %v4954 = vpop.f32.mrf.mxu0
        %v4955 = vadd.f32 %v4850, %v4954
        %v4956 = vpop.f32.mrf.mxu0
        %v4957 = vadd.f32 %v4852, %v4956
        %4958 = vmatprep.mubr.bf16.mxu0 0
        %4959 = vmatmul.mubr.bf16.gmra.mxu0 %v4908
        %v4960 = vpop.f32.mrf.mxu0
        %v4961 = vadd.f32 %v4856, %v4960
        %v4962 = vpop.f32.mrf.mxu0
        %v4963 = vadd.f32 %v4858, %v4962
        %v4964 = vpop.f32.mrf.mxu0
        %v4965 = vadd.f32 %v4860, %v4964
        %v4966 = vpop.f32.mrf.mxu0
        %v4967 = vadd.f32 %v4862, %v4966
        %4968 = vmatprep.mubr.bf16.mxu0 0
        %4969 = vmatmul.mubr.bf16.gmra.mxu0 %v4911
        %v4970 = vpop.f32.mrf.mxu0
        %v4971 = vadd.f32 %v4866, %v4970
        %v4972 = vpop.f32.mrf.mxu0
        %v4973 = vadd.f32 %v4868, %v4972
        %v4974 = vpop.f32.mrf.mxu0
        %v4975 = vadd.f32 %v4870, %v4974
        %v4976 = vpop.f32.mrf.mxu0
        %v4977 = vadd.f32 %v4872, %v4976
        %4978 = vmatprep.mubr.bf16.mxu0 0
        %4979 = vmatmul.mubr.bf16.gmra.mxu0 %v4914
        %v4980 = vpop.f32.mrf.mxu0
        %v4981 = vadd.f32 %v4876, %v4980
        %v4982 = vpop.f32.mrf.mxu0
        %v4983 = vadd.f32 %v4878, %v4982
        %v4984 = vpop.f32.mrf.mxu0
        %v4985 = vadd.f32 %v4880, %v4984
        %v4986 = vpop.f32.mrf.mxu0
        %v4987 = vadd.f32 %v4882, %v4986
        %4988 = vdwg.mxu0
        %v4997 = vunpack.c.l.b16 %v498
        %v4998 = vunpack.c.l.b16 %v499
        %v4999 = vunpack.c.l.b16 %v500
        %v5000 = vunpack.c.l.b16 %v501
        %v5001 = vunpack.c.l.b16 %v502
        %v5002 = vunpack.c.l.b16 %v503
        %v5003 = vunpack.c.l.b16 %v504
        %v5004 = vunpack.c.l.b16 %v505
        %v5005 = vpack.c.b16 %v4998, %v4997
        %v5006 = vpack.c.b16 %v5000, %v4999
        %v5007 = vpack.c.b16 %v5002, %v5001
        %v5008 = vpack.c.b16 %v5004, %v5003
        %5009 = vrot.lane.b32.xlu0 %v4735, 120
        %v5010 = vpop.permute.xlu0 %5009
        %5011 = vrot.lane.b32.xlu0 %v4736, 120
        %v5012 = vpop.permute.xlu0 %5011
        %5013 = vrot.lane.b32.xlu0 %v4737, 120
        %v5014 = vpop.permute.xlu0 %5013
        %5015 = vrot.lane.b32.xlu0 %v4738, 120
        %v5016 = vpop.permute.xlu0 %5015
        %5017 = vrot.lane.b32.xlu0 %v4739, 120
        %v5018 = vpop.permute.xlu0 %5017
        %5019 = vrot.lane.b32.xlu0 %v4740, 120
        %v5020 = vpop.permute.xlu0 %5019
        %5021 = vrot.lane.b32.xlu0 %v4741, 120
        %v5022 = vpop.permute.xlu0 %5021
        %5023 = vrot.lane.b32.xlu0 %v4742, 120
        %v5024 = vpop.permute.xlu0 %5023
        %vm5025 = vcmask 982016
        %v5026 = vsel %vm5025, %v5010, %v5012
        %v5027 = vsel %vm5025, %v5014, %v5016
        %v5028 = vsel %vm5025, %v5018, %v5020
        %v5029 = vsel %vm5025, %v5022, %v5024
        %v5039 = vsel %vm4242, %v5005, 0
        %v5042 = vsel %vm4242, %v5006, 0
        %v5045 = vsel %vm4242, %v5007, 0
        %v5048 = vsel %vm4242, %v5008, 0
        %5050 = vmatprep.subr.bf16.mxu0 0
        %5051 = vmatpush1.bf16.msra.mxu0 0
        %5052 = vmatprep.subr.bf16.mxu0 0
        %5053 = vmatpush1.bf16.msra.mxu0 0
        %5054 = vmatprep.subr.bf16.mxu0 0
        %5055 = vmatpush1.bf16.msra.mxu0 0
        %5056 = vmatprep.subr.bf16.mxu0 0
        %5057 = vmatpush1.bf16.msra.mxu0 0
        %5058 = vmatprep.subr.bf16.mxu0 %v5024
        %5059 = vmatpush1.bf16.msra.mxu0 %v5029
        %5060 = vmatprep.subr.bf16.mxu0 %v5020
        %5061 = vmatpush1.bf16.msra.mxu0 %v5028
        %5062 = vmatprep.subr.bf16.mxu0 %v5016
        %5063 = vmatpush1.bf16.msra.mxu0 %v5027
        %5064 = vmatprep.subr.bf16.mxu0 %v5012
        %5065 = vmatpush1.bf16.msra.mxu0 %v5026
        %5066 = vmatprep.subr.bf16.mxu0 0
        %5067 = vmatpush2.bf16.msra.mxu0 0
        %5068 = vmatprep.subr.bf16.mxu0 0
        %5069 = vmatpush2.bf16.msra.mxu0 0
        %5070 = vmatprep.subr.bf16.mxu0 0
        %5071 = vmatpush2.bf16.msra.mxu0 0
        %5072 = vmatprep.subr.bf16.mxu0 0
        %5073 = vmatpush2.bf16.msra.mxu0 0
        %5074 = vmatprep.subr.bf16.mxu0 0
        %5075 = vmatpush2.bf16.msra.mxu0 0
        %5076 = vmatprep.subr.bf16.mxu0 0
        %5077 = vmatpush2.bf16.msra.mxu0 0
        %5078 = vmatprep.subr.bf16.mxu0 0
        %5079 = vmatpush2.bf16.msra.mxu0 0
        %5080 = vmatprep.subr.bf16.mxu0 0
        %5081 = vmatpush2.bf16.msra.mxu0 0
        %5082 = vmatprep.mubr.bf16.mxu0 0
        %5083 = vmatmul.mubr.bf16.gmra.mxu0 %v5039
        %v5084 = vpop.f32.mrf.mxu0
        %v5085 = vadd.f32 0.0, %v5084
        %v5086 = vpop.f32.mrf.mxu0
        %v5087 = vadd.f32 0.0, %v5086
        %v5088 = vpop.f32.mrf.mxu0
        %v5089 = vadd.f32 0.0, %v5088
        %v5090 = vpop.f32.mrf.mxu0
        %v5091 = vadd.f32 0.0, %v5090
        %5092 = vmatprep.mubr.bf16.mxu0 0
        %5093 = vmatmul.mubr.bf16.gmra.mxu0 %v5042
        %v5094 = vpop.f32.mrf.mxu0
        %v5095 = vadd.f32 0.0, %v5094
        %v5096 = vpop.f32.mrf.mxu0
        %v5097 = vadd.f32 0.0, %v5096
        %v5098 = vpop.f32.mrf.mxu0
        %v5099 = vadd.f32 0.0, %v5098
        %v5100 = vpop.f32.mrf.mxu0
        %v5101 = vadd.f32 0.0, %v5100
        %5102 = vmatprep.mubr.bf16.mxu0 0
        %5103 = vmatmul.mubr.bf16.gmra.mxu0 %v5045
        %v5104 = vpop.f32.mrf.mxu0
        %v5105 = vadd.f32 0.0, %v5104
        %v5106 = vpop.f32.mrf.mxu0
        %v5107 = vadd.f32 0.0, %v5106
        %v5108 = vpop.f32.mrf.mxu0
        %v5109 = vadd.f32 0.0, %v5108
        %v5110 = vpop.f32.mrf.mxu0
        %v5111 = vadd.f32 0.0, %v5110
        %5112 = vmatprep.mubr.bf16.mxu0 0
        %5113 = vmatmul.mubr.bf16.gmra.mxu0 %v5048
        %v5114 = vpop.f32.mrf.mxu0
        %v5115 = vadd.f32 0.0, %v5114
        %v5116 = vpop.f32.mrf.mxu0
        %v5117 = vadd.f32 0.0, %v5116
        %v5118 = vpop.f32.mrf.mxu0
        %v5119 = vadd.f32 0.0, %v5118
        %v5120 = vpop.f32.mrf.mxu0
        %v5121 = vadd.f32 0.0, %v5120
        %5122 = vdwg.mxu0
        %v5123 = vadd.f32 %v4951, %v5085
        %v5124 = vadd.f32 %v4953, %v5087
        %v5125 = vadd.f32 %v4955, %v5089
        %v5126 = vadd.f32 %v4957, %v5091
        %v5127 = vadd.f32 %v4961, %v5095
        %v5128 = vadd.f32 %v4963, %v5097
        %v5129 = vadd.f32 %v4965, %v5099
        %v5130 = vadd.f32 %v4967, %v5101
        %v5131 = vadd.f32 %v4971, %v5105
        %v5132 = vadd.f32 %v4973, %v5107
        %v5133 = vadd.f32 %v4975, %v5109
        %v5134 = vadd.f32 %v4977, %v5111
        %v5135 = vadd.f32 %v4981, %v5115
        %v5136 = vadd.f32 %v4983, %v5117
        %v5137 = vadd.f32 %v4985, %v5119
        %v5138 = vadd.f32 %v4987, %v5121
        %5140 = vset.pattern.permute.xlu0 0
        %5141 = vperm.xlu0 %5140, %v506
        %v5142 = vpop.permute.xlu0 %5141
        %5145 = vset.pattern.permute.xlu0 0
        %5146 = vperm.xlu0 %5145, %v507
        %v5147 = vpop.permute.xlu0 %5146
        %5150 = vset.pattern.permute.xlu0 0
        %5151 = vperm.xlu0 %5150, %v508
        %v5152 = vpop.permute.xlu0 %5151
        %5155 = vset.pattern.permute.xlu0 0
        %5156 = vperm.xlu0 %5155, %v509
        %v5157 = vpop.permute.xlu0 %5156
        %5160 = vset.pattern.permute.xlu0 0
        %5161 = vperm.xlu0 %5160, %v510
        %v5162 = vpop.permute.xlu0 %5161
        %5165 = vset.pattern.permute.xlu0 0
        %5166 = vperm.xlu0 %5165, %v511
        %v5167 = vpop.permute.xlu0 %5166
        %5170 = vset.pattern.permute.xlu0 0
        %5171 = vperm.xlu0 %5170, %v512
        %v5172 = vpop.permute.xlu0 %5171
        %5175 = vset.pattern.permute.xlu0 0
        %5176 = vperm.xlu0 %5175, %v513
        %v5177 = vpop.permute.xlu0 %5176
        %v5179 = vadd.f32 %v5123, %v5142
        %v5180 = vadd.f32 %v5124, %v5142
        %v5181 = vadd.f32 %v5125, %v5147
        %v5182 = vadd.f32 %v5126, %v5147
        %v5183 = vadd.f32 %v5127, %v5152
        %v5184 = vadd.f32 %v5128, %v5152
        %v5185 = vadd.f32 %v5129, %v5157
        %v5186 = vadd.f32 %v5130, %v5157
        %v5187 = vadd.f32 %v5131, %v5162
        %v5188 = vadd.f32 %v5132, %v5162
        %v5189 = vadd.f32 %v5133, %v5167
        %v5190 = vadd.f32 %v5134, %v5167
        %v5191 = vadd.f32 %v5135, %v5172
        %v5192 = vadd.f32 %v5136, %v5172
        %v5193 = vadd.f32 %v5137, %v5177
        %v5194 = vadd.f32 %v5138, %v5177
        %v5195 = vsub.f32 0.0, %v5179
        %v5196 = vsub.f32 0.0, %v5180
        %v5197 = vsub.f32 0.0, %v5181
        %v5198 = vsub.f32 0.0, %v5182
        %v5199 = vsub.f32 0.0, %v5183
        %v5200 = vsub.f32 0.0, %v5184
        %v5201 = vsub.f32 0.0, %v5185
        %v5202 = vsub.f32 0.0, %v5186
        %v5203 = vsub.f32 0.0, %v5187
        %v5204 = vsub.f32 0.0, %v5188
        %v5205 = vsub.f32 0.0, %v5189
        %v5206 = vsub.f32 0.0, %v5190
        %v5207 = vsub.f32 0.0, %v5191
        %v5208 = vsub.f32 0.0, %v5192
        %v5209 = vsub.f32 0.0, %v5193
        %v5210 = vsub.f32 0.0, %v5194
        %v5211 = vmul.f32 %v5195, 1.442695
        %v5212 = vpow.pop %v5211
        %v5213 = vmul.f32 %v5196, 1.442695
        %v5214 = vpow.pop %v5213
        %v5215 = vmul.f32 %v5197, 1.442695
        %v5216 = vpow.pop %v5215
        %v5217 = vmul.f32 %v5198, 1.442695
        %v5218 = vpow.pop %v5217
        %v5219 = vmul.f32 %v5199, 1.442695
        %v5220 = vpow.pop %v5219
        %v5221 = vmul.f32 %v5200, 1.442695
        %v5222 = vpow.pop %v5221
        %v5223 = vmul.f32 %v5201, 1.442695
        %v5224 = vpow.pop %v5223
        %v5225 = vmul.f32 %v5202, 1.442695
        %v5226 = vpow.pop %v5225
        %v5227 = vmul.f32 %v5203, 1.442695
        %v5228 = vpow.pop %v5227
        %v5229 = vmul.f32 %v5204, 1.442695
        %v5230 = vpow.pop %v5229
        %v5231 = vmul.f32 %v5205, 1.442695
        %v5232 = vpow.pop %v5231
        %v5233 = vmul.f32 %v5206, 1.442695
        %v5234 = vpow.pop %v5233
        %v5235 = vmul.f32 %v5207, 1.442695
        %v5236 = vpow.pop %v5235
        %v5237 = vmul.f32 %v5208, 1.442695
        %v5238 = vpow.pop %v5237
        %v5239 = vmul.f32 %v5209, 1.442695
        %v5240 = vpow.pop %v5239
        %v5241 = vmul.f32 %v5210, 1.442695
        %v5242 = vpow.pop %v5241
        %v5243 = vadd.f32 %v5212, 1.0
        %v5244 = vadd.f32 %v5214, 1.0
        %v5245 = vadd.f32 %v5216, 1.0
        %v5246 = vadd.f32 %v5218, 1.0
        %v5247 = vadd.f32 %v5220, 1.0
        %v5248 = vadd.f32 %v5222, 1.0
        %v5249 = vadd.f32 %v5224, 1.0
        %v5250 = vadd.f32 %v5226, 1.0
        %v5251 = vadd.f32 %v5228, 1.0
        %v5252 = vadd.f32 %v5230, 1.0
        %v5253 = vadd.f32 %v5232, 1.0
        %v5254 = vadd.f32 %v5234, 1.0
        %v5255 = vadd.f32 %v5236, 1.0
        %v5256 = vadd.f32 %v5238, 1.0
        %v5257 = vadd.f32 %v5240, 1.0
        %v5258 = vadd.f32 %v5242, 1.0
        %v5259 = vrcp.pop %v5243
        %v5260 = vrcp.pop %v5244
        %v5261 = vrcp.pop %v5245
        %v5262 = vrcp.pop %v5246
        %v5263 = vrcp.pop %v5247
        %v5264 = vrcp.pop %v5248
        %v5265 = vrcp.pop %v5249
        %v5266 = vrcp.pop %v5250
        %v5267 = vrcp.pop %v5251
        %v5268 = vrcp.pop %v5252
        %v5269 = vrcp.pop %v5253
        %v5270 = vrcp.pop %v5254
        %v5271 = vrcp.pop %v5255
        %v5272 = vrcp.pop %v5256
        %v5273 = vrcp.pop %v5257
        %v5274 = vrcp.pop %v5258
        %v5275 = vmul.f32 %v5179, %v5259
        %v5276 = vmul.f32 %v5180, %v5260
        %v5277 = vmul.f32 %v5181, %v5261
        %v5278 = vmul.f32 %v5182, %v5262
        %v5279 = vmul.f32 %v5183, %v5263
        %v5280 = vmul.f32 %v5184, %v5264
        %v5281 = vmul.f32 %v5185, %v5265
        %v5282 = vmul.f32 %v5186, %v5266
        %v5283 = vmul.f32 %v5187, %v5267
        %v5284 = vmul.f32 %v5188, %v5268
        %v5285 = vmul.f32 %v5189, %v5269
        %v5286 = vmul.f32 %v5190, %v5270
        %v5287 = vmul.f32 %v5191, %v5271
        %v5288 = vmul.f32 %v5192, %v5272
        %v5289 = vmul.f32 %v5193, %v5273
        %v5290 = vmul.f32 %v5194, %v5274
        %v5291 = vpack.c.bf16 %v5277, %v5275
        %v5292 = vpack.c.bf16 %v5278, %v5276
        %v5293 = vpack.c.bf16 %v5281, %v5279
        %v5294 = vpack.c.bf16 %v5282, %v5280
        %v5295 = vpack.c.bf16 %v5285, %v5283
        %v5296 = vpack.c.bf16 %v5286, %v5284
        %v5297 = vpack.c.bf16 %v5289, %v5287
        %v5298 = vpack.c.bf16 %v5290, %v5288
        %v5307 = vunpack.c.l.b16 %v522
        %v5308 = vunpack.c.l.b16 %v523
        %v5309 = vunpack.c.l.b16 %v524
        %v5310 = vunpack.c.l.b16 %v525
        %v5311 = vunpack.c.l.b16 %v526
        %v5312 = vunpack.c.l.b16 %v527
        %v5313 = vunpack.c.l.b16 %v528
        %v5314 = vunpack.c.l.b16 %v529
        %v5315 = vpack.c.b16 %v5308, %v5307
        %v5316 = vpack.c.b16 %v5310, %v5309
        %v5317 = vpack.c.b16 %v5312, %v5311
        %v5318 = vpack.c.b16 %v5314, %v5313
        %5327 = vrot.lane.b32.xlu0 %v5291, 120
        %v5328 = vpop.permute.xlu0 %5327
        %5329 = vrot.lane.b32.xlu0 %v5292, 120
        %v5330 = vpop.permute.xlu0 %5329
        %5331 = vrot.lane.b32.xlu0 %v5293, 120
        %v5332 = vpop.permute.xlu0 %5331
        %5333 = vrot.lane.b32.xlu0 %v5294, 120
        %v5334 = vpop.permute.xlu0 %5333
        %5335 = vrot.lane.b32.xlu0 %v5295, 120
        %v5336 = vpop.permute.xlu0 %5335
        %5337 = vrot.lane.b32.xlu0 %v5296, 120
        %v5338 = vpop.permute.xlu0 %5337
        %5339 = vrot.lane.b32.xlu0 %v5297, 120
        %v5340 = vpop.permute.xlu0 %5339
        %5341 = vrot.lane.b32.xlu0 %v5298, 120
        %v5342 = vpop.permute.xlu0 %5341
        %v5343 = vsel %vm5025, %v5328, %v5330
        %v5344 = vsel %vm5025, %v5332, %v5334
        %v5345 = vsel %vm5025, %v5336, %v5338
        %v5346 = vsel %vm5025, %v5340, %v5342
        %v5352 = vsel %vm4242, %v5315, 0
        %v5355 = vsel %vm4242, %v5316, 0
        %v5358 = vsel %vm4242, %v5317, 0
        %v5361 = vsel %vm4242, %v5318, 0
        %5363 = vmatprep.subr.bf16.mxu0 0
        %5364 = vmatpush1.bf16.msra.mxu0 0
        %5365 = vmatprep.subr.bf16.mxu0 0
        %5366 = vmatpush1.bf16.msra.mxu0 0
        %5367 = vmatprep.subr.bf16.mxu0 0
        %5368 = vmatpush1.bf16.msra.mxu0 0
        %5369 = vmatprep.subr.bf16.mxu0 0
        %5370 = vmatpush1.bf16.msra.mxu0 0
        %5371 = vmatprep.subr.bf16.mxu0 0
        %5372 = vmatpush1.bf16.msra.mxu0 %v5346
        %5373 = vmatprep.subr.bf16.mxu0 0
        %5374 = vmatpush1.bf16.msra.mxu0 %v5345
        %5375 = vmatprep.subr.bf16.mxu0 0
        %5376 = vmatpush1.bf16.msra.mxu0 %v5344
        %5377 = vmatprep.subr.bf16.mxu0 0
        %5378 = vmatpush1.bf16.msra.mxu0 %v5343
        %5379 = vmatprep.subr.bf16.mxu0 0
        %5380 = vmatpush2.bf16.msra.mxu0 0
        %5381 = vmatprep.subr.bf16.mxu0 0
        %5382 = vmatpush2.bf16.msra.mxu0 0
        %5383 = vmatprep.subr.bf16.mxu0 0
        %5384 = vmatpush2.bf16.msra.mxu0 0
        %5385 = vmatprep.subr.bf16.mxu0 0
        %5386 = vmatpush2.bf16.msra.mxu0 0
        %5387 = vmatprep.subr.bf16.mxu0 0
        %5388 = vmatpush2.bf16.msra.mxu0 0
        %5389 = vmatprep.subr.bf16.mxu0 0
        %5390 = vmatpush2.bf16.msra.mxu0 0
        %5391 = vmatprep.subr.bf16.mxu0 0
        %5392 = vmatpush2.bf16.msra.mxu0 0
        %5393 = vmatprep.subr.bf16.mxu0 0
        %5394 = vmatpush2.bf16.msra.mxu0 0
        %5395 = vmatprep.mubr.bf16.mxu0 0
        %5396 = vmatmul.mubr.bf16.gmra.mxu0 %v5352
        %v5397 = vpop.f32.mrf.mxu0
        %v5398 = vadd.f32 0.0, %v5397
        %v5399 = vpop.f32.mrf.mxu0
        %v5400 = vpop.f32.mrf.mxu0
        %v5401 = vadd.f32 0.0, %v5400
        %v5402 = vpop.f32.mrf.mxu0
        %5403 = vmatprep.mubr.bf16.mxu0 0
        %5404 = vmatmul.mubr.bf16.gmra.mxu0 %v5355
        %v5405 = vpop.f32.mrf.mxu0
        %v5406 = vadd.f32 0.0, %v5405
        %v5407 = vpop.f32.mrf.mxu0
        %v5408 = vpop.f32.mrf.mxu0
        %v5409 = vadd.f32 0.0, %v5408
        %v5410 = vpop.f32.mrf.mxu0
        %5411 = vmatprep.mubr.bf16.mxu0 0
        %5412 = vmatmul.mubr.bf16.gmra.mxu0 %v5358
        %v5413 = vpop.f32.mrf.mxu0
        %v5414 = vadd.f32 0.0, %v5413
        %v5415 = vpop.f32.mrf.mxu0
        %v5416 = vpop.f32.mrf.mxu0
        %v5417 = vadd.f32 0.0, %v5416
        %v5418 = vpop.f32.mrf.mxu0
        %5419 = vmatprep.mubr.bf16.mxu0 0
        %5420 = vmatmul.mubr.bf16.gmra.mxu0 %v5361
        %v5421 = vpop.f32.mrf.mxu0
        %v5422 = vadd.f32 0.0, %v5421
        %v5423 = vpop.f32.mrf.mxu0
        %v5424 = vpop.f32.mrf.mxu0
        %v5425 = vadd.f32 0.0, %v5424
        %v5426 = vpop.f32.mrf.mxu0
        %5427 = vdwg.mxu0
        %v5436 = vunpack.c.l.b16 %v514
        %v5437 = vunpack.c.l.b16 %v515
        %v5438 = vunpack.c.l.b16 %v516
        %v5439 = vunpack.c.l.b16 %v517
        %v5440 = vunpack.c.l.b16 %v518
        %v5441 = vunpack.c.l.b16 %v519
        %v5442 = vunpack.c.l.b16 %v520
        %v5443 = vunpack.c.l.b16 %v521
        %v5444 = vpack.c.b16 %v5437, %v5436
        %v5445 = vpack.c.b16 %v5439, %v5438
        %v5446 = vpack.c.b16 %v5441, %v5440
        %v5447 = vpack.c.b16 %v5443, %v5442
        %v5449 = vsel %vm4242, %v5444, 0
        %v5452 = vsel %vm4242, %v5445, 0
        %v5455 = vsel %vm4242, %v5446, 0
        %v5458 = vsel %vm4242, %v5447, 0
        %5460 = vmatprep.subr.bf16.mxu0 0
        %5461 = vmatpush1.bf16.msra.mxu0 0
        %5462 = vmatprep.subr.bf16.mxu0 0
        %5463 = vmatpush1.bf16.msra.mxu0 0
        %5464 = vmatprep.subr.bf16.mxu0 0
        %5465 = vmatpush1.bf16.msra.mxu0 0
        %5466 = vmatprep.subr.bf16.mxu0 0
        %5467 = vmatpush1.bf16.msra.mxu0 0
        %5468 = vmatprep.subr.bf16.mxu0 0
        %5469 = vmatpush1.bf16.msra.mxu0 %v5297
        %5470 = vmatprep.subr.bf16.mxu0 0
        %5471 = vmatpush1.bf16.msra.mxu0 %v5295
        %5472 = vmatprep.subr.bf16.mxu0 0
        %5473 = vmatpush1.bf16.msra.mxu0 %v5293
        %5474 = vmatprep.subr.bf16.mxu0 0
        %5475 = vmatpush1.bf16.msra.mxu0 %v5291
        %5476 = vmatprep.subr.bf16.mxu0 0
        %5477 = vmatpush2.bf16.msra.mxu0 0
        %5478 = vmatprep.subr.bf16.mxu0 0
        %5479 = vmatpush2.bf16.msra.mxu0 0
        %5480 = vmatprep.subr.bf16.mxu0 0
        %5481 = vmatpush2.bf16.msra.mxu0 0
        %5482 = vmatprep.subr.bf16.mxu0 0
        %5483 = vmatpush2.bf16.msra.mxu0 0
        %5484 = vmatprep.subr.bf16.mxu0 0
        %5485 = vmatpush2.bf16.msra.mxu0 0
        %5486 = vmatprep.subr.bf16.mxu0 0
        %5487 = vmatpush2.bf16.msra.mxu0 0
        %5488 = vmatprep.subr.bf16.mxu0 0
        %5489 = vmatpush2.bf16.msra.mxu0 0
        %5490 = vmatprep.subr.bf16.mxu0 0
        %5491 = vmatpush2.bf16.msra.mxu0 0
        %5492 = vmatprep.mubr.bf16.mxu0 0
        %5493 = vmatmul.mubr.bf16.gmra.mxu0 %v5449
        %v5494 = vpop.f32.mrf.mxu0
        %v5495 = vadd.f32 %v5398, %v5494
        %v5496 = vpop.f32.mrf.mxu0
        %v5497 = vpop.f32.mrf.mxu0
        %v5498 = vadd.f32 %v5401, %v5497
        %v5499 = vpop.f32.mrf.mxu0
        %5500 = vmatprep.mubr.bf16.mxu0 0
        %5501 = vmatmul.mubr.bf16.gmra.mxu0 %v5452
        %v5502 = vpop.f32.mrf.mxu0
        %v5503 = vadd.f32 %v5406, %v5502
        %v5504 = vpop.f32.mrf.mxu0
        %v5505 = vpop.f32.mrf.mxu0
        %v5506 = vadd.f32 %v5409, %v5505
        %v5507 = vpop.f32.mrf.mxu0
        %5508 = vmatprep.mubr.bf16.mxu0 0
        %5509 = vmatmul.mubr.bf16.gmra.mxu0 %v5455
        %v5510 = vpop.f32.mrf.mxu0
        %v5511 = vadd.f32 %v5414, %v5510
        %v5512 = vpop.f32.mrf.mxu0
        %v5513 = vpop.f32.mrf.mxu0
        %v5514 = vadd.f32 %v5417, %v5513
        %v5515 = vpop.f32.mrf.mxu0
        %5516 = vmatprep.mubr.bf16.mxu0 0
        %5517 = vmatmul.mubr.bf16.gmra.mxu0 %v5458
        %v5518 = vpop.f32.mrf.mxu0
        %v5519 = vadd.f32 %v5422, %v5518
        %v5520 = vpop.f32.mrf.mxu0
        %v5521 = vpop.f32.mrf.mxu0
        %v5522 = vadd.f32 %v5425, %v5521
        %v5523 = vpop.f32.mrf.mxu0
        %5524 = vdwg.mxu0
        %v5533 = vunpack.c.l.b16 %v530
        %v5534 = vunpack.c.l.b16 %v531
        %v5535 = vunpack.c.l.b16 %v532
        %v5536 = vunpack.c.l.b16 %v533
        %v5537 = vunpack.c.l.b16 %v534
        %v5538 = vunpack.c.l.b16 %v535
        %v5539 = vunpack.c.l.b16 %v536
        %v5540 = vunpack.c.l.b16 %v537
        %v5541 = vpack.c.b16 %v5534, %v5533
        %v5542 = vpack.c.b16 %v5536, %v5535
        %v5543 = vpack.c.b16 %v5538, %v5537
        %v5544 = vpack.c.b16 %v5540, %v5539
        %5545 = vrot.lane.b32.xlu0 %v5291, 112
        %v5546 = vpop.permute.xlu0 %5545
        %5547 = vrot.lane.b32.xlu0 %v5292, 112
        %v5548 = vpop.permute.xlu0 %5547
        %5549 = vrot.lane.b32.xlu0 %v5293, 112
        %v5550 = vpop.permute.xlu0 %5549
        %5551 = vrot.lane.b32.xlu0 %v5294, 112
        %v5552 = vpop.permute.xlu0 %5551
        %5553 = vrot.lane.b32.xlu0 %v5295, 112
        %v5554 = vpop.permute.xlu0 %5553
        %5555 = vrot.lane.b32.xlu0 %v5296, 112
        %v5556 = vpop.permute.xlu0 %5555
        %5557 = vrot.lane.b32.xlu0 %v5297, 112
        %v5558 = vpop.permute.xlu0 %5557
        %5559 = vrot.lane.b32.xlu0 %v5298, 112
        %v5560 = vpop.permute.xlu0 %5559
        %vm5561 = vcmask 916480
        %v5562 = vsel %vm5561, %v5546, %v5548
        %v5563 = vsel %vm5561, %v5550, %v5552
        %v5564 = vsel %vm5561, %v5554, %v5556
        %v5565 = vsel %vm5561, %v5558, %v5560
        %v5571 = vsel %vm4242, %v5541, 0
        %v5574 = vsel %vm4242, %v5542, 0
        %v5577 = vsel %vm4242, %v5543, 0
        %v5580 = vsel %vm4242, %v5544, 0
        %5582 = vmatprep.subr.bf16.mxu0 0
        %5583 = vmatpush1.bf16.msra.mxu0 0
        %5584 = vmatprep.subr.bf16.mxu0 0
        %5585 = vmatpush1.bf16.msra.mxu0 0
        %5586 = vmatprep.subr.bf16.mxu0 0
        %5587 = vmatpush1.bf16.msra.mxu0 0
        %5588 = vmatprep.subr.bf16.mxu0 0
        %5589 = vmatpush1.bf16.msra.mxu0 0
        %5590 = vmatprep.subr.bf16.mxu0 0
        %5591 = vmatpush1.bf16.msra.mxu0 %v5565
        %5592 = vmatprep.subr.bf16.mxu0 0
        %5593 = vmatpush1.bf16.msra.mxu0 %v5564
        %5594 = vmatprep.subr.bf16.mxu0 0
        %5595 = vmatpush1.bf16.msra.mxu0 %v5563
        %5596 = vmatprep.subr.bf16.mxu0 0
        %5597 = vmatpush1.bf16.msra.mxu0 %v5562
        %5598 = vmatprep.subr.bf16.mxu0 0
        %5599 = vmatpush2.bf16.msra.mxu0 0
        %5600 = vmatprep.subr.bf16.mxu0 0
        %5601 = vmatpush2.bf16.msra.mxu0 0
        %5602 = vmatprep.subr.bf16.mxu0 0
        %5603 = vmatpush2.bf16.msra.mxu0 0
        %5604 = vmatprep.subr.bf16.mxu0 0
        %5605 = vmatpush2.bf16.msra.mxu0 0
        %5606 = vmatprep.subr.bf16.mxu0 0
        %5607 = vmatpush2.bf16.msra.mxu0 0
        %5608 = vmatprep.subr.bf16.mxu0 0
        %5609 = vmatpush2.bf16.msra.mxu0 0
        %5610 = vmatprep.subr.bf16.mxu0 0
        %5611 = vmatpush2.bf16.msra.mxu0 0
        %5612 = vmatprep.subr.bf16.mxu0 0
        %5613 = vmatpush2.bf16.msra.mxu0 0
        %5614 = vmatprep.mubr.bf16.mxu0 0
        %5615 = vmatmul.mubr.bf16.gmra.mxu0 %v5571
        %v5616 = vpop.f32.mrf.mxu0
        %v5617 = vadd.f32 0.0, %v5616
        %v5618 = vpop.f32.mrf.mxu0
        %v5619 = vpop.f32.mrf.mxu0
        %v5620 = vadd.f32 0.0, %v5619
        %v5621 = vpop.f32.mrf.mxu0
        %5622 = vmatprep.mubr.bf16.mxu0 0
        %5623 = vmatmul.mubr.bf16.gmra.mxu0 %v5574
        %v5624 = vpop.f32.mrf.mxu0
        %v5625 = vadd.f32 0.0, %v5624
        %v5626 = vpop.f32.mrf.mxu0
        %v5627 = vpop.f32.mrf.mxu0
        %v5628 = vadd.f32 0.0, %v5627
        %v5629 = vpop.f32.mrf.mxu0
        %5630 = vmatprep.mubr.bf16.mxu0 0
        %5631 = vmatmul.mubr.bf16.gmra.mxu0 %v5577
        %v5632 = vpop.f32.mrf.mxu0
        %v5633 = vadd.f32 0.0, %v5632
        %v5634 = vpop.f32.mrf.mxu0
        %v5635 = vpop.f32.mrf.mxu0
        %v5636 = vadd.f32 0.0, %v5635
        %v5637 = vpop.f32.mrf.mxu0
        %5638 = vmatprep.mubr.bf16.mxu0 0
        %5639 = vmatmul.mubr.bf16.gmra.mxu0 %v5580
        %v5640 = vpop.f32.mrf.mxu0
        %v5641 = vadd.f32 0.0, %v5640
        %v5642 = vpop.f32.mrf.mxu0
        %v5643 = vpop.f32.mrf.mxu0
        %v5644 = vadd.f32 0.0, %v5643
        %v5645 = vpop.f32.mrf.mxu0
        %5646 = vdwg.mxu0
        %v5647 = vadd.f32 %v5495, %v5617
        %v5648 = vadd.f32 %v5498, %v5620
        %v5649 = vadd.f32 %v5503, %v5625
        %v5650 = vadd.f32 %v5506, %v5628
        %v5651 = vadd.f32 %v5511, %v5633
        %v5652 = vadd.f32 %v5514, %v5636
        %v5653 = vadd.f32 %v5519, %v5641
        %v5654 = vadd.f32 %v5522, %v5644
        %5656 = vset.pattern.permute.xlu0 0
        %5657 = vperm.xlu0 %5656, %v538
        %v5658 = vpop.permute.xlu0 %5657
        %5661 = vset.pattern.permute.xlu0 0
        %5662 = vperm.xlu0 %5661, %v539
        %v5663 = vpop.permute.xlu0 %5662
        %5666 = vset.pattern.permute.xlu0 0
        %5667 = vperm.xlu0 %5666, %v540
        %v5668 = vpop.permute.xlu0 %5667
        %5671 = vset.pattern.permute.xlu0 0
        %5672 = vperm.xlu0 %5671, %v541
        %v5673 = vpop.permute.xlu0 %5672
        %5676 = vset.pattern.permute.xlu0 0
        %5677 = vperm.xlu0 %5676, %v542
        %v5678 = vpop.permute.xlu0 %5677
        %5681 = vset.pattern.permute.xlu0 0
        %5682 = vperm.xlu0 %5681, %v543
        %v5683 = vpop.permute.xlu0 %5682
        %5686 = vset.pattern.permute.xlu0 0
        %5687 = vperm.xlu0 %5686, %v544
        %v5688 = vpop.permute.xlu0 %5687
        %5691 = vset.pattern.permute.xlu0 0
        %5692 = vperm.xlu0 %5691, %v545
        %v5693 = vpop.permute.xlu0 %5692
        %v5695 = vadd.f32 %v5647, %v5658
        %v5696 = vadd.f32 %v5648, %v5663
        %v5697 = vadd.f32 %v5649, %v5668
        %v5698 = vadd.f32 %v5650, %v5673
        %v5699 = vadd.f32 %v5651, %v5678
        %v5700 = vadd.f32 %v5652, %v5683
        %v5701 = vadd.f32 %v5653, %v5688
        %v5702 = vadd.f32 %v5654, %v5693
        %v5703 = vsub.f32 0.0, %v5695
        %v5704 = vsub.f32 0.0, %v5696
        %v5705 = vsub.f32 0.0, %v5697
        %v5706 = vsub.f32 0.0, %v5698
        %v5707 = vsub.f32 0.0, %v5699
        %v5708 = vsub.f32 0.0, %v5700
        %v5709 = vsub.f32 0.0, %v5701
        %v5710 = vsub.f32 0.0, %v5702
        %v5711 = vmul.f32 %v5703, 1.442695
        %v5712 = vpow.pop %v5711
        %v5713 = vmul.f32 %v5704, 1.442695
        %v5714 = vpow.pop %v5713
        %v5715 = vmul.f32 %v5705, 1.442695
        %v5716 = vpow.pop %v5715
        %v5717 = vmul.f32 %v5706, 1.442695
        %v5718 = vpow.pop %v5717
        %v5719 = vmul.f32 %v5707, 1.442695
        %v5720 = vpow.pop %v5719
        %v5721 = vmul.f32 %v5708, 1.442695
        %v5722 = vpow.pop %v5721
        %v5723 = vmul.f32 %v5709, 1.442695
        %v5724 = vpow.pop %v5723
        %v5725 = vmul.f32 %v5710, 1.442695
        %v5726 = vpow.pop %v5725
        %v5727 = vadd.f32 %v5712, 1.0
        %v5728 = vadd.f32 %v5714, 1.0
        %v5729 = vadd.f32 %v5716, 1.0
        %v5730 = vadd.f32 %v5718, 1.0
        %v5731 = vadd.f32 %v5720, 1.0
        %v5732 = vadd.f32 %v5722, 1.0
        %v5733 = vadd.f32 %v5724, 1.0
        %v5734 = vadd.f32 %v5726, 1.0
        %v5735 = vrcp.pop %v5727
        %v5736 = vrcp.pop %v5728
        %v5737 = vrcp.pop %v5729
        %v5738 = vrcp.pop %v5730
        %v5739 = vrcp.pop %v5731
        %v5740 = vrcp.pop %v5732
        %v5741 = vrcp.pop %v5733
        %v5742 = vrcp.pop %v5734
        %v5743 = vmul.f32 %v5695, %v5735
        %v5744 = vmul.f32 %v5696, %v5736
        %v5745 = vmul.f32 %v5697, %v5737
        %v5746 = vmul.f32 %v5698, %v5738
        %v5747 = vmul.f32 %v5699, %v5739
        %v5748 = vmul.f32 %v5700, %v5740
        %v5749 = vmul.f32 %v5701, %v5741
        %v5750 = vmul.f32 %v5702, %v5742
        %5751 = vst [vmem:[%s403] sm:$0xff] %v5743
        %5752 = vst [vmem:[%s403 + $0x8] sm:$0xff] %v5744
        %5753 = vst [vmem:[%s403 + $0x10] sm:$0xff] %v5745
        %5754 = vst [vmem:[%s403 + $0x18] sm:$0xff] %v5746
        %5755 = vst [vmem:[%s403 + $0x20] sm:$0xff] %v5747
        %5756 = vst [vmem:[%s403 + $0x28] sm:$0xff] %v5748
        %5757 = vst [vmem:[%s403 + $0x30] sm:$0xff] %v5749
        %5758 = vst [vmem:[%s403 + $0x38] sm:$0xff] %v5750
      $region72: #{tpu_custom_call.1} parent=63 // pred_fallthru
        _
      %p5759 = scmp.lt.s32.totalorder %s26, 1
      %s5760 = scalar_select %p5759, %s26, 1
      %p5761 = scmp.lt.s32.totalorder %s27, 0
      %s5762 = scalar_select %p5761, %s27, 0
      %s5763 = smul.addr %s5760, 8
      %s5764 = sadd.s32 %s5762, %s5763
      %s5765 = smul.addr %s5764, 8
      %s5766 = scalar_lea.vmem %s11, %s5765
      // Predicated region
      $region73: #{tpu_custom_call.1} parent=63 // pred_check
        %p5767 = pneg %p290
      $region74: #{tpu_custom_call.1} parent=63 // pred_check_branch
        %5769 = sbr.rel (%p5767) target = $region76
      $region75: #{tpu_custom_call.1} parent=63 // pred_region
        _
      $region76: #{tpu_custom_call.1} parent=63 // pred_fallthru
        _
    $region64: #{tpu_custom_call.1} parent=5 // pred_fallthru
      _
    %p5770 = scmp.le.s32.totalorder 2, %s17
    // Predicated region
    $region77: #{tpu_custom_call.1} parent=5 // pred_check
      %p5771 = pneg %p5770
    $region78: #{tpu_custom_call.1} parent=5 // pred_check_branch
      %5773 = sbr.rel (%p5771) target = $region80
    $region79: #{tpu_custom_call.1} parent=5 // pred_region
      %s5774 = ssub.s32 %s17, 2
      // Predicated region
      $region81: #{tpu_custom_call.1} parent=79 // pred_check
        %p5775 = pneg %p296
      $region82: #{tpu_custom_call.1} parent=79 // pred_check_branch
        %5777 = sbr.rel (%p5775) target = $region84
      $region83: #{tpu_custom_call.1} parent=79 // pred_region
        %p5778 = scmp.lt.s32.totalorder %s28, 1
        %s5779 = scalar_select %p5778, %s28, 1
        %p5780 = scmp.lt.s32.totalorder %s29, 0
        %s5781 = scalar_select %p5780, %s29, 0
        %s5782 = smul.addr %s5779, 8
        %s5783 = sadd.s32 %s5781, %s5782
        %s5784 = smul.addr %s5783, 8
        %s5785 = scalar_lea.vmem %s11, %s5784
      $region84: #{tpu_custom_call.1} parent=79 // pred_fallthru
        _
    $region80: #{tpu_custom_call.1} parent=5 // pred_fallthru
      _
  $region6: #{tpu_custom_call.1} parent=0 // loop_footer
    %s21 = sadd.s32 1, %s17
  $region7: #{tpu_custom_call.1} parent=0 // loop_footer_branch
    %16 = sbr.rel target = $region3
  $region8: #{tpu_custom_call.1} parent=0 // loop_exit
    _

</llo_original>
